<compile_context>
chip_gen: v5e
topology: v5e:2x2
jax: 0.10.0
libtpu: 0.0.40
codegen_flags: <defaults>
</compile_context>

<pallas_src>
import functools

import jax
import jax.numpy as jnp
from jax.experimental import pallas as pl
from jax.experimental.pallas import tpu as pltpu

EPS = 1e-5  # PyTorch BatchNorm2d default.

# MXU operand dtype for the conv matmuls.  float32 keeps tight numerical parity
# with the PyTorch float32 reference (used for the check below); set to
# jnp.bfloat16 on v5e/v6e/v7x for the full bf16 MXU rate and half the VMEM
# scratch.  BN statistics / normalization always stay in float32.
MXU_DTYPE = jnp.float32

_VMEM_LIMIT_BYTES = 48 * 1024 * 1024  # explicit; fits v7x's 64 MiB physical VMEM.


# ---------------------------------------------------------------------------
# Kernels
# ---------------------------------------------------------------------------
def _conv_core(v, w_ref, b_ref, pad_ref, patch_ref, H, W):
    """3x3 'same' conv of one image.

    v        : (H*W, Ci) activation (channel-minor, f32)
    w_ref    : (9*Ci, Co) weights, rows ordered (dh, dw, ci)
    b_ref    : (1, Co) conv bias
    pad_ref  : VMEM scratch (H+2, W+2, Ci)  -- zero-padded image
    patch_ref: VMEM scratch (H*W, 9*Ci)     -- im2col patch
    returns  : (H*W, Co) float32
    """
    Ci = pad_ref.shape[-1]
    Hp, Wp = H + 2, W + 2
    dt = pad_ref.dtype

    # Fused zero-padding: only the 1-px halo ring is zeroed (the interior is
    # fully overwritten below), instead of a full memset of the scratch.
    pad_ref[0:1, :, :] = jnp.zeros((1, Wp, Ci), dt)
    pad_ref[Hp - 1:Hp, :, :] = jnp.zeros((1, Wp, Ci), dt)
    pad_ref[1:H + 1, 0:1, :] = jnp.zeros((H, 1, Ci), dt)
    pad_ref[1:H + 1, Wp - 1:Wp, :] = jnp.zeros((H, 1, Ci), dt)
    pad_ref[1:H + 1, 1:W + 1, :] = v.reshape(H, W, Ci).astype(dt)

    # im2col: build the (H*W, 9*Ci) patch once, then ONE MXU matmul with
    # K = 9*Ci (instead of 9 tiny K=Ci matmuls + 8 accumulate passes).
    # Windows are loaded straight from the padded scratch ref (static slices),
    # so the full padded value is never materialized in vregs and the halo
    # columns outside each window are never touched.
    for t in range(9):
        dh, dw = divmod(t, 3)
        patch_ref[:, t * Ci:(t + 1) * Ci] = (
            pad_ref[dh:dh + H, dw:dw + W, :].reshape(H * W, Ci))

    y = jnp.dot(patch_ref[...], w_ref[...], preferred_element_type=jnp.float32)
    return y + b_ref[...]


def _conv1_kernel(x_ref, w_ref, b_ref, y_ref, s_ref, q_ref,
                  pad_ref, patch_ref, *, H, W):
    """conv1 on one image + per-image BN partial sums (fused into the epilogue)."""
    y = _conv_core(x_ref[0].astype(jnp.float32), w_ref, b_ref,
                   pad_ref, patch_ref, H, W)
    y_ref[0] = y.astype(y_ref.dtype)
    s_ref[0] = jnp.sum(y, axis=0, keepdims=True)        # per-channel sum
    q_ref[0] = jnp.sum(y * y, axis=0, keepdims=True)    # per-channel sum of squares


def _bn_relu_conv2_kernel(y1_ref, sc_ref, sh_ref, w_ref, b_ref,
                          y_ref, s_ref, q_ref, pad_ref, patch_ref, *, H, W):
    """BN1 normalize + ReLU -> conv2 on one image + BN2 partial sums."""
    v = jnp.maximum(y1_ref[0] * sc_ref[...] + sh_ref[...], 0.0)
    y = _conv_core(v, w_ref, b_ref, pad_ref, patch_ref, H, W)
    y_ref[0] = y.astype(y_ref.dtype)
    s_ref[0] = jnp.sum(y, axis=0, keepdims=True)
    q_ref[0] = jnp.sum(y * y, axis=0, keepdims=True)


def _bn_relu_kernel(y_ref, sc_ref, sh_ref, o_ref):
    """BN2 normalize + ReLU on a lane-dense (rows, W*Cout) slab."""
    o_ref[...] = jnp.maximum(
        y_ref[...] * sc_ref[...] + sh_ref[...], 0.0).astype(o_ref.dtype)


# ---------------------------------------------------------------------------
# Wrapper
# ---------------------------------------------------------------------------
def _bn_affine(total, total_sq, gamma, beta, count):
    """Fold batch stats into a per-channel (scale, shift): y*scale+shift == BN(y)."""
    mu = total / count
    var = total_sq / count - mu * mu            # biased batch variance (f32 accumulators)
    inv = jax.lax.rsqrt(var + EPS)
    scale = gamma.reshape(1, -1).astype(jnp.float32) * inv
    shift = beta.reshape(1, -1).astype(jnp.float32) - mu * scale
    return scale, shift


def _pick_row_tile(rows, row_bytes, budget_bytes=2 * 1024 * 1024):
    """Largest row-tile dividing `rows` that fits the VMEM budget.

    Returns either `rows` itself (block == full dim, always layout-legal) or a
    multiple-of-8 divisor, so the (8, 128) BlockSpec rule is always satisfied.
    """
    max_rows = max(1, budget_bytes // max(row_bytes, 1))
    if rows <= max_rows:
        return rows
    for tr in range(min(rows - 1, max_rows), 7, -1):
        if rows % tr == 0 and tr % 8 == 0:
            return tr
    return rows


def double_conv_forward(x_nchw, params):
    """NCHW in / NCHW out, matching the PyTorch double_conv module."""
    N, Cin, H, W = x_nchw.shape
    Cout = params["w1"].shape[0]
    HW = H * W
    f32 = jnp.float32

    # --- layout prep (cheap; the spatial zero-pad is fused INTO the kernels) ---
    # NCHW -> channel-minor (N, H*W, C) so in-kernel window reshapes stay in the
    # safe "collapse/split leading dims" class.
    x_flat = jnp.transpose(x_nchw, (0, 2, 3, 1)).reshape(N, HW, Cin).astype(f32)
    # torch OIHW -> (kh*kw*Cin, Cout), rows ordered (dh, dw, ci) to match im2col.
    w1 = jnp.transpose(params["w1"], (2, 3, 1, 0)).reshape(9 * Cin, Cout).astype(MXU_DTYPE)
    w2 = jnp.transpose(params["w2"], (2, 3, 1, 0)).reshape(9 * Cout, Cout).astype(MXU_DTYPE)
    b1 = params["b1"].reshape(1, Cout).astype(f32)
    b2 = params["b2"].reshape(1, Cout).astype(f32)

    cp = pltpu.CompilerParams(dimension_semantics=("parallel",),
                              vmem_limit_bytes=_VMEM_LIMIT_BYTES)

    # ---- call 1: conv1 + per-image BN1 partial sums (grid over batch) ----
    # TODO(synk): for very large H*W, add a second grid axis over H-row tiles
    # with a 2-row halo; here the per-image block already fits VMEM comfortably.
    y1raw, s1, q1 = pl.pallas_call(
        functools.partial(_conv1_kernel, H=H, W=W),
        grid=(N,),
        in_specs=[
            pl.BlockSpec((1, HW, Cin), lambda i: (i, 0, 0)),
            pl.BlockSpec((9 * Cin, Cout), lambda i: (0, 0)),
            pl.BlockSpec((1, Cout), lambda i: (0, 0)),
        ],
        out_specs=[
            pl.BlockSpec((1, HW, Cout), lambda i: (i, 0, 0)),
            pl.BlockSpec((1, 1, Cout), lambda i: (i, 0, 0)),
            pl.BlockSpec((1, 1, Cout), lambda i: (i, 0, 0)),
        ],
        out_shape=[
            jax.ShapeDtypeStruct((N, HW, Cout), f32),
            jax.ShapeDtypeStruct((N, 1, Cout), f32),
            jax.ShapeDtypeStruct((N, 1, Cout), f32),
        ],
        scratch_shapes=[
            pltpu.VMEM((H + 2, W + 2, Cin), MXU_DTYPE),
            pltpu.VMEM((HW, 9 * Cin), MXU_DTYPE),
        ],
        compiler_params=cp,
    )(x_flat, w1, b1)

    # combine per-image partial sums (this is the BN global sync point)
    scale1, shift1 = _bn_affine(jnp.sum(s1, axis=0), jnp.sum(q1, axis=0),
                                params["g1"], params["be1"], N * HW)

    # ---- call 2: BN1+ReLU -> conv2 + per-image BN2 partial sums ----
    y2raw, s2, q2 = pl.pallas_call(
        functools.partial(_bn_relu_conv2_kernel, H=H, W=W),
        grid=(N,),
        in_specs=[
            pl.BlockSpec((1, HW, Cout), lambda i: (i, 0, 0)),
            pl.BlockSpec((1, Cout), lambda i: (0, 0)),
            pl.BlockSpec((1, Cout), lambda i: (0, 0)),
            pl.BlockSpec((9 * Cout, Cout), lambda i: (0, 0)),
            pl.BlockSpec((1, Cout), lambda i: (0, 0)),
        ],
        out_specs=[
            pl.BlockSpec((1, HW, Cout), lambda i: (i, 0, 0)),
            pl.BlockSpec((1, 1, Cout), lambda i: (i, 0, 0)),
            pl.BlockSpec((1, 1, Cout), lambda i: (i, 0, 0)),
        ],
        out_shape=[
            jax.ShapeDtypeStruct((N, HW, Cout), f32),
            jax.ShapeDtypeStruct((N, 1, Cout), f32),
            jax.ShapeDtypeStruct((N, 1, Cout), f32),
        ],
        scratch_shapes=[
            pltpu.VMEM((H + 2, W + 2, Cout), MXU_DTYPE),
            pltpu.VMEM((HW, 9 * Cout), MXU_DTYPE),
        ],
        compiler_params=cp,
    )(y1raw, scale1, shift1, w2, b2)

    scale2, shift2 = _bn_affine(jnp.sum(s2, axis=0), jnp.sum(q2, axis=0),
                                params["g2"], params["be2"], N * HW)

    # ---- call 3: BN2+ReLU on a lane-dense view, large row tiles ----
    # (N, H*W, Cout) row-major == (N*H, W*Cout) row-major -> zero-cost reshape
    # in HBM; the kernel then loads/stores full-width (W*Cout)-lane slabs
    # (unmasked vst) with fully contiguous HBM DMAs.  Rows are tiled as large
    # as ~2 MiB/block (double-buffered in+out stays well inside VMEM) so the
    # ~0.35 us per-grid-step overhead is amortized.
    rows = N * H
    lane = W * Cout
    tr = _pick_row_tile(rows, lane * 4)
    y2flat = y2raw.reshape(rows, lane)
    scale2_t = jnp.tile(scale2, (1, W))   # channel pattern repeated along fused (w, c) axis
    shift2_t = jnp.tile(shift2, (1, W))

    out2d = pl.pallas_call(
        _bn_relu_kernel,
        grid=(rows // tr,),
        in_specs=[
            pl.BlockSpec((tr, lane), lambda i: (i, 0)),
            pl.BlockSpec((1, lane), lambda i: (0, 0)),
            pl.BlockSpec((1, lane), lambda i: (0, 0)),
        ],
        out_specs=pl.BlockSpec((tr, lane), lambda i: (i, 0)),
        out_shape=jax.ShapeDtypeStruct((rows, lane), f32),
        compiler_params=cp,
    )(y2flat, scale2_t, shift2_t)

    out_nhwc = out2d.reshape(N, H, W, Cout)
    return jnp.transpose(out_nhwc, (0, 3, 1, 2))


# ---------------------------------------------------------------------------
# Pure-JAX reference (PyTorch double_conv, training-mode BN) + test
# ---------------------------------------------------------------------------
def _reference(x, p):
    def conv(x, w, b):
        y = jax.lax.conv_general_dilated(
            x, w, window_strides=(1, 1), padding=((1, 1), (1, 1)),
            dimension_numbers=("NCHW", "OIHW", "NCHW"))
        return y + b[None, :, None, None]

    def bn_relu(y, g, be):
        mu = y.mean(axis=(0, 2, 3), keepdims=True)
        var = ((y - mu) ** 2).mean(axis=(0, 2, 3), keepdims=True)
        yn = (y - mu) / jnp.sqrt(var + EPS)
        return jnp.maximum(yn * g[None, :, None, None] + be[None, :, None, None], 0.0)

    y = bn_relu(conv(x, p["w1"], p["b1"]), p["g1"], p["be1"])
    y = bn_relu(conv(y, p["w2"], p["b2"]), p["g2"], p["be2"])
    return y


if __name__ == "__main__":
    in_ch, out_ch = 4, 8
    N, H, W = 2, 16, 16

    key = jax.random.PRNGKey(0)
    ks = jax.random.split(key, 9)
    params = {
        "w1": 0.1 * jax.random.normal(ks[0], (out_ch, in_ch, 3, 3), jnp.float32),
        "b1": 0.1 * jax.random.normal(ks[1], (out_ch,), jnp.float32),
        "g1": 1.0 + 0.1 * jax.random.normal(ks[2], (out_ch,), jnp.float32),
        "be1": 0.1 * jax.random.normal(ks[3], (out_ch,), jnp.float32),
        "w2": 0.1 * jax.random.normal(ks[4], (out_ch, out_ch, 3, 3), jnp.float32),
        "b2": 0.1 * jax.random.normal(ks[5], (out_ch,), jnp.float32),
        "g2": 1.0 + 0.1 * jax.random.normal(ks[6], (out_ch,), jnp.float32),
        "be2": 0.1 * jax.random.normal(ks[7], (out_ch,), jnp.float32),
    }
    x = jax.random.normal(ks[8], (N, in_ch, H, W), jnp.float32)

    fwd = jax.jit(double_conv_forward)
    out = jax.block_until_ready(fwd(x, params))

    ref = jax.block_until_ready(_reference(x, params))
    assert out.shape == (N, out_ch, H, W)
    assert jnp.allclose(out, ref, atol=2e-4, rtol=2e-4), \
        float(jnp.max(jnp.abs(out - ref)))

    print("KERNEL_OK")
</pallas_src>

<mosaic_0001>
module attributes {stable_mosaic.version = 11 : i64} {
  func.func @_conv1_kernel(%arg0: i32, %arg1: memref<1x256x4xf32, #tpu.memory_space<vmem>>, %arg2: memref<36x8xf32, #tpu.memory_space<vmem>>, %arg3: memref<1x8xf32, #tpu.memory_space<vmem>>, %arg4: memref<1x256x8xf32, #tpu.memory_space<vmem>>, %arg5: memref<1x1x8xf32, #tpu.memory_space<vmem>>, %arg6: memref<1x1x8xf32, #tpu.memory_space<vmem>>, %arg7: memref<18x18x4xf32, #tpu.memory_space<vmem>>, %arg8: memref<256x36xf32, #tpu.memory_space<vmem>>) attributes {dimension_semantics = [#tpu.dimension_semantics<parallel>], iteration_bounds = array<i64: 2>, scalar_prefetch = 0 : i64, scratch_operands = 2 : i64, tpu.core_type = #tpu.core_type<tc>, window_params = [{transform_indices = @transform_0, window_bounds = array<i64: 1, 256, 4>}, {pipeline_mode = #tpu.pipeline_mode<synchronous>, transform_indices = @transform_1, window_bounds = array<i64: 36, 8>}, {pipeline_mode = #tpu.pipeline_mode<synchronous>, transform_indices = @transform_2, window_bounds = array<i64: 1, 8>}, {transform_indices = @transform_3, window_bounds = array<i64: 1, 256, 8>}, {transform_indices = @transform_4, window_bounds = array<i64: 1, 1, 8>}, {transform_indices = @transform_5, window_bounds = array<i64: 1, 1, 8>}]} {
    %c0 = arith.constant 0 : index
    %c0_0 = arith.constant 0 : index
    %c0_1 = arith.constant 0 : index
    %0 = vector.load %arg1[%c0, %c0_0, %c0_1] : memref<1x256x4xf32, #tpu.memory_space<vmem>>, vector<1x256x4xf32>
    %1 = vector.shape_cast %0 : vector<1x256x4xf32> to vector<256x4xf32>
    %cst = arith.constant 0.000000e+00 : f32
    %2 = vector.broadcast %cst : f32 to vector<1x18x4xf32>
    %c0_2 = arith.constant 0 : index
    %c0_3 = arith.constant 0 : index
    %c0_4 = arith.constant 0 : index
    %3 = vector.load %arg7[%c0_2, %c0_3, %c0_4] : memref<18x18x4xf32, #tpu.memory_space<vmem>>, vector<1x18x4xf32>
    tpu.vector_store %arg7[%c0_2, %c0_3, %c0_4], %2 {strides = array<i32>} : memref<18x18x4xf32, #tpu.memory_space<vmem>>, vector<1x18x4xf32>,
    %cst_5 = arith.constant 0.000000e+00 : f32
    %4 = vector.broadcast %cst_5 : f32 to vector<1x18x4xf32>
    %c17 = arith.constant 17 : index
    %c0_6 = arith.constant 0 : index
    %c0_7 = arith.constant 0 : index
    %5 = vector.load %arg7[%c17, %c0_6, %c0_7] : memref<18x18x4xf32, #tpu.memory_space<vmem>>, vector<1x18x4xf32>
    tpu.vector_store %arg7[%c17, %c0_6, %c0_7], %4 {strides = array<i32>} : memref<18x18x4xf32, #tpu.memory_space<vmem>>, vector<1x18x4xf32>,
    %cst_8 = arith.constant 0.000000e+00 : f32
    %6 = vector.broadcast %cst_8 : f32 to vector<16x1x4xf32>
    %c1 = arith.constant 1 : index
    %c0_9 = arith.constant 0 : index
    %c0_10 = arith.constant 0 : index
    %7 = vector.load %arg7[%c1, %c0_9, %c0_10] : memref<18x18x4xf32, #tpu.memory_space<vmem>>, vector<16x1x4xf32>
    tpu.vector_store %arg7[%c1, %c0_9, %c0_10], %6 {strides = array<i32>} : memref<18x18x4xf32, #tpu.memory_space<vmem>>, vector<16x1x4xf32>,
    %cst_11 = arith.constant 0.000000e+00 : f32
    %8 = vector.broadcast %cst_11 : f32 to vector<16x1x4xf32>
    %c1_12 = arith.constant 1 : index
    %c17_13 = arith.constant 17 : index
    %c0_14 = arith.constant 0 : index
    %9 = vector.load %arg7[%c1_12, %c17_13, %c0_14] : memref<18x18x4xf32, #tpu.memory_space<vmem>>, vector<16x1x4xf32>
    tpu.vector_store %arg7[%c1_12, %c17_13, %c0_14], %8 {strides = array<i32>} : memref<18x18x4xf32, #tpu.memory_space<vmem>>, vector<16x1x4xf32>,
    %10 = vector.shape_cast %1 : vector<256x4xf32> to vector<16x16x4xf32>
    %c1_15 = arith.constant 1 : index
    %c1_16 = arith.constant 1 : index
    %c0_17 = arith.constant 0 : index
    %11 = vector.load %arg7[%c1_15, %c1_16, %c0_17] : memref<18x18x4xf32, #tpu.memory_space<vmem>>, vector<16x16x4xf32>
    tpu.vector_store %arg7[%c1_15, %c1_16, %c0_17], %10 {strides = array<i32>} : memref<18x18x4xf32, #tpu.memory_space<vmem>>, vector<16x16x4xf32>,
    %c0_18 = arith.constant 0 : index
    %c0_19 = arith.constant 0 : index
    %c0_20 = arith.constant 0 : index
    %12 = vector.load %arg7[%c0_18, %c0_19, %c0_20] : memref<18x18x4xf32, #tpu.memory_space<vmem>>, vector<16x16x4xf32>
    %13 = vector.shape_cast %12 : vector<16x16x4xf32> to vector<256x4xf32>
    %c0_21 = arith.constant 0 : index
    %c0_22 = arith.constant 0 : index
    %14 = vector.load %arg8[%c0_21, %c0_22] : memref<256x36xf32, #tpu.memory_space<vmem>>, vector<256x4xf32>
    tpu.vector_store %arg8[%c0_21, %c0_22], %13 {strides = array<i32>} : memref<256x36xf32, #tpu.memory_space<vmem>>, vector<256x4xf32>,
    %c0_23 = arith.constant 0 : index
    %c1_24 = arith.constant 1 : index
    %c0_25 = arith.constant 0 : index
    %15 = vector.load %arg7[%c0_23, %c1_24, %c0_25] : memref<18x18x4xf32, #tpu.memory_space<vmem>>, vector<16x16x4xf32>
    %16 = vector.shape_cast %15 : vector<16x16x4xf32> to vector<256x4xf32>
    %c0_26 = arith.constant 0 : index
    %c4 = arith.constant 4 : index
    %17 = vector.load %arg8[%c0_26, %c4] : memref<256x36xf32, #tpu.memory_space<vmem>>, vector<256x4xf32>
    tpu.vector_store %arg8[%c0_26, %c4], %16 {strides = array<i32>} : memref<256x36xf32, #tpu.memory_space<vmem>>, vector<256x4xf32>,
    %c0_27 = arith.constant 0 : index
    %c2 = arith.constant 2 : index
    %c0_28 = arith.constant 0 : index
    %18 = vector.load %arg7[%c0_27, %c2, %c0_28] : memref<18x18x4xf32, #tpu.memory_space<vmem>>, vector<16x16x4xf32>
    %19 = vector.shape_cast %18 : vector<16x16x4xf32> to vector<256x4xf32>
    %c0_29 = arith.constant 0 : index
    %c8 = arith.constant 8 : index
    %20 = vector.load %arg8[%c0_29, %c8] : memref<256x36xf32, #tpu.memory_space<vmem>>, vector<256x4xf32>
    tpu.vector_store %arg8[%c0_29, %c8], %19 {strides = array<i32>} : memref<256x36xf32, #tpu.memory_space<vmem>>, vector<256x4xf32>,
    %c1_30 = arith.constant 1 : index
    %c0_31 = arith.constant 0 : index
    %c0_32 = arith.constant 0 : index
    %21 = vector.load %arg7[%c1_30, %c0_31, %c0_32] : memref<18x18x4xf32, #tpu.memory_space<vmem>>, vector<16x16x4xf32>
    %22 = vector.shape_cast %21 : vector<16x16x4xf32> to vector<256x4xf32>
    %c0_33 = arith.constant 0 : index
    %c12 = arith.constant 12 : index
    %23 = vector.load %arg8[%c0_33, %c12] : memref<256x36xf32, #tpu.memory_space<vmem>>, vector<256x4xf32>
    tpu.vector_store %arg8[%c0_33, %c12], %22 {strides = array<i32>} : memref<256x36xf32, #tpu.memory_space<vmem>>, vector<256x4xf32>,
    %c1_34 = arith.constant 1 : index
    %c1_35 = arith.constant 1 : index
    %c0_36 = arith.constant 0 : index
    %24 = vector.load %arg7[%c1_34, %c1_35, %c0_36] : memref<18x18x4xf32, #tpu.memory_space<vmem>>, vector<16x16x4xf32>
    %25 = vector.shape_cast %24 : vector<16x16x4xf32> to vector<256x4xf32>
    %c0_37 = arith.constant 0 : index
    %c16 = arith.constant 16 : index
    %26 = vector.load %arg8[%c0_37, %c16] : memref<256x36xf32, #tpu.memory_space<vmem>>, vector<256x4xf32>
    tpu.vector_store %arg8[%c0_37, %c16], %25 {strides = array<i32>} : memref<256x36xf32, #tpu.memory_space<vmem>>, vector<256x4xf32>,
    %c1_38 = arith.constant 1 : index
    %c2_39 = arith.constant 2 : index
    %c0_40 = arith.constant 0 : index
    %27 = vector.load %arg7[%c1_38, %c2_39, %c0_40] : memref<18x18x4xf32, #tpu.memory_space<vmem>>, vector<16x16x4xf32>
    %28 = vector.shape_cast %27 : vector<16x16x4xf32> to vector<256x4xf32>
    %c0_41 = arith.constant 0 : index
    %c20 = arith.constant 20 : index
    %29 = vector.load %arg8[%c0_41, %c20] : memref<256x36xf32, #tpu.memory_space<vmem>>, vector<256x4xf32>
    tpu.vector_store %arg8[%c0_41, %c20], %28 {strides = array<i32>} : memref<256x36xf32, #tpu.memory_space<vmem>>, vector<256x4xf32>,
    %c2_42 = arith.constant 2 : index
    %c0_43 = arith.constant 0 : index
    %c0_44 = arith.constant 0 : index
    %30 = vector.load %arg7[%c2_42, %c0_43, %c0_44] : memref<18x18x4xf32, #tpu.memory_space<vmem>>, vector<16x16x4xf32>
    %31 = vector.shape_cast %30 : vector<16x16x4xf32> to vector<256x4xf32>
    %c0_45 = arith.constant 0 : index
    %c24 = arith.constant 24 : index
    %32 = vector.load %arg8[%c0_45, %c24] : memref<256x36xf32, #tpu.memory_space<vmem>>, vector<256x4xf32>
    tpu.vector_store %arg8[%c0_45, %c24], %31 {strides = array<i32>} : memref<256x36xf32, #tpu.memory_space<vmem>>, vector<256x4xf32>,
    %c2_46 = arith.constant 2 : index
    %c1_47 = arith.constant 1 : index
    %c0_48 = arith.constant 0 : index
    %33 = vector.load %arg7[%c2_46, %c1_47, %c0_48] : memref<18x18x4xf32, #tpu.memory_space<vmem>>, vector<16x16x4xf32>
    %34 = vector.shape_cast %33 : vector<16x16x4xf32> to vector<256x4xf32>
    %c0_49 = arith.constant 0 : index
    %c28 = arith.constant 28 : index
    %35 = vector.load %arg8[%c0_49, %c28] : memref<256x36xf32, #tpu.memory_space<vmem>>, vector<256x4xf32>
    tpu.vector_store %arg8[%c0_49, %c28], %34 {strides = array<i32>} : memref<256x36xf32, #tpu.memory_space<vmem>>, vector<256x4xf32>,
    %c2_50 = arith.constant 2 : index
    %c2_51 = arith.constant 2 : index
    %c0_52 = arith.constant 0 : index
    %36 = vector.load %arg7[%c2_50, %c2_51, %c0_52] : memref<18x18x4xf32, #tpu.memory_space<vmem>>, vector<16x16x4xf32>
    %37 = vector.shape_cast %36 : vector<16x16x4xf32> to vector<256x4xf32>
    %c0_53 = arith.constant 0 : index
    %c32 = arith.constant 32 : index
    %38 = vector.load %arg8[%c0_53, %c32] : memref<256x36xf32, #tpu.memory_space<vmem>>, vector<256x4xf32>
    tpu.vector_store %arg8[%c0_53, %c32], %37 {strides = array<i32>} : memref<256x36xf32, #tpu.memory_space<vmem>>, vector<256x4xf32>,
    %c0_54 = arith.constant 0 : index
    %c0_55 = arith.constant 0 : index
    %39 = vector.load %arg8[%c0_54, %c0_55] : memref<256x36xf32, #tpu.memory_space<vmem>>, vector<256x36xf32>
    %c0_56 = arith.constant 0 : index
    %c0_57 = arith.constant 0 : index
    %40 = vector.load %arg2[%c0_56, %c0_57] : memref<36x8xf32, #tpu.memory_space<vmem>>, vector<36x8xf32>
    %cst_58 = arith.constant dense<0.000000e+00> : vector<256x8xf32>
    %41 = tpu.matmul %39, %40, %cst_58 {dimension_numbers = #tpu.dot_dimension_numbers<[1], [0], [0], [1], [0, 0, 1, 1], [], []>} : vector<256x36xf32>, vector<36x8xf32>, vector<256x8xf32> -> vector<256x8xf32>
    %c0_59 = arith.constant 0 : index
    %c0_60 = arith.constant 0 : index
    %42 = vector.load %arg3[%c0_59, %c0_60] : memref<1x8xf32, #tpu.memory_space<vmem>>, vector<1x8xf32>
    %43 = vector.broadcast %42 : vector<1x8xf32> to vector<256x8xf32>
    %44 = arith.addf %41, %43 : vector<256x8xf32>
    %c0_61 = arith.constant 0 : index
    %c0_62 = arith.constant 0 : index
    %c0_63 = arith.constant 0 : index
    %45 = vector.load %arg4[%c0_61, %c0_62, %c0_63] : memref<1x256x8xf32, #tpu.memory_space<vmem>>, vector<1x256x8xf32>
    %46 = vector.shape_cast %45 : vector<1x256x8xf32> to vector<256x8xf32>
    %47 = vector.shape_cast %44 : vector<256x8xf32> to vector<1x256x8xf32>
    tpu.vector_store %arg4[%c0_61, %c0_62, %c0_63], %47 {strides = array<i32>} : memref<1x256x8xf32, #tpu.memory_space<vmem>>, vector<1x256x8xf32>,
    %cst_64 = arith.constant dense<0.000000e+00> : vector<8xf32>
    %48 = vector.multi_reduction <add>, %44, %cst_64 [0] : vector<256x8xf32> to vector<8xf32>
    %49 = vector.shape_cast %48 : vector<8xf32> to vector<1x8xf32>
    %c0_65 = arith.constant 0 : index
    %c0_66 = arith.constant 0 : index
    %c0_67 = arith.constant 0 : index
    %50 = vector.load %arg5[%c0_65, %c0_66, %c0_67] : memref<1x1x8xf32, #tpu.memory_space<vmem>>, vector<1x1x8xf32>
    %51 = vector.shape_cast %50 : vector<1x1x8xf32> to vector<1x8xf32>
    %52 = vector.shape_cast %49 : vector<1x8xf32> to vector<1x1x8xf32>
    tpu.vector_store %arg5[%c0_65, %c0_66, %c0_67], %52 {strides = array<i32>} : memref<1x1x8xf32, #tpu.memory_space<vmem>>, vector<1x1x8xf32>,
    %53 = arith.mulf %44, %44 : vector<256x8xf32>
    %cst_68 = arith.constant dense<0.000000e+00> : vector<8xf32>
    %54 = vector.multi_reduction <add>, %53, %cst_68 [0] : vector<256x8xf32> to vector<8xf32>
    %55 = vector.shape_cast %54 : vector<8xf32> to vector<1x8xf32>
    %c0_69 = arith.constant 0 : index
    %c0_70 = arith.constant 0 : index
    %c0_71 = arith.constant 0 : index
    %56 = vector.load %arg6[%c0_69, %c0_70, %c0_71] : memref<1x1x8xf32, #tpu.memory_space<vmem>>, vector<1x1x8xf32>
    %57 = vector.shape_cast %56 : vector<1x1x8xf32> to vector<1x8xf32>
    %58 = vector.shape_cast %55 : vector<1x8xf32> to vector<1x1x8xf32>
    tpu.vector_store %arg6[%c0_69, %c0_70, %c0_71], %58 {strides = array<i32>} : memref<1x1x8xf32, #tpu.memory_space<vmem>>, vector<1x1x8xf32>,
    return
  }
  func.func @transform_0(%arg0: i32) -> (i32, i32, i32) {
    %c0_i32 = arith.constant 0 : i32
    %c0_i32_0 = arith.constant 0 : i32
    %c0_i32_1 = arith.constant 0 : i32
    return %arg0, %c0_i32, %c0_i32_0 : i32, i32, i32
  }
  func.func @transform_1(%arg0: i32) -> (i32, i32) {
    %c0_i32 = arith.constant 0 : i32
    %c0_i32_0 = arith.constant 0 : i32
    %c0_i32_1 = arith.constant 0 : i32
    return %c0_i32, %c0_i32_0 : i32, i32
  }
  func.func @transform_2(%arg0: i32) -> (i32, i32) {
    %c0_i32 = arith.constant 0 : i32
    %c0_i32_0 = arith.constant 0 : i32
    %c0_i32_1 = arith.constant 0 : i32
    return %c0_i32, %c0_i32_0 : i32, i32
  }
  func.func @transform_3(%arg0: i32) -> (i32, i32, i32) {
    %c0_i32 = arith.constant 0 : i32
    %c0_i32_0 = arith.constant 0 : i32
    %c0_i32_1 = arith.constant 0 : i32
    return %arg0, %c0_i32, %c0_i32_0 : i32, i32, i32
  }
  func.func @transform_4(%arg0: i32) -> (i32, i32, i32) {
    %c0_i32 = arith.constant 0 : i32
    %c0_i32_0 = arith.constant 0 : i32
    %c0_i32_1 = arith.constant 0 : i32
    return %arg0, %c0_i32, %c0_i32_0 : i32, i32, i32
  }
  func.func @transform_5(%arg0: i32) -> (i32, i32, i32) {
    %c0_i32 = arith.constant 0 : i32
    %c0_i32_0 = arith.constant 0 : i32
    %c0_i32_1 = arith.constant 0 : i32
    return %arg0, %c0_i32, %c0_i32_0 : i32, i32, i32
  }
}

module attributes {stable_mosaic.version = 11 : i64} {
  func.func @_bn_relu_conv2_kernel(%arg0: i32, %arg1: memref<1x256x8xf32, #tpu.memory_space<vmem>>, %arg2: memref<1x8xf32, #tpu.memory_space<vmem>>, %arg3: memref<1x8xf32, #tpu.memory_space<vmem>>, %arg4: memref<72x8xf32, #tpu.memory_space<vmem>>, %arg5: memref<1x8xf32, #tpu.memory_space<vmem>>, %arg6: memref<1x256x8xf32, #tpu.memory_space<vmem>>, %arg7: memref<1x1x8xf32, #tpu.memory_space<vmem>>, %arg8: memref<1x1x8xf32, #tpu.memory_space<vmem>>, %arg9: memref<18x18x8xf32, #tpu.memory_space<vmem>>, %arg10: memref<256x72xf32, #tpu.memory_space<vmem>>) attributes {dimension_semantics = [#tpu.dimension_semantics<parallel>], iteration_bounds = array<i64: 2>, scalar_prefetch = 0 : i64, scratch_operands = 2 : i64, tpu.core_type = #tpu.core_type<tc>, window_params = [{transform_indices = @transform_0, window_bounds = array<i64: 1, 256, 8>}, {pipeline_mode = #tpu.pipeline_mode<synchronous>, transform_indices = @transform_1, window_bounds = array<i64: 1, 8>}, {pipeline_mode = #tpu.pipeline_mode<synchronous>, transform_indices = @transform_2, window_bounds = array<i64: 1, 8>}, {pipeline_mode = #tpu.pipeline_mode<synchronous>, transform_indices = @transform_3, window_bounds = array<i64: 72, 8>}, {pipeline_mode = #tpu.pipeline_mode<synchronous>, transform_indices = @transform_4, window_bounds = array<i64: 1, 8>}, {transform_indices = @transform_5, window_bounds = array<i64: 1, 256, 8>}, {transform_indices = @transform_6, window_bounds = array<i64: 1, 1, 8>}, {transform_indices = @transform_7, window_bounds = array<i64: 1, 1, 8>}]} {
    %c0 = arith.constant 0 : index
    %c0_0 = arith.constant 0 : index
    %c0_1 = arith.constant 0 : index
    %0 = vector.load %arg1[%c0, %c0_0, %c0_1] : memref<1x256x8xf32, #tpu.memory_space<vmem>>, vector<1x256x8xf32>
    %1 = vector.shape_cast %0 : vector<1x256x8xf32> to vector<256x8xf32>
    %c0_2 = arith.constant 0 : index
    %c0_3 = arith.constant 0 : index
    %2 = vector.load %arg2[%c0_2, %c0_3] : memref<1x8xf32, #tpu.memory_space<vmem>>, vector<1x8xf32>
    %3 = vector.broadcast %2 : vector<1x8xf32> to vector<256x8xf32>
    %4 = arith.mulf %1, %3 : vector<256x8xf32>
    %c0_4 = arith.constant 0 : index
    %c0_5 = arith.constant 0 : index
    %5 = vector.load %arg3[%c0_4, %c0_5] : memref<1x8xf32, #tpu.memory_space<vmem>>, vector<1x8xf32>
    %6 = vector.broadcast %5 : vector<1x8xf32> to vector<256x8xf32>
    %7 = arith.addf %4, %6 : vector<256x8xf32>
    %cst = arith.constant 0.000000e+00 : f32
    %8 = vector.broadcast %cst : f32 to vector<256x8xf32>
    %9 = arith.maximumf %7, %8 : vector<256x8xf32>
    %cst_6 = arith.constant 0.000000e+00 : f32
    %10 = vector.broadcast %cst_6 : f32 to vector<1x18x8xf32>
    %c0_7 = arith.constant 0 : index
    %c0_8 = arith.constant 0 : index
    %c0_9 = arith.constant 0 : index
    %11 = vector.load %arg9[%c0_7, %c0_8, %c0_9] : memref<18x18x8xf32, #tpu.memory_space<vmem>>, vector<1x18x8xf32>
    tpu.vector_store %arg9[%c0_7, %c0_8, %c0_9], %10 {strides = array<i32>} : memref<18x18x8xf32, #tpu.memory_space<vmem>>, vector<1x18x8xf32>,
    %cst_10 = arith.constant 0.000000e+00 : f32
    %12 = vector.broadcast %cst_10 : f32 to vector<1x18x8xf32>
    %c17 = arith.constant 17 : index
    %c0_11 = arith.constant 0 : index
    %c0_12 = arith.constant 0 : index
    %13 = vector.load %arg9[%c17, %c0_11, %c0_12] : memref<18x18x8xf32, #tpu.memory_space<vmem>>, vector<1x18x8xf32>
    tpu.vector_store %arg9[%c17, %c0_11, %c0_12], %12 {strides = array<i32>} : memref<18x18x8xf32, #tpu.memory_space<vmem>>, vector<1x18x8xf32>,
    %cst_13 = arith.constant 0.000000e+00 : f32
    %14 = vector.broadcast %cst_13 : f32 to vector<16x1x8xf32>
    %c1 = arith.constant 1 : index
    %c0_14 = arith.constant 0 : index
    %c0_15 = arith.constant 0 : index
    %15 = vector.load %arg9[%c1, %c0_14, %c0_15] : memref<18x18x8xf32, #tpu.memory_space<vmem>>, vector<16x1x8xf32>
    tpu.vector_store %arg9[%c1, %c0_14, %c0_15], %14 {strides = array<i32>} : memref<18x18x8xf32, #tpu.memory_space<vmem>>, vector<16x1x8xf32>,
    %cst_16 = arith.constant 0.000000e+00 : f32
    %16 = vector.broadcast %cst_16 : f32 to vector<16x1x8xf32>
    %c1_17 = arith.constant 1 : index
    %c17_18 = arith.constant 17 : index
    %c0_19 = arith.constant 0 : index
    %17 = vector.load %arg9[%c1_17, %c17_18, %c0_19] : memref<18x18x8xf32, #tpu.memory_space<vmem>>, vector<16x1x8xf32>
    tpu.vector_store %arg9[%c1_17, %c17_18, %c0_19], %16 {strides = array<i32>} : memref<18x18x8xf32, #tpu.memory_space<vmem>>, vector<16x1x8xf32>,
    %18 = vector.shape_cast %9 : vector<256x8xf32> to vector<16x16x8xf32>
    %c1_20 = arith.constant 1 : index
    %c1_21 = arith.constant 1 : index
    %c0_22 = arith.constant 0 : index
    %19 = vector.load %arg9[%c1_20, %c1_21, %c0_22] : memref<18x18x8xf32, #tpu.memory_space<vmem>>, vector<16x16x8xf32>
    tpu.vector_store %arg9[%c1_20, %c1_21, %c0_22], %18 {strides = array<i32>} : memref<18x18x8xf32, #tpu.memory_space<vmem>>, vector<16x16x8xf32>,
    %c0_23 = arith.constant 0 : index
    %c0_24 = arith.constant 0 : index
    %c0_25 = arith.constant 0 : index
    %20 = vector.load %arg9[%c0_23, %c0_24, %c0_25] : memref<18x18x8xf32, #tpu.memory_space<vmem>>, vector<16x16x8xf32>
    %21 = vector.shape_cast %20 : vector<16x16x8xf32> to vector<256x8xf32>
    %c0_26 = arith.constant 0 : index
    %c0_27 = arith.constant 0 : index
    %22 = vector.load %arg10[%c0_26, %c0_27] : memref<256x72xf32, #tpu.memory_space<vmem>>, vector<256x8xf32>
    tpu.vector_store %arg10[%c0_26, %c0_27], %21 {strides = array<i32>} : memref<256x72xf32, #tpu.memory_space<vmem>>, vector<256x8xf32>,
    %c0_28 = arith.constant 0 : index
    %c1_29 = arith.constant 1 : index
    %c0_30 = arith.constant 0 : index
    %23 = vector.load %arg9[%c0_28, %c1_29, %c0_30] : memref<18x18x8xf32, #tpu.memory_space<vmem>>, vector<16x16x8xf32>
    %24 = vector.shape_cast %23 : vector<16x16x8xf32> to vector<256x8xf32>
    %c0_31 = arith.constant 0 : index
    %c8 = arith.constant 8 : index
    %25 = vector.load %arg10[%c0_31, %c8] : memref<256x72xf32, #tpu.memory_space<vmem>>, vector<256x8xf32>
    tpu.vector_store %arg10[%c0_31, %c8], %24 {strides = array<i32>} : memref<256x72xf32, #tpu.memory_space<vmem>>, vector<256x8xf32>,
    %c0_32 = arith.constant 0 : index
    %c2 = arith.constant 2 : index
    %c0_33 = arith.constant 0 : index
    %26 = vector.load %arg9[%c0_32, %c2, %c0_33] : memref<18x18x8xf32, #tpu.memory_space<vmem>>, vector<16x16x8xf32>
    %27 = vector.shape_cast %26 : vector<16x16x8xf32> to vector<256x8xf32>
    %c0_34 = arith.constant 0 : index
    %c16 = arith.constant 16 : index
    %28 = vector.load %arg10[%c0_34, %c16] : memref<256x72xf32, #tpu.memory_space<vmem>>, vector<256x8xf32>
    tpu.vector_store %arg10[%c0_34, %c16], %27 {strides = array<i32>} : memref<256x72xf32, #tpu.memory_space<vmem>>, vector<256x8xf32>,
    %c1_35 = arith.constant 1 : index
    %c0_36 = arith.constant 0 : index
    %c0_37 = arith.constant 0 : index
    %29 = vector.load %arg9[%c1_35, %c0_36, %c0_37] : memref<18x18x8xf32, #tpu.memory_space<vmem>>, vector<16x16x8xf32>
    %30 = vector.shape_cast %29 : vector<16x16x8xf32> to vector<256x8xf32>
    %c0_38 = arith.constant 0 : index
    %c24 = arith.constant 24 : index
    %31 = vector.load %arg10[%c0_38, %c24] : memref<256x72xf32, #tpu.memory_space<vmem>>, vector<256x8xf32>
    tpu.vector_store %arg10[%c0_38, %c24], %30 {strides = array<i32>} : memref<256x72xf32, #tpu.memory_space<vmem>>, vector<256x8xf32>,
    %c1_39 = arith.constant 1 : index
    %c1_40 = arith.constant 1 : index
    %c0_41 = arith.constant 0 : index
    %32 = vector.load %arg9[%c1_39, %c1_40, %c0_41] : memref<18x18x8xf32, #tpu.memory_space<vmem>>, vector<16x16x8xf32>
    %33 = vector.shape_cast %32 : vector<16x16x8xf32> to vector<256x8xf32>
    %c0_42 = arith.constant 0 : index
    %c32 = arith.constant 32 : index
    %34 = vector.load %arg10[%c0_42, %c32] : memref<256x72xf32, #tpu.memory_space<vmem>>, vector<256x8xf32>
    tpu.vector_store %arg10[%c0_42, %c32], %33 {strides = array<i32>} : memref<256x72xf32, #tpu.memory_space<vmem>>, vector<256x8xf32>,
    %c1_43 = arith.constant 1 : index
    %c2_44 = arith.constant 2 : index
    %c0_45 = arith.constant 0 : index
    %35 = vector.load %arg9[%c1_43, %c2_44, %c0_45] : memref<18x18x8xf32, #tpu.memory_space<vmem>>, vector<16x16x8xf32>
    %36 = vector.shape_cast %35 : vector<16x16x8xf32> to vector<256x8xf32>
    %c0_46 = arith.constant 0 : index
    %c40 = arith.constant 40 : index
    %37 = vector.load %arg10[%c0_46, %c40] : memref<256x72xf32, #tpu.memory_space<vmem>>, vector<256x8xf32>
    tpu.vector_store %arg10[%c0_46, %c40], %36 {strides = array<i32>} : memref<256x72xf32, #tpu.memory_space<vmem>>, vector<256x8xf32>,
    %c2_47 = arith.constant 2 : index
    %c0_48 = arith.constant 0 : index
    %c0_49 = arith.constant 0 : index
    %38 = vector.load %arg9[%c2_47, %c0_48, %c0_49] : memref<18x18x8xf32, #tpu.memory_space<vmem>>, vector<16x16x8xf32>
    %39 = vector.shape_cast %38 : vector<16x16x8xf32> to vector<256x8xf32>
    %c0_50 = arith.constant 0 : index
    %c48 = arith.constant 48 : index
    %40 = vector.load %arg10[%c0_50, %c48] : memref<256x72xf32, #tpu.memory_space<vmem>>, vector<256x8xf32>
    tpu.vector_store %arg10[%c0_50, %c48], %39 {strides = array<i32>} : memref<256x72xf32, #tpu.memory_space<vmem>>, vector<256x8xf32>,
    %c2_51 = arith.constant 2 : index
    %c1_52 = arith.constant 1 : index
    %c0_53 = arith.constant 0 : index
    %41 = vector.load %arg9[%c2_51, %c1_52, %c0_53] : memref<18x18x8xf32, #tpu.memory_space<vmem>>, vector<16x16x8xf32>
    %42 = vector.shape_cast %41 : vector<16x16x8xf32> to vector<256x8xf32>
    %c0_54 = arith.constant 0 : index
    %c56 = arith.constant 56 : index
    %43 = vector.load %arg10[%c0_54, %c56] : memref<256x72xf32, #tpu.memory_space<vmem>>, vector<256x8xf32>
    tpu.vector_store %arg10[%c0_54, %c56], %42 {strides = array<i32>} : memref<256x72xf32, #tpu.memory_space<vmem>>, vector<256x8xf32>,
    %c2_55 = arith.constant 2 : index
    %c2_56 = arith.constant 2 : index
    %c0_57 = arith.constant 0 : index
    %44 = vector.load %arg9[%c2_55, %c2_56, %c0_57] : memref<18x18x8xf32, #tpu.memory_space<vmem>>, vector<16x16x8xf32>
    %45 = vector.shape_cast %44 : vector<16x16x8xf32> to vector<256x8xf32>
    %c0_58 = arith.constant 0 : index
    %c64 = arith.constant 64 : index
    %46 = vector.load %arg10[%c0_58, %c64] : memref<256x72xf32, #tpu.memory_space<vmem>>, vector<256x8xf32>
    tpu.vector_store %arg10[%c0_58, %c64], %45 {strides = array<i32>} : memref<256x72xf32, #tpu.memory_space<vmem>>, vector<256x8xf32>,
    %c0_59 = arith.constant 0 : index
    %c0_60 = arith.constant 0 : index
    %47 = vector.load %arg10[%c0_59, %c0_60] : memref<256x72xf32, #tpu.memory_space<vmem>>, vector<256x72xf32>
    %c0_61 = arith.constant 0 : index
    %c0_62 = arith.constant 0 : index
    %48 = vector.load %arg4[%c0_61, %c0_62] : memref<72x8xf32, #tpu.memory_space<vmem>>, vector<72x8xf32>
    %cst_63 = arith.constant dense<0.000000e+00> : vector<256x8xf32>
    %49 = tpu.matmul %47, %48, %cst_63 {dimension_numbers = #tpu.dot_dimension_numbers<[1], [0], [0], [1], [0, 0, 1, 1], [], []>} : vector<256x72xf32>, vector<72x8xf32>, vector<256x8xf32> -> vector<256x8xf32>
    %c0_64 = arith.constant 0 : index
    %c0_65 = arith.constant 0 : index
    %50 = vector.load %arg5[%c0_64, %c0_65] : memref<1x8xf32, #tpu.memory_space<vmem>>, vector<1x8xf32>
    %51 = vector.broadcast %50 : vector<1x8xf32> to vector<256x8xf32>
    %52 = arith.addf %49, %51 : vector<256x8xf32>
    %c0_66 = arith.constant 0 : index
    %c0_67 = arith.constant 0 : index
    %c0_68 = arith.constant 0 : index
    %53 = vector.load %arg6[%c0_66, %c0_67, %c0_68] : memref<1x256x8xf32, #tpu.memory_space<vmem>>, vector<1x256x8xf32>
    %54 = vector.shape_cast %53 : vector<1x256x8xf32> to vector<256x8xf32>
    %55 = vector.shape_cast %52 : vector<256x8xf32> to vector<1x256x8xf32>
    tpu.vector_store %arg6[%c0_66, %c0_67, %c0_68], %55 {strides = array<i32>} : memref<1x256x8xf32, #tpu.memory_space<vmem>>, vector<1x256x8xf32>,
    %cst_69 = arith.constant dense<0.000000e+00> : vector<8xf32>
    %56 = vector.multi_reduction <add>, %52, %cst_69 [0] : vector<256x8xf32> to vector<8xf32>
    %57 = vector.shape_cast %56 : vector<8xf32> to vector<1x8xf32>
    %c0_70 = arith.constant 0 : index
    %c0_71 = arith.constant 0 : index
    %c0_72 = arith.constant 0 : index
    %58 = vector.load %arg7[%c0_70, %c0_71, %c0_72] : memref<1x1x8xf32, #tpu.memory_space<vmem>>, vector<1x1x8xf32>
    %59 = vector.shape_cast %58 : vector<1x1x8xf32> to vector<1x8xf32>
    %60 = vector.shape_cast %57 : vector<1x8xf32> to vector<1x1x8xf32>
    tpu.vector_store %arg7[%c0_70, %c0_71, %c0_72], %60 {strides = array<i32>} : memref<1x1x8xf32, #tpu.memory_space<vmem>>, vector<1x1x8xf32>,
    %61 = arith.mulf %52, %52 : vector<256x8xf32>
    %cst_73 = arith.constant dense<0.000000e+00> : vector<8xf32>
    %62 = vector.multi_reduction <add>, %61, %cst_73 [0] : vector<256x8xf32> to vector<8xf32>
    %63 = vector.shape_cast %62 : vector<8xf32> to vector<1x8xf32>
    %c0_74 = arith.constant 0 : index
    %c0_75 = arith.constant 0 : index
    %c0_76 = arith.constant 0 : index
    %64 = vector.load %arg8[%c0_74, %c0_75, %c0_76] : memref<1x1x8xf32, #tpu.memory_space<vmem>>, vector<1x1x8xf32>
    %65 = vector.shape_cast %64 : vector<1x1x8xf32> to vector<1x8xf32>
    %66 = vector.shape_cast %63 : vector<1x8xf32> to vector<1x1x8xf32>
    tpu.vector_store %arg8[%c0_74, %c0_75, %c0_76], %66 {strides = array<i32>} : memref<1x1x8xf32, #tpu.memory_space<vmem>>, vector<1x1x8xf32>,
    return
  }
  func.func @transform_0(%arg0: i32) -> (i32, i32, i32) {
    %c0_i32 = arith.constant 0 : i32
    %c0_i32_0 = arith.constant 0 : i32
    %c0_i32_1 = arith.constant 0 : i32
    return %arg0, %c0_i32, %c0_i32_0 : i32, i32, i32
  }
  func.func @transform_1(%arg0: i32) -> (i32, i32) {
    %c0_i32 = arith.constant 0 : i32
    %c0_i32_0 = arith.constant 0 : i32
    %c0_i32_1 = arith.constant 0 : i32
    return %c0_i32, %c0_i32_0 : i32, i32
  }
  func.func @transform_2(%arg0: i32) -> (i32, i32) {
    %c0_i32 = arith.constant 0 : i32
    %c0_i32_0 = arith.constant 0 : i32
    %c0_i32_1 = arith.constant 0 : i32
    return %c0_i32, %c0_i32_0 : i32, i32
  }
  func.func @transform_3(%arg0: i32) -> (i32, i32) {
    %c0_i32 = arith.constant 0 : i32
    %c0_i32_0 = arith.constant 0 : i32
    %c0_i32_1 = arith.constant 0 : i32
    return %c0_i32, %c0_i32_0 : i32, i32
  }
  func.func @transform_4(%arg0: i32) -> (i32, i32) {
    %c0_i32 = arith.constant 0 : i32
    %c0_i32_0 = arith.constant 0 : i32
    %c0_i32_1 = arith.constant 0 : i32
    return %c0_i32, %c0_i32_0 : i32, i32
  }
  func.func @transform_5(%arg0: i32) -> (i32, i32, i32) {
    %c0_i32 = arith.constant 0 : i32
    %c0_i32_0 = arith.constant 0 : i32
    %c0_i32_1 = arith.constant 0 : i32
    return %arg0, %c0_i32, %c0_i32_0 : i32, i32, i32
  }
  func.func @transform_6(%arg0: i32) -> (i32, i32, i32) {
    %c0_i32 = arith.constant 0 : i32
    %c0_i32_0 = arith.constant 0 : i32
    %c0_i32_1 = arith.constant 0 : i32
    return %arg0, %c0_i32, %c0_i32_0 : i32, i32, i32
  }
  func.func @transform_7(%arg0: i32) -> (i32, i32, i32) {
    %c0_i32 = arith.constant 0 : i32
    %c0_i32_0 = arith.constant 0 : i32
    %c0_i32_1 = arith.constant 0 : i32
    return %arg0, %c0_i32, %c0_i32_0 : i32, i32, i32
  }
}

module attributes {stable_mosaic.version = 11 : i64} {
  func.func @_bn_relu_kernel(%arg0: i32, %arg1: memref<32x128xf32, #tpu.memory_space<vmem>>, %arg2: memref<1x128xf32, #tpu.memory_space<vmem>>, %arg3: memref<1x128xf32, #tpu.memory_space<vmem>>, %arg4: memref<32x128xf32, #tpu.memory_space<vmem>>) attributes {dimension_semantics = [#tpu.dimension_semantics<parallel>], iteration_bounds = array<i64: 1>, scalar_prefetch = 0 : i64, scratch_operands = 0 : i64, tpu.core_type = #tpu.core_type<tc>, window_params = [{transform_indices = @transform_0, window_bounds = array<i64: 32, 128>}, {pipeline_mode = #tpu.pipeline_mode<synchronous>, transform_indices = @transform_1, window_bounds = array<i64: 1, 128>}, {pipeline_mode = #tpu.pipeline_mode<synchronous>, transform_indices = @transform_2, window_bounds = array<i64: 1, 128>}, {transform_indices = @transform_3, window_bounds = array<i64: 32, 128>}]} {
    %c0 = arith.constant 0 : index
    %c0_0 = arith.constant 0 : index
    %0 = vector.load %arg1[%c0, %c0_0] : memref<32x128xf32, #tpu.memory_space<vmem>>, vector<32x128xf32>
    %c0_1 = arith.constant 0 : index
    %c0_2 = arith.constant 0 : index
    %1 = vector.load %arg2[%c0_1, %c0_2] : memref<1x128xf32, #tpu.memory_space<vmem>>, vector<1x128xf32>
    %2 = vector.broadcast %1 : vector<1x128xf32> to vector<32x128xf32>
    %3 = arith.mulf %0, %2 : vector<32x128xf32>
    %c0_3 = arith.constant 0 : index
    %c0_4 = arith.constant 0 : index
    %4 = vector.load %arg3[%c0_3, %c0_4] : memref<1x128xf32, #tpu.memory_space<vmem>>, vector<1x128xf32>
    %5 = vector.broadcast %4 : vector<1x128xf32> to vector<32x128xf32>
    %6 = arith.addf %3, %5 : vector<32x128xf32>
    %cst = arith.constant 0.000000e+00 : f32
    %7 = vector.broadcast %cst : f32 to vector<32x128xf32>
    %8 = arith.maximumf %6, %7 : vector<32x128xf32>
    %c0_5 = arith.constant 0 : index
    %c0_6 = arith.constant 0 : index
    %9 = vector.load %arg4[%c0_5, %c0_6] : memref<32x128xf32, #tpu.memory_space<vmem>>, vector<32x128xf32>
    tpu.vector_store %arg4[%c0_5, %c0_6], %8 {strides = array<i32>} : memref<32x128xf32, #tpu.memory_space<vmem>>, vector<32x128xf32>,
    return
  }
  func.func @transform_0(%arg0: i32) -> (i32, i32) {
    %c0_i32 = arith.constant 0 : i32
    %c0_i32_0 = arith.constant 0 : i32
    return %arg0, %c0_i32 : i32, i32
  }
  func.func @transform_1(%arg0: i32) -> (i32, i32) {
    %c0_i32 = arith.constant 0 : i32
    %c0_i32_0 = arith.constant 0 : i32
    %c0_i32_1 = arith.constant 0 : i32
    return %c0_i32, %c0_i32_0 : i32, i32
  }
  func.func @transform_2(%arg0: i32) -> (i32, i32) {
    %c0_i32 = arith.constant 0 : i32
    %c0_i32_0 = arith.constant 0 : i32
    %c0_i32_1 = arith.constant 0 : i32
    return %c0_i32, %c0_i32_0 : i32, i32
  }
  func.func @transform_3(%arg0: i32) -> (i32, i32) {
    %c0_i32 = arith.constant 0 : i32
    %c0_i32_0 = arith.constant 0 : i32
    return %arg0, %c0_i32 : i32, i32
  }
}

</mosaic_0001>

<llo_original>
// kernel: double_conv_forward.5
$region0: #{double_conv_forward.5}
  #allocation0 [shape = 'u32[]', space=smem, size = 0x4, offset = 0x4, fixed_abs, tag = 'smem constant byte address 0x4 - core index']
  #allocation1 [shape = 'u32[72,128]{1,0:T(1,128)}', space=vmem, size = 0x9000, scoped, tag = 'internal scratch']
  %s0 = inlined_call_operand.vmem [shape: f32[32,128], index: 0, kind: input, shape index: {}]
  %s1 = inlined_call_operand.vmem [shape: f32[1,128], index: 1, kind: input, shape index: {}]
  %s2 = inlined_call_operand.vmem [shape: f32[1,128], index: 2, kind: input, shape index: {}]
  %s3 = inlined_call_operand.vmem [shape: f32[32,128], index: 3, kind: output, shape index: {}]
  %s4 = sld [smem:[#allocation0]]
  $region22: #{double_conv_forward.5} parent=0
    _
  %s6 = ssub.s32 1, %s4
  %s7 = scalar_select 0, %s6, %s4
  // Predicated region
  $region2: #{double_conv_forward.5} parent=0 // pred_check
    _
  $region3: #{double_conv_forward.5} parent=0 // pred_check_branch
    %9 = sbr.rel (0) target = $region5
  $region4: #{double_conv_forward.5} parent=0 // pred_region
    _
  $region5: #{double_conv_forward.5} parent=0 // pred_fallthru
    _
  // Predicated region
  $region6: #{double_conv_forward.5} parent=0 // pred_check
    _
  $region7: #{double_conv_forward.5} parent=0 // pred_check_branch
    %11 = sbr.rel (0) target = $region9
  $region8: #{double_conv_forward.5} parent=0 // pred_region
    _
  $region9: #{double_conv_forward.5} parent=0 // pred_fallthru
    _
  // Predicated region
  $region10: #{double_conv_forward.5} parent=0 // pred_check
    _
  $region11: #{double_conv_forward.5} parent=0 // pred_check_branch
    %13 = sbr.rel (0) target = $region13
  $region12: #{double_conv_forward.5} parent=0 // pred_region
    _
  $region13: #{double_conv_forward.5} parent=0 // pred_fallthru
    _
  %v14 = vld [vmem:[%s0] sm:$0xff]
  %v15 = vld [vmem:[%s0 + $0x8] sm:$0xff]
  %v16 = vld [vmem:[%s0 + $0x10] sm:$0xff]
  %v17 = vld [vmem:[%s0 + $0x18] sm:$0xff]
  %v18 = vld [vmem:[%s1] sm:$0x1]
  %v20 = vperm.slane %v18, 0
  %v22 = vmul.f32 %v14, %v20
  %v23 = vmul.f32 %v15, %v20
  %v24 = vmul.f32 %v16, %v20
  %v25 = vmul.f32 %v17, %v20
  %v26 = vld [vmem:[%s2] sm:$0x1]
  %v28 = vperm.slane %v26, 0
  %v30 = vadd.f32 %v22, %v28
  %v31 = vadd.f32 %v23, %v28
  %v32 = vadd.f32 %v24, %v28
  %v33 = vadd.f32 %v25, %v28
  %v34 = vmax.f32 %v30, 0.0
  %v35 = vmax.f32 %v31, 0.0
  %v36 = vmax.f32 %v32, 0.0
  %v37 = vmax.f32 %v33, 0.0
  %38 = vst [vmem:[%s3] sm:$0xff] %v34
  %39 = vst [vmem:[%s3 + $0x8] sm:$0xff] %v35
  %40 = vst [vmem:[%s3 + $0x10] sm:$0xff] %v36
  %41 = vst [vmem:[%s3 + $0x18] sm:$0xff] %v37
  // Predicated region
  $region14: #{double_conv_forward.5} parent=0 // pred_check
    _
  $region15: #{double_conv_forward.5} parent=0 // pred_check_branch
    %43 = sbr.rel (0) target = $region17
  $region16: #{double_conv_forward.5} parent=0 // pred_region
    _
  $region17: #{double_conv_forward.5} parent=0 // pred_fallthru
    _
  // Predicated region
  $region18: #{double_conv_forward.5} parent=0 // pred_check
    _
  $region19: #{double_conv_forward.5} parent=0 // pred_check_branch
    %45 = sbr.rel (0) target = $region21
  $region20: #{double_conv_forward.5} parent=0 // pred_region
    _
  $region21: #{double_conv_forward.5} parent=0 // pred_fallthru
    _

// kernel: double_conv_forward.3
$region0: #{double_conv_forward.3}
  #allocation0 [shape = 'u32[]', space=smem, size = 0x4, offset = 0x4, fixed_abs, tag = 'smem constant byte address 0x4 - core index']
  #allocation1 [shape = 'u32[72,128]{1,0:T(1,128)}', space=vmem, size = 0x9000, scoped, tag = 'internal scratch']
  #allocation2 [shape = 'f32[18,18,4]{2,1,0:T(8,128)}', space=vmem, size = 0x36000, scoped, tag = 'scratch operand']
  #allocation3 [shape = 'f32[256,36]{1,0:T(8,128)}', space=vmem, size = 0x20000, scoped, tag = 'scratch operand']
  %s0 = inlined_call_operand.vmem [shape: f32[2,256,4], index: 0, kind: input, shape index: {}]
  %s1 = inlined_call_operand.vmem [shape: f32[36,8], index: 1, kind: input, shape index: {}]
  %s2 = inlined_call_operand.vmem [shape: f32[1,8], index: 2, kind: input, shape index: {}]
  %s3 = inlined_call_operand.vmem [shape: f32[2,256,8], index: 3, kind: output, shape index: {0}]
  %s4 = inlined_call_operand.vmem [shape: f32[2,1,8], index: 4, kind: output, shape index: {1}]
  %s5 = inlined_call_operand.vmem [shape: f32[2,1,8], index: 5, kind: output, shape index: {2}]
  %6 = xla_tuple %s3, %s4, %s5
  %s7 = sld [smem:[#allocation0]]
  $region61: #{double_conv_forward.3} parent=0
    _
  %s9 = ssub.s32 1, %s7
  %s10 = scalar_select 0, %s9, %s7
  loop: start=0, step=1, limit=4
  $region2: #{double_conv_forward.3} parent=0 // loop_pre_header
    _
  $region3: #{double_conv_forward.3} parent=0 // loop_header
    %s12 = sphi 0, %s16
    %p13 = scmp.ge.s32.totalorder %s12, 4
    %s22 = sphi 0, %s24
    %s25 = sphi 0, %s22
    %s26 = sphi 0, %s25
    %s42 = sphi 0, %s26
    %s46 = sphi 0, %s46
    %s48 = sphi 0, %s46
    %s49 = sphi 0, %s48
    %s63 = sphi 0, %s49
    %s67 = sphi 0, %s67
    %s69 = sphi 0, %s67
    %s70 = sphi 0, %s69
    %s84 = sphi 0, %s70
    %s90 = sphi 0, %s92
    %s93 = sphi 0, %s90
    %s94 = sphi 0, %s93
    %s110 = sphi 0, %s94
    %s116 = sphi 0, %s118
    %s119 = sphi 0, %s116
    %s120 = sphi 0, %s119
    %s136 = sphi 0, %s120
    %s142 = sphi 0, %s144
    %s145 = sphi 0, %s142
    %s146 = sphi 0, %s145
    %s162 = sphi 0, %s146
  $region4: #{double_conv_forward.3} parent=0 // loop_header_branch
    %15 = sbr.rel (%p13) target = $region8
  $region5: #{double_conv_forward.3} parent=0 // loop_body
    %s17 = ssub.s32 %s12, 1
    %s18 = ssub.s32 %s12, 2
    %s19 = sadd.s32 %s12, 1
    %s20 = ssub.s32 %s12, %s19
    %p21 = scmp.eq.s32.totalorder %s20, 0
    %s23 = sadd.s32 %s22, 1
    %s24 = scalar_select %p21, %s22, %s23
    %p27 = pneg %p21
    %p28 = scmp.eq.s32.totalorder %s12, 1
    %p29 = por %p27, %p28
    %p30 = scmp.ne.s32.totalorder %s22, %s25
    %p31 = scmp.eq.s32.totalorder %s12, 0
    %p32 = por %p30, %p31
    %p33 = scmp.ne.s32.totalorder %s22, %s25
    %p34 = scmp.eq.s32.totalorder %s17, 1
    %p35 = por %p33, %p34
    %p36 = scmp.ne.s32.totalorder %s25, %s26
    %p37 = scmp.eq.s32.totalorder %s17, 0
    %p38 = por %p36, %p37
    %p39 = scmp.ne.s32.totalorder %s25, %s26
    %p40 = scmp.eq.s32.totalorder %s18, 1
    %p41 = por %p39, %p40
    %p43 = scmp.ne.s32.totalorder %s26, %s42
    %p44 = scmp.eq.s32.totalorder %s18, 0
    %p45 = por %p43, %p44
    %s47 = sadd.s32 %s46, 1
    %p50 = scmp.eq.s32.totalorder %s12, 1
    %p51 = scmp.ne.s32.totalorder %s46, %s48
    %p52 = scmp.eq.s32.totalorder %s12, 0
    %p53 = por %p51, %p52
    %p54 = scmp.ne.s32.totalorder %s46, %s48
    %p55 = scmp.eq.s32.totalorder %s17, 1
    %p56 = por %p54, %p55
    %p57 = scmp.ne.s32.totalorder %s48, %s49
    %p58 = scmp.eq.s32.totalorder %s17, 0
    %p59 = por %p57, %p58
    %p60 = scmp.ne.s32.totalorder %s48, %s49
    %p61 = scmp.eq.s32.totalorder %s18, 1
    %p62 = por %p60, %p61
    %p64 = scmp.ne.s32.totalorder %s49, %s63
    %p65 = scmp.eq.s32.totalorder %s18, 0
    %p66 = por %p64, %p65
    %s68 = sadd.s32 %s67, 1
    %p71 = scmp.eq.s32.totalorder %s12, 1
    %p72 = scmp.ne.s32.totalorder %s67, %s69
    %p73 = scmp.eq.s32.totalorder %s12, 0
    %p74 = por %p72, %p73
    %p75 = scmp.ne.s32.totalorder %s67, %s69
    %p76 = scmp.eq.s32.totalorder %s17, 1
    %p77 = por %p75, %p76
    %p78 = scmp.ne.s32.totalorder %s69, %s70
    %p79 = scmp.eq.s32.totalorder %s17, 0
    %p80 = por %p78, %p79
    %p81 = scmp.ne.s32.totalorder %s69, %s70
    %p82 = scmp.eq.s32.totalorder %s18, 1
    %p83 = por %p81, %p82
    %p85 = scmp.ne.s32.totalorder %s70, %s84
    %p86 = scmp.eq.s32.totalorder %s18, 0
    %p87 = por %p85, %p86
    %s88 = ssub.s32 %s12, %s19
    %p89 = scmp.eq.s32.totalorder %s88, 0
    %s91 = sadd.s32 %s90, 1
    %s92 = scalar_select %p89, %s90, %s91
    %p95 = pneg %p89
    %p96 = scmp.eq.s32.totalorder %s12, 1
    %p97 = por %p95, %p96
    %p98 = scmp.ne.s32.totalorder %s90, %s93
    %p99 = scmp.eq.s32.totalorder %s12, 0
    %p100 = por %p98, %p99
    %p101 = scmp.ne.s32.totalorder %s90, %s93
    %p102 = scmp.eq.s32.totalorder %s17, 1
    %p103 = por %p101, %p102
    %p104 = scmp.ne.s32.totalorder %s93, %s94
    %p105 = scmp.eq.s32.totalorder %s17, 0
    %p106 = por %p104, %p105
    %p107 = scmp.ne.s32.totalorder %s93, %s94
    %p108 = scmp.eq.s32.totalorder %s18, 1
    %p109 = por %p107, %p108
    %p111 = scmp.ne.s32.totalorder %s94, %s110
    %p112 = scmp.eq.s32.totalorder %s18, 0
    %p113 = por %p111, %p112
    %s114 = ssub.s32 %s12, %s19
    %p115 = scmp.eq.s32.totalorder %s114, 0
    %s117 = sadd.s32 %s116, 1
    %s118 = scalar_select %p115, %s116, %s117
    %p121 = pneg %p115
    %p122 = scmp.eq.s32.totalorder %s12, 1
    %p123 = por %p121, %p122
    %p124 = scmp.ne.s32.totalorder %s116, %s119
    %p125 = scmp.eq.s32.totalorder %s12, 0
    %p126 = por %p124, %p125
    %p127 = scmp.ne.s32.totalorder %s116, %s119
    %p128 = scmp.eq.s32.totalorder %s17, 1
    %p129 = por %p127, %p128
    %p130 = scmp.ne.s32.totalorder %s119, %s120
    %p131 = scmp.eq.s32.totalorder %s17, 0
    %p132 = por %p130, %p131
    %p133 = scmp.ne.s32.totalorder %s119, %s120
    %p134 = scmp.eq.s32.totalorder %s18, 1
    %p135 = por %p133, %p134
    %p137 = scmp.ne.s32.totalorder %s120, %s136
    %p138 = scmp.eq.s32.totalorder %s18, 0
    %p139 = por %p137, %p138
    %s140 = ssub.s32 %s12, %s19
    %p141 = scmp.eq.s32.totalorder %s140, 0
    %s143 = sadd.s32 %s142, 1
    %s144 = scalar_select %p141, %s142, %s143
    %p147 = pneg %p141
    %p148 = scmp.eq.s32.totalorder %s12, 1
    %p149 = por %p147, %p148
    %p150 = scmp.ne.s32.totalorder %s142, %s145
    %p151 = scmp.eq.s32.totalorder %s12, 0
    %p152 = por %p150, %p151
    %p153 = scmp.ne.s32.totalorder %s142, %s145
    %p154 = scmp.eq.s32.totalorder %s17, 1
    %p155 = por %p153, %p154
    %p156 = scmp.ne.s32.totalorder %s145, %s146
    %p157 = scmp.eq.s32.totalorder %s17, 0
    %p158 = por %p156, %p157
    %p159 = scmp.ne.s32.totalorder %s145, %s146
    %p160 = scmp.eq.s32.totalorder %s18, 1
    %p161 = por %p159, %p160
    %p163 = scmp.ne.s32.totalorder %s146, %s162
    %p164 = scmp.eq.s32.totalorder %s18, 0
    %p165 = por %p163, %p164
    %p166 = scmp.le.s32.totalorder 1, %s12
    %p167 = scmp.lt.s32.totalorder %s12, 3
    %p168 = pnand %p166, %p167
    %p169 = pneg %p168
    // Predicated region
    $region9: #{double_conv_forward.3} parent=5 // pred_check
      _
    $region10: #{double_conv_forward.3} parent=5 // pred_check_branch
      %171 = sbr.rel (%p168) target = $region12
    $region11: #{double_conv_forward.3} parent=5 // pred_region
      %s172 = ssub.s32 %s12, 1
      // Predicated region
      $region13: #{double_conv_forward.3} parent=11 // pred_check
        %p173 = pneg %p59
      $region14: #{double_conv_forward.3} parent=11 // pred_check_branch
        %175 = sbr.rel (%p173) target = $region16
      $region15: #{double_conv_forward.3} parent=11 // pred_region
        _
      $region16: #{double_conv_forward.3} parent=11 // pred_fallthru
        _
      // Predicated region
      $region17: #{double_conv_forward.3} parent=11 // pred_check
        %p176 = pneg %p80
      $region18: #{double_conv_forward.3} parent=11 // pred_check_branch
        %178 = sbr.rel (%p176) target = $region20
      $region19: #{double_conv_forward.3} parent=11 // pred_region
        _
      $region20: #{double_conv_forward.3} parent=11 // pred_fallthru
        _
    $region12: #{double_conv_forward.3} parent=5 // pred_fallthru
      _
    %p179 = scmp.lt.s32.totalorder %s12, 2
    // Predicated region
    $region21: #{double_conv_forward.3} parent=5 // pred_check
      %p180 = pneg %p179
    $region22: #{double_conv_forward.3} parent=5 // pred_check_branch
      %182 = sbr.rel (%p180) target = $region24
    $region23: #{double_conv_forward.3} parent=5 // pred_region
      // Predicated region
      $region25: #{double_conv_forward.3} parent=23 // pred_check
        %p183 = pneg %p32
      $region26: #{double_conv_forward.3} parent=23 // pred_check_branch
        %185 = sbr.rel (%p183) target = $region28
      $region27: #{double_conv_forward.3} parent=23 // pred_region
        %p186 = scmp.lt.s32.totalorder %s12, 1
        %s187 = scalar_select %p186, %s12, 1
        %s188 = smul.addr %s187, 32
        %s189 = smul.addr %s188, 8
        %s190 = scalar_lea.vmem %s0, %s189
      $region28: #{double_conv_forward.3} parent=23 // pred_fallthru
        _
    $region24: #{double_conv_forward.3} parent=5 // pred_fallthru
      _
    %p191 = scmp.le.s32.totalorder 1, %s12
    %p192 = scmp.lt.s32.totalorder %s12, 3
    %p193 = pnand %p191, %p192
    %p194 = pneg %p193
    // Predicated region
    $region29: #{double_conv_forward.3} parent=5 // pred_check
      _
    $region30: #{double_conv_forward.3} parent=5 // pred_check_branch
      %196 = sbr.rel (%p193) target = $region32
    $region31: #{double_conv_forward.3} parent=5 // pred_region
      %s197 = ssub.s32 %s12, 1
      %p198 = scmp.lt.s32.totalorder %s17, 1
      %s199 = scalar_select %p198, %s17, 1
      %s200 = smul.addr %s199, 32
      %s201 = smul.addr %s200, 8
      %s202 = scalar_lea.vmem %s0, %s201
      %p203 = pneg %p38
      %p204 = pneg %p35
      %p205 = pneg %p59
      %p206 = pneg %p56
      %p207 = pneg %p80
      %p208 = pneg %p77
      %p209 = pneg %p106
      %p210 = pneg %p103
      %p211 = scmp.lt.s32.totalorder %s17, 1
      %s212 = scalar_select %p211, %s17, 1
      %s213 = smul.addr %s212, 32
      %s214 = smul.addr %s213, 8
      %s215 = scalar_lea.vmem %s3, %s214
      %p216 = pneg %p132
      %p217 = pneg %p129
      %p218 = scmp.lt.s32.totalorder %s17, 1
      %s219 = scalar_select %p218, %s17, 1
      %s220 = scalar_lea.vmem %s4, %s219
      %p221 = pneg %p158
      %p222 = pneg %p155
      %p223 = scmp.lt.s32.totalorder %s17, 1
      %s224 = scalar_select %p223, %s17, 1
      %s225 = scalar_lea.vmem %s5, %s224
      %p226 = scmp.lt.s32.totalorder %s17, 1
      %s227 = scalar_select %p226, %s17, 1
      %s228 = smul.addr %s227, 32
      %s229 = smul.addr %s228, 8
      %s230 = scalar_lea.vmem %s0, %s229
      %p231 = scmp.lt.s32.totalorder %s17, 1
      %s232 = scalar_select %p231, %s17, 1
      %s233 = smul.addr %s232, 32
      %s234 = smul.addr %s233, 8
      %s235 = scalar_lea.vmem %s3, %s234
      %p236 = scmp.lt.s32.totalorder %s17, 1
      %s237 = scalar_select %p236, %s17, 1
      %s238 = scalar_lea.vmem %s4, %s237
      %p239 = scmp.lt.s32.totalorder %s17, 1
      %s240 = scalar_select %p239, %s17, 1
      %s241 = scalar_lea.vmem %s5, %s240
      %v242 = vld [vmem:[%s230] sm:$0xff]
      %v243 = vld [vmem:[%s230 + $0x8] sm:$0xff]
      %v244 = vld [vmem:[%s230 + $0x10] sm:$0xff]
      %v245 = vld [vmem:[%s230 + $0x18] sm:$0xff]
      %v246 = vld [vmem:[%s230 + $0x20] sm:$0xff]
      %v247 = vld [vmem:[%s230 + $0x28] sm:$0xff]
      %v248 = vld [vmem:[%s230 + $0x30] sm:$0xff]
      %v249 = vld [vmem:[%s230 + $0x38] sm:$0xff]
      %v250 = vld [vmem:[%s230 + $0x40] sm:$0xff]
      %v251 = vld [vmem:[%s230 + $0x48] sm:$0xff]
      %v252 = vld [vmem:[%s230 + $0x50] sm:$0xff]
      %v253 = vld [vmem:[%s230 + $0x58] sm:$0xff]
      %v254 = vld [vmem:[%s230 + $0x60] sm:$0xff]
      %v255 = vld [vmem:[%s230 + $0x68] sm:$0xff]
      %v256 = vld [vmem:[%s230 + $0x70] sm:$0xff]
      %v257 = vld [vmem:[%s230 + $0x78] sm:$0xff]
      %v258 = vld [vmem:[%s230 + $0x80] sm:$0xff]
      %v259 = vld [vmem:[%s230 + $0x88] sm:$0xff]
      %v260 = vld [vmem:[%s230 + $0x90] sm:$0xff]
      %v261 = vld [vmem:[%s230 + $0x98] sm:$0xff]
      %v262 = vld [vmem:[%s230 + $0xa0] sm:$0xff]
      %v263 = vld [vmem:[%s230 + $0xa8] sm:$0xff]
      %v264 = vld [vmem:[%s230 + $0xb0] sm:$0xff]
      %v265 = vld [vmem:[%s230 + $0xb8] sm:$0xff]
      %v266 = vld [vmem:[%s230 + $0xc0] sm:$0xff]
      %v267 = vld [vmem:[%s230 + $0xc8] sm:$0xff]
      %v268 = vld [vmem:[%s230 + $0xd0] sm:$0xff]
      %v269 = vld [vmem:[%s230 + $0xd8] sm:$0xff]
      %v270 = vld [vmem:[%s230 + $0xe0] sm:$0xff]
      %v271 = vld [vmem:[%s230 + $0xe8] sm:$0xff]
      %v272 = vld [vmem:[%s230 + $0xf0] sm:$0xff]
      %v273 = vld [vmem:[%s230 + $0xf8] sm:$0xff]
      %vm274 = vcmask 31744
      %275 = vst.msk [vmem:[#allocation2] sm:$0xff] %vm274, 0.0
      %276 = vst.msk [vmem:[#allocation2 + $0x8] sm:$0xff] %vm274, 0.0
      %vm277 = vcmask 25600
      %278 = vst.msk [vmem:[#allocation2 + $0x10] sm:$0x3] %vm277, 0.0
      %s279 = scalar_lea.vmem [#allocation2], 408
      %280 = vst.msk [vmem:[%s279] sm:$0xff] %vm274, 0.0
      %281 = vst.msk [vmem:[%s279 + $0x8] sm:$0xff] %vm274, 0.0
      %282 = vst.msk [vmem:[%s279 + $0x10] sm:$0x3] %vm277, 0.0
      %s283 = scalar_lea.vmem [#allocation2], 24
      %vm284 = vcmask 24576
      %285 = vst.msk [vmem:[%s283] sm:$0x1] %vm284, 0.0
      %286 = vst.msk [vmem:[%s283 + $0x18] sm:$0x1] %vm284, 0.0
      %287 = vst.msk [vmem:[%s283 + $0x30] sm:$0x1] %vm284, 0.0
      %288 = vst.msk [vmem:[%s283 + $0x48] sm:$0x1] %vm284, 0.0
      %289 = vst.msk [vmem:[%s283 + $0x60] sm:$0x1] %vm284, 0.0
      %290 = vst.msk [vmem:[%s283 + $0x78] sm:$0x1] %vm284, 0.0
      %291 = vst.msk [vmem:[%s283 + $0x90] sm:$0x1] %vm284, 0.0
      %292 = vst.msk [vmem:[%s283 + $0xa8] sm:$0x1] %vm284, 0.0
      %293 = vst.msk [vmem:[%s283 + $0xc0] sm:$0x1] %vm284, 0.0
      %294 = vst.msk [vmem:[%s283 + $0xd8] sm:$0x1] %vm284, 0.0
      %295 = vst.msk [vmem:[%s283 + $0xf0] sm:$0x1] %vm284, 0.0
      %296 = vst.msk [vmem:[%s283 + $0x108] sm:$0x1] %vm284, 0.0
      %297 = vst.msk [vmem:[%s283 + $0x120] sm:$0x1] %vm284, 0.0
      %298 = vst.msk [vmem:[%s283 + $0x138] sm:$0x1] %vm284, 0.0
      %299 = vst.msk [vmem:[%s283 + $0x150] sm:$0x1] %vm284, 0.0
      %300 = vst.msk [vmem:[%s283 + $0x168] sm:$0x1] %vm284, 0.0
      %301 = vst.msk [vmem:[%s283 + $0x11] sm:$0x1] %vm284, 0.0
      %302 = vst.msk [vmem:[%s283 + $0x29] sm:$0x1] %vm284, 0.0
      %303 = vst.msk [vmem:[%s283 + $0x41] sm:$0x1] %vm284, 0.0
      %304 = vst.msk [vmem:[%s283 + $0x59] sm:$0x1] %vm284, 0.0
      %305 = vst.msk [vmem:[%s283 + $0x71] sm:$0x1] %vm284, 0.0
      %306 = vst.msk [vmem:[%s283 + $0x89] sm:$0x1] %vm284, 0.0
      %307 = vst.msk [vmem:[%s283 + $0xa1] sm:$0x1] %vm284, 0.0
      %308 = vst.msk [vmem:[%s283 + $0xb9] sm:$0x1] %vm284, 0.0
      %309 = vst.msk [vmem:[%s283 + $0xd1] sm:$0x1] %vm284, 0.0
      %310 = vst.msk [vmem:[%s283 + $0xe9] sm:$0x1] %vm284, 0.0
      %311 = vst.msk [vmem:[%s283 + $0x101] sm:$0x1] %vm284, 0.0
      %312 = vst.msk [vmem:[%s283 + $0x119] sm:$0x1] %vm284, 0.0
      %313 = vst.msk [vmem:[%s283 + $0x131] sm:$0x1] %vm284, 0.0
      %314 = vst.msk [vmem:[%s283 + $0x149] sm:$0x1] %vm284, 0.0
      %315 = vst.msk [vmem:[%s283 + $0x161] sm:$0x1] %vm284, 0.0
      %316 = vst.msk [vmem:[%s283 + $0x179] sm:$0x1] %vm284, 0.0
      %317 = vst.msk [vmem:[%s283 + $0x1] sm:$0xff] %vm274, %v242
      %318 = vst.msk [vmem:[%s283 + $0x9] sm:$0xff] %vm274, %v243
      %319 = vst.msk [vmem:[%s283 + $0x19] sm:$0xff] %vm274, %v244
      %320 = vst.msk [vmem:[%s283 + $0x21] sm:$0xff] %vm274, %v245
      %321 = vst.msk [vmem:[%s283 + $0x31] sm:$0xff] %vm274, %v246
      %322 = vst.msk [vmem:[%s283 + $0x39] sm:$0xff] %vm274, %v247
      %323 = vst.msk [vmem:[%s283 + $0x49] sm:$0xff] %vm274, %v248
      %324 = vst.msk [vmem:[%s283 + $0x51] sm:$0xff] %vm274, %v249
      %325 = vst.msk [vmem:[%s283 + $0x61] sm:$0xff] %vm274, %v250
      %326 = vst.msk [vmem:[%s283 + $0x69] sm:$0xff] %vm274, %v251
      %327 = vst.msk [vmem:[%s283 + $0x79] sm:$0xff] %vm274, %v252
      %328 = vst.msk [vmem:[%s283 + $0x81] sm:$0xff] %vm274, %v253
      %329 = vst.msk [vmem:[%s283 + $0x91] sm:$0xff] %vm274, %v254
      %330 = vst.msk [vmem:[%s283 + $0x99] sm:$0xff] %vm274, %v255
      %331 = vst.msk [vmem:[%s283 + $0xa9] sm:$0xff] %vm274, %v256
      %332 = vst.msk [vmem:[%s283 + $0xb1] sm:$0xff] %vm274, %v257
      %333 = vst.msk [vmem:[%s283 + $0xc1] sm:$0xff] %vm274, %v258
      %334 = vst.msk [vmem:[%s283 + $0xc9] sm:$0xff] %vm274, %v259
      %335 = vst.msk [vmem:[%s283 + $0xd9] sm:$0xff] %vm274, %v260
      %336 = vst.msk [vmem:[%s283 + $0xe1] sm:$0xff] %vm274, %v261
      %337 = vst.msk [vmem:[%s283 + $0xf1] sm:$0xff] %vm274, %v262
      %338 = vst.msk [vmem:[%s283 + $0xf9] sm:$0xff] %vm274, %v263
      %339 = vst.msk [vmem:[%s283 + $0x109] sm:$0xff] %vm274, %v264
      %340 = vst.msk [vmem:[%s283 + $0x111] sm:$0xff] %vm274, %v265
      %341 = vst.msk [vmem:[%s283 + $0x121] sm:$0xff] %vm274, %v266
      %342 = vst.msk [vmem:[%s283 + $0x129] sm:$0xff] %vm274, %v267
      %343 = vst.msk [vmem:[%s283 + $0x139] sm:$0xff] %vm274, %v268
      %344 = vst.msk [vmem:[%s283 + $0x141] sm:$0xff] %vm274, %v269
      %345 = vst.msk [vmem:[%s283 + $0x151] sm:$0xff] %vm274, %v270
      %346 = vst.msk [vmem:[%s283 + $0x159] sm:$0xff] %vm274, %v271
      %347 = vst.msk [vmem:[%s283 + $0x169] sm:$0xff] %vm274, %v272
      %348 = vst.msk [vmem:[%s283 + $0x171] sm:$0xff] %vm274, %v273
      %v349 = vld [vmem:[#allocation2] sm:$0xff]
      %v350 = vld [vmem:[#allocation2 + $0x8] sm:$0xff]
      %v351 = vld [vmem:[#allocation2 + $0x18] sm:$0xff]
      %v352 = vld [vmem:[#allocation2 + $0x20] sm:$0xff]
      %v353 = vld [vmem:[#allocation2 + $0x30] sm:$0xff]
      %v354 = vld [vmem:[#allocation2 + $0x38] sm:$0xff]
      %v355 = vld [vmem:[#allocation2 + $0x48] sm:$0xff]
      %v356 = vld [vmem:[#allocation2 + $0x50] sm:$0xff]
      %v357 = vld [vmem:[#allocation2 + $0x60] sm:$0xff]
      %v358 = vld [vmem:[#allocation2 + $0x68] sm:$0xff]
      %v359 = vld [vmem:[#allocation2 + $0x78] sm:$0xff]
      %v360 = vld [vmem:[#allocation2 + $0x80] sm:$0xff]
      %v361 = vld [vmem:[#allocation2 + $0x90] sm:$0xff]
      %v362 = vld [vmem:[#allocation2 + $0x98] sm:$0xff]
      %v363 = vld [vmem:[#allocation2 + $0xa8] sm:$0xff]
      %v364 = vld [vmem:[#allocation2 + $0xb0] sm:$0xff]
      %v365 = vld [vmem:[#allocation2 + $0xc0] sm:$0xff]
      %v366 = vld [vmem:[#allocation2 + $0xc8] sm:$0xff]
      %v367 = vld [vmem:[#allocation2 + $0xd8] sm:$0xff]
      %v368 = vld [vmem:[#allocation2 + $0xe0] sm:$0xff]
      %v369 = vld [vmem:[#allocation2 + $0xf0] sm:$0xff]
      %v370 = vld [vmem:[#allocation2 + $0xf8] sm:$0xff]
      %v371 = vld [vmem:[#allocation2 + $0x108] sm:$0xff]
      %v372 = vld [vmem:[#allocation2 + $0x110] sm:$0xff]
      %v373 = vld [vmem:[#allocation2 + $0x120] sm:$0xff]
      %v374 = vld [vmem:[#allocation2 + $0x128] sm:$0xff]
      %v375 = vld [vmem:[#allocation2 + $0x138] sm:$0xff]
      %v376 = vld [vmem:[#allocation2 + $0x140] sm:$0xff]
      %v377 = vld [vmem:[#allocation2 + $0x150] sm:$0xff]
      %v378 = vld [vmem:[#allocation2 + $0x158] sm:$0xff]
      %v379 = vld [vmem:[#allocation2 + $0x168] sm:$0xff]
      %v380 = vld [vmem:[#allocation2 + $0x170] sm:$0xff]
      %381 = vst.msk [vmem:[#allocation3] sm:$0xff] %vm274, %v349
      %382 = vst.msk [vmem:[#allocation3 + $0x8] sm:$0xff] %vm274, %v350
      %383 = vst.msk [vmem:[#allocation3 + $0x10] sm:$0xff] %vm274, %v351
      %384 = vst.msk [vmem:[#allocation3 + $0x18] sm:$0xff] %vm274, %v352
      %385 = vst.msk [vmem:[#allocation3 + $0x20] sm:$0xff] %vm274, %v353
      %386 = vst.msk [vmem:[#allocation3 + $0x28] sm:$0xff] %vm274, %v354
      %387 = vst.msk [vmem:[#allocation3 + $0x30] sm:$0xff] %vm274, %v355
      %388 = vst.msk [vmem:[#allocation3 + $0x38] sm:$0xff] %vm274, %v356
      %389 = vst.msk [vmem:[#allocation3 + $0x40] sm:$0xff] %vm274, %v357
      %390 = vst.msk [vmem:[#allocation3 + $0x48] sm:$0xff] %vm274, %v358
      %391 = vst.msk [vmem:[#allocation3 + $0x50] sm:$0xff] %vm274, %v359
      %392 = vst.msk [vmem:[#allocation3 + $0x58] sm:$0xff] %vm274, %v360
      %393 = vst.msk [vmem:[#allocation3 + $0x60] sm:$0xff] %vm274, %v361
      %394 = vst.msk [vmem:[#allocation3 + $0x68] sm:$0xff] %vm274, %v362
      %395 = vst.msk [vmem:[#allocation3 + $0x70] sm:$0xff] %vm274, %v363
      %396 = vst.msk [vmem:[#allocation3 + $0x78] sm:$0xff] %vm274, %v364
      %397 = vst.msk [vmem:[#allocation3 + $0x80] sm:$0xff] %vm274, %v365
      %398 = vst.msk [vmem:[#allocation3 + $0x88] sm:$0xff] %vm274, %v366
      %399 = vst.msk [vmem:[#allocation3 + $0x90] sm:$0xff] %vm274, %v367
      %400 = vst.msk [vmem:[#allocation3 + $0x98] sm:$0xff] %vm274, %v368
      %401 = vst.msk [vmem:[#allocation3 + $0xa0] sm:$0xff] %vm274, %v369
      %402 = vst.msk [vmem:[#allocation3 + $0xa8] sm:$0xff] %vm274, %v370
      %403 = vst.msk [vmem:[#allocation3 + $0xb0] sm:$0xff] %vm274, %v371
      %404 = vst.msk [vmem:[#allocation3 + $0xb8] sm:$0xff] %vm274, %v372
      %405 = vst.msk [vmem:[#allocation3 + $0xc0] sm:$0xff] %vm274, %v373
      %406 = vst.msk [vmem:[#allocation3 + $0xc8] sm:$0xff] %vm274, %v374
      %407 = vst.msk [vmem:[#allocation3 + $0xd0] sm:$0xff] %vm274, %v375
      %408 = vst.msk [vmem:[#allocation3 + $0xd8] sm:$0xff] %vm274, %v376
      %409 = vst.msk [vmem:[#allocation3 + $0xe0] sm:$0xff] %vm274, %v377
      %410 = vst.msk [vmem:[#allocation3 + $0xe8] sm:$0xff] %vm274, %v378
      %411 = vst.msk [vmem:[#allocation3 + $0xf0] sm:$0xff] %vm274, %v379
      %412 = vst.msk [vmem:[#allocation3 + $0xf8] sm:$0xff] %vm274, %v380
      %v413 = vld [vmem:[#allocation2 + $0x1] sm:$0xff]
      %v414 = vld [vmem:[#allocation2 + $0x9] sm:$0xff]
      %v415 = vld [vmem:[#allocation2 + $0x19] sm:$0xff]
      %v416 = vld [vmem:[#allocation2 + $0x21] sm:$0xff]
      %v417 = vld [vmem:[#allocation2 + $0x31] sm:$0xff]
      %v418 = vld [vmem:[#allocation2 + $0x39] sm:$0xff]
      %v419 = vld [vmem:[#allocation2 + $0x49] sm:$0xff]
      %v420 = vld [vmem:[#allocation2 + $0x51] sm:$0xff]
      %v421 = vld [vmem:[#allocation2 + $0x61] sm:$0xff]
      %v422 = vld [vmem:[#allocation2 + $0x69] sm:$0xff]
      %v423 = vld [vmem:[#allocation2 + $0x79] sm:$0xff]
      %v424 = vld [vmem:[#allocation2 + $0x81] sm:$0xff]
      %v425 = vld [vmem:[#allocation2 + $0x91] sm:$0xff]
      %v426 = vld [vmem:[#allocation2 + $0x99] sm:$0xff]
      %v427 = vld [vmem:[#allocation2 + $0xa9] sm:$0xff]
      %v428 = vld [vmem:[#allocation2 + $0xb1] sm:$0xff]
      %v429 = vld [vmem:[#allocation2 + $0xc1] sm:$0xff]
      %v430 = vld [vmem:[#allocation2 + $0xc9] sm:$0xff]
      %v431 = vld [vmem:[#allocation2 + $0xd9] sm:$0xff]
      %v432 = vld [vmem:[#allocation2 + $0xe1] sm:$0xff]
      %v433 = vld [vmem:[#allocation2 + $0xf1] sm:$0xff]
      %v434 = vld [vmem:[#allocation2 + $0xf9] sm:$0xff]
      %v435 = vld [vmem:[#allocation2 + $0x109] sm:$0xff]
      %v436 = vld [vmem:[#allocation2 + $0x111] sm:$0xff]
      %v437 = vld [vmem:[#allocation2 + $0x121] sm:$0xff]
      %v438 = vld [vmem:[#allocation2 + $0x129] sm:$0xff]
      %v439 = vld [vmem:[#allocation2 + $0x139] sm:$0xff]
      %v440 = vld [vmem:[#allocation2 + $0x141] sm:$0xff]
      %v441 = vld [vmem:[#allocation2 + $0x151] sm:$0xff]
      %v442 = vld [vmem:[#allocation2 + $0x159] sm:$0xff]
      %v443 = vld [vmem:[#allocation2 + $0x169] sm:$0xff]
      %v444 = vld [vmem:[#allocation2 + $0x171] sm:$0xff]
      %477 = vrot.lane.b32.xlu0 %v413, 4
      %v478 = vpop.permute.xlu0 %477
      %479 = vrot.lane.b32.xlu0 %v414, 4
      %v480 = vpop.permute.xlu0 %479
      %481 = vrot.lane.b32.xlu0 %v415, 4
      %v482 = vpop.permute.xlu0 %481
      %483 = vrot.lane.b32.xlu0 %v416, 4
      %v484 = vpop.permute.xlu0 %483
      %485 = vrot.lane.b32.xlu0 %v417, 4
      %v486 = vpop.permute.xlu0 %485
      %487 = vrot.lane.b32.xlu0 %v418, 4
      %v488 = vpop.permute.xlu0 %487
      %489 = vrot.lane.b32.xlu0 %v419, 4
      %v490 = vpop.permute.xlu0 %489
      %491 = vrot.lane.b32.xlu0 %v420, 4
      %v492 = vpop.permute.xlu0 %491
      %493 = vrot.lane.b32.xlu0 %v421, 4
      %v494 = vpop.permute.xlu0 %493
      %495 = vrot.lane.b32.xlu0 %v422, 4
      %v496 = vpop.permute.xlu0 %495
      %497 = vrot.lane.b32.xlu0 %v423, 4
      %v498 = vpop.permute.xlu0 %497
      %499 = vrot.lane.b32.xlu0 %v424, 4
      %v500 = vpop.permute.xlu0 %499
      %501 = vrot.lane.b32.xlu0 %v425, 4
      %v502 = vpop.permute.xlu0 %501
      %503 = vrot.lane.b32.xlu0 %v426, 4
      %v504 = vpop.permute.xlu0 %503
      %505 = vrot.lane.b32.xlu0 %v427, 4
      %v506 = vpop.permute.xlu0 %505
      %507 = vrot.lane.b32.xlu0 %v428, 4
      %v508 = vpop.permute.xlu0 %507
      %509 = vrot.lane.b32.xlu0 %v429, 4
      %v510 = vpop.permute.xlu0 %509
      %511 = vrot.lane.b32.xlu0 %v430, 4
      %v512 = vpop.permute.xlu0 %511
      %513 = vrot.lane.b32.xlu0 %v431, 4
      %v514 = vpop.permute.xlu0 %513
      %515 = vrot.lane.b32.xlu0 %v432, 4
      %v516 = vpop.permute.xlu0 %515
      %517 = vrot.lane.b32.xlu0 %v433, 4
      %v518 = vpop.permute.xlu0 %517
      %519 = vrot.lane.b32.xlu0 %v434, 4
      %v520 = vpop.permute.xlu0 %519
      %521 = vrot.lane.b32.xlu0 %v435, 4
      %v522 = vpop.permute.xlu0 %521
      %523 = vrot.lane.b32.xlu0 %v436, 4
      %v524 = vpop.permute.xlu0 %523
      %525 = vrot.lane.b32.xlu0 %v437, 4
      %v526 = vpop.permute.xlu0 %525
      %527 = vrot.lane.b32.xlu0 %v438, 4
      %v528 = vpop.permute.xlu0 %527
      %529 = vrot.lane.b32.xlu0 %v439, 4
      %v530 = vpop.permute.xlu0 %529
      %531 = vrot.lane.b32.xlu0 %v440, 4
      %v532 = vpop.permute.xlu0 %531
      %533 = vrot.lane.b32.xlu0 %v441, 4
      %v534 = vpop.permute.xlu0 %533
      %535 = vrot.lane.b32.xlu0 %v442, 4
      %v536 = vpop.permute.xlu0 %535
      %537 = vrot.lane.b32.xlu0 %v443, 4
      %v538 = vpop.permute.xlu0 %537
      %539 = vrot.lane.b32.xlu0 %v444, 4
      %v540 = vpop.permute.xlu0 %539
      %vm573 = vcmask 64544
      %574 = vst.msk [vmem:[#allocation3] sm:$0xff] %vm573, %v478
      %575 = vst.msk [vmem:[#allocation3 + $0x8] sm:$0xff] %vm573, %v480
      %576 = vst.msk [vmem:[#allocation3 + $0x10] sm:$0xff] %vm573, %v482
      %577 = vst.msk [vmem:[#allocation3 + $0x18] sm:$0xff] %vm573, %v484
      %578 = vst.msk [vmem:[#allocation3 + $0x20] sm:$0xff] %vm573, %v486
      %579 = vst.msk [vmem:[#allocation3 + $0x28] sm:$0xff] %vm573, %v488
      %580 = vst.msk [vmem:[#allocation3 + $0x30] sm:$0xff] %vm573, %v490
      %581 = vst.msk [vmem:[#allocation3 + $0x38] sm:$0xff] %vm573, %v492
      %582 = vst.msk [vmem:[#allocation3 + $0x40] sm:$0xff] %vm573, %v494
      %583 = vst.msk [vmem:[#allocation3 + $0x48] sm:$0xff] %vm573, %v496
      %584 = vst.msk [vmem:[#allocation3 + $0x50] sm:$0xff] %vm573, %v498
      %585 = vst.msk [vmem:[#allocation3 + $0x58] sm:$0xff] %vm573, %v500
      %586 = vst.msk [vmem:[#allocation3 + $0x60] sm:$0xff] %vm573, %v502
      %587 = vst.msk [vmem:[#allocation3 + $0x68] sm:$0xff] %vm573, %v504
      %588 = vst.msk [vmem:[#allocation3 + $0x70] sm:$0xff] %vm573, %v506
      %589 = vst.msk [vmem:[#allocation3 + $0x78] sm:$0xff] %vm573, %v508
      %590 = vst.msk [vmem:[#allocation3 + $0x80] sm:$0xff] %vm573, %v510
      %591 = vst.msk [vmem:[#allocation3 + $0x88] sm:$0xff] %vm573, %v512
      %592 = vst.msk [vmem:[#allocation3 + $0x90] sm:$0xff] %vm573, %v514
      %593 = vst.msk [vmem:[#allocation3 + $0x98] sm:$0xff] %vm573, %v516
      %594 = vst.msk [vmem:[#allocation3 + $0xa0] sm:$0xff] %vm573, %v518
      %595 = vst.msk [vmem:[#allocation3 + $0xa8] sm:$0xff] %vm573, %v520
      %596 = vst.msk [vmem:[#allocation3 + $0xb0] sm:$0xff] %vm573, %v522
      %597 = vst.msk [vmem:[#allocation3 + $0xb8] sm:$0xff] %vm573, %v524
      %598 = vst.msk [vmem:[#allocation3 + $0xc0] sm:$0xff] %vm573, %v526
      %599 = vst.msk [vmem:[#allocation3 + $0xc8] sm:$0xff] %vm573, %v528
      %600 = vst.msk [vmem:[#allocation3 + $0xd0] sm:$0xff] %vm573, %v530
      %601 = vst.msk [vmem:[#allocation3 + $0xd8] sm:$0xff] %vm573, %v532
      %602 = vst.msk [vmem:[#allocation3 + $0xe0] sm:$0xff] %vm573, %v534
      %603 = vst.msk [vmem:[#allocation3 + $0xe8] sm:$0xff] %vm573, %v536
      %604 = vst.msk [vmem:[#allocation3 + $0xf0] sm:$0xff] %vm573, %v538
      %605 = vst.msk [vmem:[#allocation3 + $0xf8] sm:$0xff] %vm573, %v540
      %v606 = vld [vmem:[#allocation2 + $0x2] sm:$0xff]
      %v607 = vld [vmem:[#allocation2 + $0xa] sm:$0xff]
      %v608 = vld [vmem:[#allocation2 + $0x1a] sm:$0xff]
      %v609 = vld [vmem:[#allocation2 + $0x22] sm:$0xff]
      %v610 = vld [vmem:[#allocation2 + $0x32] sm:$0xff]
      %v611 = vld [vmem:[#allocation2 + $0x3a] sm:$0xff]
      %v612 = vld [vmem:[#allocation2 + $0x4a] sm:$0xff]
      %v613 = vld [vmem:[#allocation2 + $0x52] sm:$0xff]
      %v614 = vld [vmem:[#allocation2 + $0x62] sm:$0xff]
      %v615 = vld [vmem:[#allocation2 + $0x6a] sm:$0xff]
      %v616 = vld [vmem:[#allocation2 + $0x7a] sm:$0xff]
      %v617 = vld [vmem:[#allocation2 + $0x82] sm:$0xff]
      %v618 = vld [vmem:[#allocation2 + $0x92] sm:$0xff]
      %v619 = vld [vmem:[#allocation2 + $0x9a] sm:$0xff]
      %v620 = vld [vmem:[#allocation2 + $0xaa] sm:$0xff]
      %v621 = vld [vmem:[#allocation2 + $0xb2] sm:$0xff]
      %v622 = vld [vmem:[#allocation2 + $0xc2] sm:$0xff]
      %v623 = vld [vmem:[#allocation2 + $0xca] sm:$0xff]
      %v624 = vld [vmem:[#allocation2 + $0xda] sm:$0xff]
      %v625 = vld [vmem:[#allocation2 + $0xe2] sm:$0xff]
      %v626 = vld [vmem:[#allocation2 + $0xf2] sm:$0xff]
      %v627 = vld [vmem:[#allocation2 + $0xfa] sm:$0xff]
      %v628 = vld [vmem:[#allocation2 + $0x10a] sm:$0xff]
      %v629 = vld [vmem:[#allocation2 + $0x112] sm:$0xff]
      %v630 = vld [vmem:[#allocation2 + $0x122] sm:$0xff]
      %v631 = vld [vmem:[#allocation2 + $0x12a] sm:$0xff]
      %v632 = vld [vmem:[#allocation2 + $0x13a] sm:$0xff]
      %v633 = vld [vmem:[#allocation2 + $0x142] sm:$0xff]
      %v634 = vld [vmem:[#allocation2 + $0x152] sm:$0xff]
      %v635 = vld [vmem:[#allocation2 + $0x15a] sm:$0xff]
      %v636 = vld [vmem:[#allocation2 + $0x16a] sm:$0xff]
      %v637 = vld [vmem:[#allocation2 + $0x172] sm:$0xff]
      %670 = vrot.lane.b32.xlu0 %v606, 8
      %v671 = vpop.permute.xlu0 %670
      %672 = vrot.lane.b32.xlu0 %v607, 8
      %v673 = vpop.permute.xlu0 %672
      %674 = vrot.lane.b32.xlu0 %v608, 8
      %v675 = vpop.permute.xlu0 %674
      %676 = vrot.lane.b32.xlu0 %v609, 8
      %v677 = vpop.permute.xlu0 %676
      %678 = vrot.lane.b32.xlu0 %v610, 8
      %v679 = vpop.permute.xlu0 %678
      %680 = vrot.lane.b32.xlu0 %v611, 8
      %v681 = vpop.permute.xlu0 %680
      %682 = vrot.lane.b32.xlu0 %v612, 8
      %v683 = vpop.permute.xlu0 %682
      %684 = vrot.lane.b32.xlu0 %v613, 8
      %v685 = vpop.permute.xlu0 %684
      %686 = vrot.lane.b32.xlu0 %v614, 8
      %v687 = vpop.permute.xlu0 %686
      %688 = vrot.lane.b32.xlu0 %v615, 8
      %v689 = vpop.permute.xlu0 %688
      %690 = vrot.lane.b32.xlu0 %v616, 8
      %v691 = vpop.permute.xlu0 %690
      %692 = vrot.lane.b32.xlu0 %v617, 8
      %v693 = vpop.permute.xlu0 %692
      %694 = vrot.lane.b32.xlu0 %v618, 8
      %v695 = vpop.permute.xlu0 %694
      %696 = vrot.lane.b32.xlu0 %v619, 8
      %v697 = vpop.permute.xlu0 %696
      %698 = vrot.lane.b32.xlu0 %v620, 8
      %v699 = vpop.permute.xlu0 %698
      %700 = vrot.lane.b32.xlu0 %v621, 8
      %v701 = vpop.permute.xlu0 %700
      %702 = vrot.lane.b32.xlu0 %v622, 8
      %v703 = vpop.permute.xlu0 %702
      %704 = vrot.lane.b32.xlu0 %v623, 8
      %v705 = vpop.permute.xlu0 %704
      %706 = vrot.lane.b32.xlu0 %v624, 8
      %v707 = vpop.permute.xlu0 %706
      %708 = vrot.lane.b32.xlu0 %v625, 8
      %v709 = vpop.permute.xlu0 %708
      %710 = vrot.lane.b32.xlu0 %v626, 8
      %v711 = vpop.permute.xlu0 %710
      %712 = vrot.lane.b32.xlu0 %v627, 8
      %v713 = vpop.permute.xlu0 %712
      %714 = vrot.lane.b32.xlu0 %v628, 8
      %v715 = vpop.permute.xlu0 %714
      %716 = vrot.lane.b32.xlu0 %v629, 8
      %v717 = vpop.permute.xlu0 %716
      %718 = vrot.lane.b32.xlu0 %v630, 8
      %v719 = vpop.permute.xlu0 %718
      %720 = vrot.lane.b32.xlu0 %v631, 8
      %v721 = vpop.permute.xlu0 %720
      %722 = vrot.lane.b32.xlu0 %v632, 8
      %v723 = vpop.permute.xlu0 %722
      %724 = vrot.lane.b32.xlu0 %v633, 8
      %v725 = vpop.permute.xlu0 %724
      %726 = vrot.lane.b32.xlu0 %v634, 8
      %v727 = vpop.permute.xlu0 %726
      %728 = vrot.lane.b32.xlu0 %v635, 8
      %v729 = vpop.permute.xlu0 %728
      %730 = vrot.lane.b32.xlu0 %v636, 8
      %v731 = vpop.permute.xlu0 %730
      %732 = vrot.lane.b32.xlu0 %v637, 8
      %v733 = vpop.permute.xlu0 %732
      %vm766 = vcmask 97344
      %767 = vst.msk [vmem:[#allocation3] sm:$0xff] %vm766, %v671
      %768 = vst.msk [vmem:[#allocation3 + $0x8] sm:$0xff] %vm766, %v673
      %769 = vst.msk [vmem:[#allocation3 + $0x10] sm:$0xff] %vm766, %v675
      %770 = vst.msk [vmem:[#allocation3 + $0x18] sm:$0xff] %vm766, %v677
      %771 = vst.msk [vmem:[#allocation3 + $0x20] sm:$0xff] %vm766, %v679
      %772 = vst.msk [vmem:[#allocation3 + $0x28] sm:$0xff] %vm766, %v681
      %773 = vst.msk [vmem:[#allocation3 + $0x30] sm:$0xff] %vm766, %v683
      %774 = vst.msk [vmem:[#allocation3 + $0x38] sm:$0xff] %vm766, %v685
      %775 = vst.msk [vmem:[#allocation3 + $0x40] sm:$0xff] %vm766, %v687
      %776 = vst.msk [vmem:[#allocation3 + $0x48] sm:$0xff] %vm766, %v689
      %777 = vst.msk [vmem:[#allocation3 + $0x50] sm:$0xff] %vm766, %v691
      %778 = vst.msk [vmem:[#allocation3 + $0x58] sm:$0xff] %vm766, %v693
      %779 = vst.msk [vmem:[#allocation3 + $0x60] sm:$0xff] %vm766, %v695
      %780 = vst.msk [vmem:[#allocation3 + $0x68] sm:$0xff] %vm766, %v697
      %781 = vst.msk [vmem:[#allocation3 + $0x70] sm:$0xff] %vm766, %v699
      %782 = vst.msk [vmem:[#allocation3 + $0x78] sm:$0xff] %vm766, %v701
      %783 = vst.msk [vmem:[#allocation3 + $0x80] sm:$0xff] %vm766, %v703
      %784 = vst.msk [vmem:[#allocation3 + $0x88] sm:$0xff] %vm766, %v705
      %785 = vst.msk [vmem:[#allocation3 + $0x90] sm:$0xff] %vm766, %v707
      %786 = vst.msk [vmem:[#allocation3 + $0x98] sm:$0xff] %vm766, %v709
      %787 = vst.msk [vmem:[#allocation3 + $0xa0] sm:$0xff] %vm766, %v711
      %788 = vst.msk [vmem:[#allocation3 + $0xa8] sm:$0xff] %vm766, %v713
      %789 = vst.msk [vmem:[#allocation3 + $0xb0] sm:$0xff] %vm766, %v715
      %790 = vst.msk [vmem:[#allocation3 + $0xb8] sm:$0xff] %vm766, %v717
      %791 = vst.msk [vmem:[#allocation3 + $0xc0] sm:$0xff] %vm766, %v719
      %792 = vst.msk [vmem:[#allocation3 + $0xc8] sm:$0xff] %vm766, %v721
      %793 = vst.msk [vmem:[#allocation3 + $0xd0] sm:$0xff] %vm766, %v723
      %794 = vst.msk [vmem:[#allocation3 + $0xd8] sm:$0xff] %vm766, %v725
      %795 = vst.msk [vmem:[#allocation3 + $0xe0] sm:$0xff] %vm766, %v727
      %796 = vst.msk [vmem:[#allocation3 + $0xe8] sm:$0xff] %vm766, %v729
      %797 = vst.msk [vmem:[#allocation3 + $0xf0] sm:$0xff] %vm766, %v731
      %798 = vst.msk [vmem:[#allocation3 + $0xf8] sm:$0xff] %vm766, %v733
      %v799 = vld [vmem:[%s283] sm:$0xff]
      %v800 = vld [vmem:[%s283 + $0x8] sm:$0xff]
      %v801 = vld [vmem:[%s283 + $0x18] sm:$0xff]
      %v802 = vld [vmem:[%s283 + $0x20] sm:$0xff]
      %v803 = vld [vmem:[%s283 + $0x30] sm:$0xff]
      %v804 = vld [vmem:[%s283 + $0x38] sm:$0xff]
      %v805 = vld [vmem:[%s283 + $0x48] sm:$0xff]
      %v806 = vld [vmem:[%s283 + $0x50] sm:$0xff]
      %v807 = vld [vmem:[%s283 + $0x60] sm:$0xff]
      %v808 = vld [vmem:[%s283 + $0x68] sm:$0xff]
      %v809 = vld [vmem:[%s283 + $0x78] sm:$0xff]
      %v810 = vld [vmem:[%s283 + $0x80] sm:$0xff]
      %v811 = vld [vmem:[%s283 + $0x90] sm:$0xff]
      %v812 = vld [vmem:[%s283 + $0x98] sm:$0xff]
      %v813 = vld [vmem:[%s283 + $0xa8] sm:$0xff]
      %v814 = vld [vmem:[%s283 + $0xb0] sm:$0xff]
      %v815 = vld [vmem:[%s283 + $0xc0] sm:$0xff]
      %v816 = vld [vmem:[%s283 + $0xc8] sm:$0xff]
      %v817 = vld [vmem:[%s283 + $0xd8] sm:$0xff]
      %v818 = vld [vmem:[%s283 + $0xe0] sm:$0xff]
      %v819 = vld [vmem:[%s283 + $0xf0] sm:$0xff]
      %v820 = vld [vmem:[%s283 + $0xf8] sm:$0xff]
      %v821 = vld [vmem:[%s283 + $0x108] sm:$0xff]
      %v822 = vld [vmem:[%s283 + $0x110] sm:$0xff]
      %v823 = vld [vmem:[%s283 + $0x120] sm:$0xff]
      %v824 = vld [vmem:[%s283 + $0x128] sm:$0xff]
      %v825 = vld [vmem:[%s283 + $0x138] sm:$0xff]
      %v826 = vld [vmem:[%s283 + $0x140] sm:$0xff]
      %v827 = vld [vmem:[%s283 + $0x150] sm:$0xff]
      %v828 = vld [vmem:[%s283 + $0x158] sm:$0xff]
      %v829 = vld [vmem:[%s283 + $0x168] sm:$0xff]
      %v830 = vld [vmem:[%s283 + $0x170] sm:$0xff]
      %863 = vrot.lane.b32.xlu0 %v799, 12
      %v864 = vpop.permute.xlu0 %863
      %865 = vrot.lane.b32.xlu0 %v800, 12
      %v866 = vpop.permute.xlu0 %865
      %867 = vrot.lane.b32.xlu0 %v801, 12
      %v868 = vpop.permute.xlu0 %867
      %869 = vrot.lane.b32.xlu0 %v802, 12
      %v870 = vpop.permute.xlu0 %869
      %871 = vrot.lane.b32.xlu0 %v803, 12
      %v872 = vpop.permute.xlu0 %871
      %873 = vrot.lane.b32.xlu0 %v804, 12
      %v874 = vpop.permute.xlu0 %873
      %875 = vrot.lane.b32.xlu0 %v805, 12
      %v876 = vpop.permute.xlu0 %875
      %877 = vrot.lane.b32.xlu0 %v806, 12
      %v878 = vpop.permute.xlu0 %877
      %879 = vrot.lane.b32.xlu0 %v807, 12
      %v880 = vpop.permute.xlu0 %879
      %881 = vrot.lane.b32.xlu0 %v808, 12
      %v882 = vpop.permute.xlu0 %881
      %883 = vrot.lane.b32.xlu0 %v809, 12
      %v884 = vpop.permute.xlu0 %883
      %885 = vrot.lane.b32.xlu0 %v810, 12
      %v886 = vpop.permute.xlu0 %885
      %887 = vrot.lane.b32.xlu0 %v811, 12
      %v888 = vpop.permute.xlu0 %887
      %889 = vrot.lane.b32.xlu0 %v812, 12
      %v890 = vpop.permute.xlu0 %889
      %891 = vrot.lane.b32.xlu0 %v813, 12
      %v892 = vpop.permute.xlu0 %891
      %893 = vrot.lane.b32.xlu0 %v814, 12
      %v894 = vpop.permute.xlu0 %893
      %895 = vrot.lane.b32.xlu0 %v815, 12
      %v896 = vpop.permute.xlu0 %895
      %897 = vrot.lane.b32.xlu0 %v816, 12
      %v898 = vpop.permute.xlu0 %897
      %899 = vrot.lane.b32.xlu0 %v817, 12
      %v900 = vpop.permute.xlu0 %899
      %901 = vrot.lane.b32.xlu0 %v818, 12
      %v902 = vpop.permute.xlu0 %901
      %903 = vrot.lane.b32.xlu0 %v819, 12
      %v904 = vpop.permute.xlu0 %903
      %905 = vrot.lane.b32.xlu0 %v820, 12
      %v906 = vpop.permute.xlu0 %905
      %907 = vrot.lane.b32.xlu0 %v821, 12
      %v908 = vpop.permute.xlu0 %907
      %909 = vrot.lane.b32.xlu0 %v822, 12
      %v910 = vpop.permute.xlu0 %909
      %911 = vrot.lane.b32.xlu0 %v823, 12
      %v912 = vpop.permute.xlu0 %911
      %913 = vrot.lane.b32.xlu0 %v824, 12
      %v914 = vpop.permute.xlu0 %913
      %915 = vrot.lane.b32.xlu0 %v825, 12
      %v916 = vpop.permute.xlu0 %915
      %917 = vrot.lane.b32.xlu0 %v826, 12
      %v918 = vpop.permute.xlu0 %917
      %919 = vrot.lane.b32.xlu0 %v827, 12
      %v920 = vpop.permute.xlu0 %919
      %921 = vrot.lane.b32.xlu0 %v828, 12
      %v922 = vpop.permute.xlu0 %921
      %923 = vrot.lane.b32.xlu0 %v829, 12
      %v924 = vpop.permute.xlu0 %923
      %925 = vrot.lane.b32.xlu0 %v830, 12
      %v926 = vpop.permute.xlu0 %925
      %vm959 = vcmask 130144
      %960 = vst.msk [vmem:[#allocation3] sm:$0xff] %vm959, %v864
      %961 = vst.msk [vmem:[#allocation3 + $0x8] sm:$0xff] %vm959, %v866
      %962 = vst.msk [vmem:[#allocation3 + $0x10] sm:$0xff] %vm959, %v868
      %963 = vst.msk [vmem:[#allocation3 + $0x18] sm:$0xff] %vm959, %v870
      %964 = vst.msk [vmem:[#allocation3 + $0x20] sm:$0xff] %vm959, %v872
      %965 = vst.msk [vmem:[#allocation3 + $0x28] sm:$0xff] %vm959, %v874
      %966 = vst.msk [vmem:[#allocation3 + $0x30] sm:$0xff] %vm959, %v876
      %967 = vst.msk [vmem:[#allocation3 + $0x38] sm:$0xff] %vm959, %v878
      %968 = vst.msk [vmem:[#allocation3 + $0x40] sm:$0xff] %vm959, %v880
      %969 = vst.msk [vmem:[#allocation3 + $0x48] sm:$0xff] %vm959, %v882
      %970 = vst.msk [vmem:[#allocation3 + $0x50] sm:$0xff] %vm959, %v884
      %971 = vst.msk [vmem:[#allocation3 + $0x58] sm:$0xff] %vm959, %v886
      %972 = vst.msk [vmem:[#allocation3 + $0x60] sm:$0xff] %vm959, %v888
      %973 = vst.msk [vmem:[#allocation3 + $0x68] sm:$0xff] %vm959, %v890
      %974 = vst.msk [vmem:[#allocation3 + $0x70] sm:$0xff] %vm959, %v892
      %975 = vst.msk [vmem:[#allocation3 + $0x78] sm:$0xff] %vm959, %v894
      %976 = vst.msk [vmem:[#allocation3 + $0x80] sm:$0xff] %vm959, %v896
      %977 = vst.msk [vmem:[#allocation3 + $0x88] sm:$0xff] %vm959, %v898
      %978 = vst.msk [vmem:[#allocation3 + $0x90] sm:$0xff] %vm959, %v900
      %979 = vst.msk [vmem:[#allocation3 + $0x98] sm:$0xff] %vm959, %v902
      %980 = vst.msk [vmem:[#allocation3 + $0xa0] sm:$0xff] %vm959, %v904
      %981 = vst.msk [vmem:[#allocation3 + $0xa8] sm:$0xff] %vm959, %v906
      %982 = vst.msk [vmem:[#allocation3 + $0xb0] sm:$0xff] %vm959, %v908
      %983 = vst.msk [vmem:[#allocation3 + $0xb8] sm:$0xff] %vm959, %v910
      %984 = vst.msk [vmem:[#allocation3 + $0xc0] sm:$0xff] %vm959, %v912
      %985 = vst.msk [vmem:[#allocation3 + $0xc8] sm:$0xff] %vm959, %v914
      %986 = vst.msk [vmem:[#allocation3 + $0xd0] sm:$0xff] %vm959, %v916
      %987 = vst.msk [vmem:[#allocation3 + $0xd8] sm:$0xff] %vm959, %v918
      %988 = vst.msk [vmem:[#allocation3 + $0xe0] sm:$0xff] %vm959, %v920
      %989 = vst.msk [vmem:[#allocation3 + $0xe8] sm:$0xff] %vm959, %v922
      %990 = vst.msk [vmem:[#allocation3 + $0xf0] sm:$0xff] %vm959, %v924
      %991 = vst.msk [vmem:[#allocation3 + $0xf8] sm:$0xff] %vm959, %v926
      %v992 = vld [vmem:[%s283 + $0x1] sm:$0xff]
      %v993 = vld [vmem:[%s283 + $0x9] sm:$0xff]
      %v994 = vld [vmem:[%s283 + $0x19] sm:$0xff]
      %v995 = vld [vmem:[%s283 + $0x21] sm:$0xff]
      %v996 = vld [vmem:[%s283 + $0x31] sm:$0xff]
      %v997 = vld [vmem:[%s283 + $0x39] sm:$0xff]
      %v998 = vld [vmem:[%s283 + $0x49] sm:$0xff]
      %v999 = vld [vmem:[%s283 + $0x51] sm:$0xff]
      %v1000 = vld [vmem:[%s283 + $0x61] sm:$0xff]
      %v1001 = vld [vmem:[%s283 + $0x69] sm:$0xff]
      %v1002 = vld [vmem:[%s283 + $0x79] sm:$0xff]
      %v1003 = vld [vmem:[%s283 + $0x81] sm:$0xff]
      %v1004 = vld [vmem:[%s283 + $0x91] sm:$0xff]
      %v1005 = vld [vmem:[%s283 + $0x99] sm:$0xff]
      %v1006 = vld [vmem:[%s283 + $0xa9] sm:$0xff]
      %v1007 = vld [vmem:[%s283 + $0xb1] sm:$0xff]
      %v1008 = vld [vmem:[%s283 + $0xc1] sm:$0xff]
      %v1009 = vld [vmem:[%s283 + $0xc9] sm:$0xff]
      %v1010 = vld [vmem:[%s283 + $0xd9] sm:$0xff]
      %v1011 = vld [vmem:[%s283 + $0xe1] sm:$0xff]
      %v1012 = vld [vmem:[%s283 + $0xf1] sm:$0xff]
      %v1013 = vld [vmem:[%s283 + $0xf9] sm:$0xff]
      %v1014 = vld [vmem:[%s283 + $0x109] sm:$0xff]
      %v1015 = vld [vmem:[%s283 + $0x111] sm:$0xff]
      %v1016 = vld [vmem:[%s283 + $0x121] sm:$0xff]
      %v1017 = vld [vmem:[%s283 + $0x129] sm:$0xff]
      %v1018 = vld [vmem:[%s283 + $0x139] sm:$0xff]
      %v1019 = vld [vmem:[%s283 + $0x141] sm:$0xff]
      %v1020 = vld [vmem:[%s283 + $0x151] sm:$0xff]
      %v1021 = vld [vmem:[%s283 + $0x159] sm:$0xff]
      %v1022 = vld [vmem:[%s283 + $0x169] sm:$0xff]
      %v1023 = vld [vmem:[%s283 + $0x171] sm:$0xff]
      %1056 = vrot.lane.b32.xlu0 %v992, 16
      %v1057 = vpop.permute.xlu0 %1056
      %1058 = vrot.lane.b32.xlu0 %v993, 16
      %v1059 = vpop.permute.xlu0 %1058
      %1060 = vrot.lane.b32.xlu0 %v994, 16
      %v1061 = vpop.permute.xlu0 %1060
      %1062 = vrot.lane.b32.xlu0 %v995, 16
      %v1063 = vpop.permute.xlu0 %1062
      %1064 = vrot.lane.b32.xlu0 %v996, 16
      %v1065 = vpop.permute.xlu0 %1064
      %1066 = vrot.lane.b32.xlu0 %v997, 16
      %v1067 = vpop.permute.xlu0 %1066
      %1068 = vrot.lane.b32.xlu0 %v998, 16
      %v1069 = vpop.permute.xlu0 %1068
      %1070 = vrot.lane.b32.xlu0 %v999, 16
      %v1071 = vpop.permute.xlu0 %1070
      %1072 = vrot.lane.b32.xlu0 %v1000, 16
      %v1073 = vpop.permute.xlu0 %1072
      %1074 = vrot.lane.b32.xlu0 %v1001, 16
      %v1075 = vpop.permute.xlu0 %1074
      %1076 = vrot.lane.b32.xlu0 %v1002, 16
      %v1077 = vpop.permute.xlu0 %1076
      %1078 = vrot.lane.b32.xlu0 %v1003, 16
      %v1079 = vpop.permute.xlu0 %1078
      %1080 = vrot.lane.b32.xlu0 %v1004, 16
      %v1081 = vpop.permute.xlu0 %1080
      %1082 = vrot.lane.b32.xlu0 %v1005, 16
      %v1083 = vpop.permute.xlu0 %1082
      %1084 = vrot.lane.b32.xlu0 %v1006, 16
      %v1085 = vpop.permute.xlu0 %1084
      %1086 = vrot.lane.b32.xlu0 %v1007, 16
      %v1087 = vpop.permute.xlu0 %1086
      %1088 = vrot.lane.b32.xlu0 %v1008, 16
      %v1089 = vpop.permute.xlu0 %1088
      %1090 = vrot.lane.b32.xlu0 %v1009, 16
      %v1091 = vpop.permute.xlu0 %1090
      %1092 = vrot.lane.b32.xlu0 %v1010, 16
      %v1093 = vpop.permute.xlu0 %1092
      %1094 = vrot.lane.b32.xlu0 %v1011, 16
      %v1095 = vpop.permute.xlu0 %1094
      %1096 = vrot.lane.b32.xlu0 %v1012, 16
      %v1097 = vpop.permute.xlu0 %1096
      %1098 = vrot.lane.b32.xlu0 %v1013, 16
      %v1099 = vpop.permute.xlu0 %1098
      %1100 = vrot.lane.b32.xlu0 %v1014, 16
      %v1101 = vpop.permute.xlu0 %1100
      %1102 = vrot.lane.b32.xlu0 %v1015, 16
      %v1103 = vpop.permute.xlu0 %1102
      %1104 = vrot.lane.b32.xlu0 %v1016, 16
      %v1105 = vpop.permute.xlu0 %1104
      %1106 = vrot.lane.b32.xlu0 %v1017, 16
      %v1107 = vpop.permute.xlu0 %1106
      %1108 = vrot.lane.b32.xlu0 %v1018, 16
      %v1109 = vpop.permute.xlu0 %1108
      %1110 = vrot.lane.b32.xlu0 %v1019, 16
      %v1111 = vpop.permute.xlu0 %1110
      %1112 = vrot.lane.b32.xlu0 %v1020, 16
      %v1113 = vpop.permute.xlu0 %1112
      %1114 = vrot.lane.b32.xlu0 %v1021, 16
      %v1115 = vpop.permute.xlu0 %1114
      %1116 = vrot.lane.b32.xlu0 %v1022, 16
      %v1117 = vpop.permute.xlu0 %1116
      %1118 = vrot.lane.b32.xlu0 %v1023, 16
      %v1119 = vpop.permute.xlu0 %1118
      %vm1152 = vcmask 162944
      %1153 = vst.msk [vmem:[#allocation3] sm:$0xff] %vm1152, %v1057
      %1154 = vst.msk [vmem:[#allocation3 + $0x8] sm:$0xff] %vm1152, %v1059
      %1155 = vst.msk [vmem:[#allocation3 + $0x10] sm:$0xff] %vm1152, %v1061
      %1156 = vst.msk [vmem:[#allocation3 + $0x18] sm:$0xff] %vm1152, %v1063
      %1157 = vst.msk [vmem:[#allocation3 + $0x20] sm:$0xff] %vm1152, %v1065
      %1158 = vst.msk [vmem:[#allocation3 + $0x28] sm:$0xff] %vm1152, %v1067
      %1159 = vst.msk [vmem:[#allocation3 + $0x30] sm:$0xff] %vm1152, %v1069
      %1160 = vst.msk [vmem:[#allocation3 + $0x38] sm:$0xff] %vm1152, %v1071
      %1161 = vst.msk [vmem:[#allocation3 + $0x40] sm:$0xff] %vm1152, %v1073
      %1162 = vst.msk [vmem:[#allocation3 + $0x48] sm:$0xff] %vm1152, %v1075
      %1163 = vst.msk [vmem:[#allocation3 + $0x50] sm:$0xff] %vm1152, %v1077
      %1164 = vst.msk [vmem:[#allocation3 + $0x58] sm:$0xff] %vm1152, %v1079
      %1165 = vst.msk [vmem:[#allocation3 + $0x60] sm:$0xff] %vm1152, %v1081
      %1166 = vst.msk [vmem:[#allocation3 + $0x68] sm:$0xff] %vm1152, %v1083
      %1167 = vst.msk [vmem:[#allocation3 + $0x70] sm:$0xff] %vm1152, %v1085
      %1168 = vst.msk [vmem:[#allocation3 + $0x78] sm:$0xff] %vm1152, %v1087
      %1169 = vst.msk [vmem:[#allocation3 + $0x80] sm:$0xff] %vm1152, %v1089
      %1170 = vst.msk [vmem:[#allocation3 + $0x88] sm:$0xff] %vm1152, %v1091
      %1171 = vst.msk [vmem:[#allocation3 + $0x90] sm:$0xff] %vm1152, %v1093
      %1172 = vst.msk [vmem:[#allocation3 + $0x98] sm:$0xff] %vm1152, %v1095
      %1173 = vst.msk [vmem:[#allocation3 + $0xa0] sm:$0xff] %vm1152, %v1097
      %1174 = vst.msk [vmem:[#allocation3 + $0xa8] sm:$0xff] %vm1152, %v1099
      %1175 = vst.msk [vmem:[#allocation3 + $0xb0] sm:$0xff] %vm1152, %v1101
      %1176 = vst.msk [vmem:[#allocation3 + $0xb8] sm:$0xff] %vm1152, %v1103
      %1177 = vst.msk [vmem:[#allocation3 + $0xc0] sm:$0xff] %vm1152, %v1105
      %1178 = vst.msk [vmem:[#allocation3 + $0xc8] sm:$0xff] %vm1152, %v1107
      %1179 = vst.msk [vmem:[#allocation3 + $0xd0] sm:$0xff] %vm1152, %v1109
      %1180 = vst.msk [vmem:[#allocation3 + $0xd8] sm:$0xff] %vm1152, %v1111
      %1181 = vst.msk [vmem:[#allocation3 + $0xe0] sm:$0xff] %vm1152, %v1113
      %1182 = vst.msk [vmem:[#allocation3 + $0xe8] sm:$0xff] %vm1152, %v1115
      %1183 = vst.msk [vmem:[#allocation3 + $0xf0] sm:$0xff] %vm1152, %v1117
      %1184 = vst.msk [vmem:[#allocation3 + $0xf8] sm:$0xff] %vm1152, %v1119
      %v1185 = vld [vmem:[%s283 + $0x2] sm:$0xff]
      %v1186 = vld [vmem:[%s283 + $0xa] sm:$0xff]
      %v1187 = vld [vmem:[%s283 + $0x1a] sm:$0xff]
      %v1188 = vld [vmem:[%s283 + $0x22] sm:$0xff]
      %v1189 = vld [vmem:[%s283 + $0x32] sm:$0xff]
      %v1190 = vld [vmem:[%s283 + $0x3a] sm:$0xff]
      %v1191 = vld [vmem:[%s283 + $0x4a] sm:$0xff]
      %v1192 = vld [vmem:[%s283 + $0x52] sm:$0xff]
      %v1193 = vld [vmem:[%s283 + $0x62] sm:$0xff]
      %v1194 = vld [vmem:[%s283 + $0x6a] sm:$0xff]
      %v1195 = vld [vmem:[%s283 + $0x7a] sm:$0xff]
      %v1196 = vld [vmem:[%s283 + $0x82] sm:$0xff]
      %v1197 = vld [vmem:[%s283 + $0x92] sm:$0xff]
      %v1198 = vld [vmem:[%s283 + $0x9a] sm:$0xff]
      %v1199 = vld [vmem:[%s283 + $0xaa] sm:$0xff]
      %v1200 = vld [vmem:[%s283 + $0xb2] sm:$0xff]
      %v1201 = vld [vmem:[%s283 + $0xc2] sm:$0xff]
      %v1202 = vld [vmem:[%s283 + $0xca] sm:$0xff]
      %v1203 = vld [vmem:[%s283 + $0xda] sm:$0xff]
      %v1204 = vld [vmem:[%s283 + $0xe2] sm:$0xff]
      %v1205 = vld [vmem:[%s283 + $0xf2] sm:$0xff]
      %v1206 = vld [vmem:[%s283 + $0xfa] sm:$0xff]
      %v1207 = vld [vmem:[%s283 + $0x10a] sm:$0xff]
      %v1208 = vld [vmem:[%s283 + $0x112] sm:$0xff]
      %v1209 = vld [vmem:[%s283 + $0x122] sm:$0xff]
      %v1210 = vld [vmem:[%s283 + $0x12a] sm:$0xff]
      %v1211 = vld [vmem:[%s283 + $0x13a] sm:$0xff]
      %v1212 = vld [vmem:[%s283 + $0x142] sm:$0xff]
      %v1213 = vld [vmem:[%s283 + $0x152] sm:$0xff]
      %v1214 = vld [vmem:[%s283 + $0x15a] sm:$0xff]
      %v1215 = vld [vmem:[%s283 + $0x16a] sm:$0xff]
      %v1216 = vld [vmem:[%s283 + $0x172] sm:$0xff]
      %1249 = vrot.lane.b32.xlu0 %v1185, 20
      %v1250 = vpop.permute.xlu0 %1249
      %1251 = vrot.lane.b32.xlu0 %v1186, 20
      %v1252 = vpop.permute.xlu0 %1251
      %1253 = vrot.lane.b32.xlu0 %v1187, 20
      %v1254 = vpop.permute.xlu0 %1253
      %1255 = vrot.lane.b32.xlu0 %v1188, 20
      %v1256 = vpop.permute.xlu0 %1255
      %1257 = vrot.lane.b32.xlu0 %v1189, 20
      %v1258 = vpop.permute.xlu0 %1257
      %1259 = vrot.lane.b32.xlu0 %v1190, 20
      %v1260 = vpop.permute.xlu0 %1259
      %1261 = vrot.lane.b32.xlu0 %v1191, 20
      %v1262 = vpop.permute.xlu0 %1261
      %1263 = vrot.lane.b32.xlu0 %v1192, 20
      %v1264 = vpop.permute.xlu0 %1263
      %1265 = vrot.lane.b32.xlu0 %v1193, 20
      %v1266 = vpop.permute.xlu0 %1265
      %1267 = vrot.lane.b32.xlu0 %v1194, 20
      %v1268 = vpop.permute.xlu0 %1267
      %1269 = vrot.lane.b32.xlu0 %v1195, 20
      %v1270 = vpop.permute.xlu0 %1269
      %1271 = vrot.lane.b32.xlu0 %v1196, 20
      %v1272 = vpop.permute.xlu0 %1271
      %1273 = vrot.lane.b32.xlu0 %v1197, 20
      %v1274 = vpop.permute.xlu0 %1273
      %1275 = vrot.lane.b32.xlu0 %v1198, 20
      %v1276 = vpop.permute.xlu0 %1275
      %1277 = vrot.lane.b32.xlu0 %v1199, 20
      %v1278 = vpop.permute.xlu0 %1277
      %1279 = vrot.lane.b32.xlu0 %v1200, 20
      %v1280 = vpop.permute.xlu0 %1279
      %1281 = vrot.lane.b32.xlu0 %v1201, 20
      %v1282 = vpop.permute.xlu0 %1281
      %1283 = vrot.lane.b32.xlu0 %v1202, 20
      %v1284 = vpop.permute.xlu0 %1283
      %1285 = vrot.lane.b32.xlu0 %v1203, 20
      %v1286 = vpop.permute.xlu0 %1285
      %1287 = vrot.lane.b32.xlu0 %v1204, 20
      %v1288 = vpop.permute.xlu0 %1287
      %1289 = vrot.lane.b32.xlu0 %v1205, 20
      %v1290 = vpop.permute.xlu0 %1289
      %1291 = vrot.lane.b32.xlu0 %v1206, 20
      %v1292 = vpop.permute.xlu0 %1291
      %1293 = vrot.lane.b32.xlu0 %v1207, 20
      %v1294 = vpop.permute.xlu0 %1293
      %1295 = vrot.lane.b32.xlu0 %v1208, 20
      %v1296 = vpop.permute.xlu0 %1295
      %1297 = vrot.lane.b32.xlu0 %v1209, 20
      %v1298 = vpop.permute.xlu0 %1297
      %1299 = vrot.lane.b32.xlu0 %v1210, 20
      %v1300 = vpop.permute.xlu0 %1299
      %1301 = vrot.lane.b32.xlu0 %v1211, 20
      %v1302 = vpop.permute.xlu0 %1301
      %1303 = vrot.lane.b32.xlu0 %v1212, 20
      %v1304 = vpop.permute.xlu0 %1303
      %1305 = vrot.lane.b32.xlu0 %v1213, 20
      %v1306 = vpop.permute.xlu0 %1305
      %1307 = vrot.lane.b32.xlu0 %v1214, 20
      %v1308 = vpop.permute.xlu0 %1307
      %1309 = vrot.lane.b32.xlu0 %v1215, 20
      %v1310 = vpop.permute.xlu0 %1309
      %1311 = vrot.lane.b32.xlu0 %v1216, 20
      %v1312 = vpop.permute.xlu0 %1311
      %vm1345 = vcmask 195744
      %1346 = vst.msk [vmem:[#allocation3] sm:$0xff] %vm1345, %v1250
      %1347 = vst.msk [vmem:[#allocation3 + $0x8] sm:$0xff] %vm1345, %v1252
      %1348 = vst.msk [vmem:[#allocation3 + $0x10] sm:$0xff] %vm1345, %v1254
      %1349 = vst.msk [vmem:[#allocation3 + $0x18] sm:$0xff] %vm1345, %v1256
      %1350 = vst.msk [vmem:[#allocation3 + $0x20] sm:$0xff] %vm1345, %v1258
      %1351 = vst.msk [vmem:[#allocation3 + $0x28] sm:$0xff] %vm1345, %v1260
      %1352 = vst.msk [vmem:[#allocation3 + $0x30] sm:$0xff] %vm1345, %v1262
      %1353 = vst.msk [vmem:[#allocation3 + $0x38] sm:$0xff] %vm1345, %v1264
      %1354 = vst.msk [vmem:[#allocation3 + $0x40] sm:$0xff] %vm1345, %v1266
      %1355 = vst.msk [vmem:[#allocation3 + $0x48] sm:$0xff] %vm1345, %v1268
      %1356 = vst.msk [vmem:[#allocation3 + $0x50] sm:$0xff] %vm1345, %v1270
      %1357 = vst.msk [vmem:[#allocation3 + $0x58] sm:$0xff] %vm1345, %v1272
      %1358 = vst.msk [vmem:[#allocation3 + $0x60] sm:$0xff] %vm1345, %v1274
      %1359 = vst.msk [vmem:[#allocation3 + $0x68] sm:$0xff] %vm1345, %v1276
      %1360 = vst.msk [vmem:[#allocation3 + $0x70] sm:$0xff] %vm1345, %v1278
      %1361 = vst.msk [vmem:[#allocation3 + $0x78] sm:$0xff] %vm1345, %v1280
      %1362 = vst.msk [vmem:[#allocation3 + $0x80] sm:$0xff] %vm1345, %v1282
      %1363 = vst.msk [vmem:[#allocation3 + $0x88] sm:$0xff] %vm1345, %v1284
      %1364 = vst.msk [vmem:[#allocation3 + $0x90] sm:$0xff] %vm1345, %v1286
      %1365 = vst.msk [vmem:[#allocation3 + $0x98] sm:$0xff] %vm1345, %v1288
      %1366 = vst.msk [vmem:[#allocation3 + $0xa0] sm:$0xff] %vm1345, %v1290
      %1367 = vst.msk [vmem:[#allocation3 + $0xa8] sm:$0xff] %vm1345, %v1292
      %1368 = vst.msk [vmem:[#allocation3 + $0xb0] sm:$0xff] %vm1345, %v1294
      %1369 = vst.msk [vmem:[#allocation3 + $0xb8] sm:$0xff] %vm1345, %v1296
      %1370 = vst.msk [vmem:[#allocation3 + $0xc0] sm:$0xff] %vm1345, %v1298
      %1371 = vst.msk [vmem:[#allocation3 + $0xc8] sm:$0xff] %vm1345, %v1300
      %1372 = vst.msk [vmem:[#allocation3 + $0xd0] sm:$0xff] %vm1345, %v1302
      %1373 = vst.msk [vmem:[#allocation3 + $0xd8] sm:$0xff] %vm1345, %v1304
      %1374 = vst.msk [vmem:[#allocation3 + $0xe0] sm:$0xff] %vm1345, %v1306
      %1375 = vst.msk [vmem:[#allocation3 + $0xe8] sm:$0xff] %vm1345, %v1308
      %1376 = vst.msk [vmem:[#allocation3 + $0xf0] sm:$0xff] %vm1345, %v1310
      %1377 = vst.msk [vmem:[#allocation3 + $0xf8] sm:$0xff] %vm1345, %v1312
      %s1378 = scalar_lea.vmem [#allocation2], 48
      %v1379 = vld [vmem:[%s1378] sm:$0xff]
      %v1380 = vld [vmem:[%s1378 + $0x8] sm:$0xff]
      %v1381 = vld [vmem:[%s1378 + $0x18] sm:$0xff]
      %v1382 = vld [vmem:[%s1378 + $0x20] sm:$0xff]
      %v1383 = vld [vmem:[%s1378 + $0x30] sm:$0xff]
      %v1384 = vld [vmem:[%s1378 + $0x38] sm:$0xff]
      %v1385 = vld [vmem:[%s1378 + $0x48] sm:$0xff]
      %v1386 = vld [vmem:[%s1378 + $0x50] sm:$0xff]
      %v1387 = vld [vmem:[%s1378 + $0x60] sm:$0xff]
      %v1388 = vld [vmem:[%s1378 + $0x68] sm:$0xff]
      %v1389 = vld [vmem:[%s1378 + $0x78] sm:$0xff]
      %v1390 = vld [vmem:[%s1378 + $0x80] sm:$0xff]
      %v1391 = vld [vmem:[%s1378 + $0x90] sm:$0xff]
      %v1392 = vld [vmem:[%s1378 + $0x98] sm:$0xff]
      %v1393 = vld [vmem:[%s1378 + $0xa8] sm:$0xff]
      %v1394 = vld [vmem:[%s1378 + $0xb0] sm:$0xff]
      %v1395 = vld [vmem:[%s1378 + $0xc0] sm:$0xff]
      %v1396 = vld [vmem:[%s1378 + $0xc8] sm:$0xff]
      %v1397 = vld [vmem:[%s1378 + $0xd8] sm:$0xff]
      %v1398 = vld [vmem:[%s1378 + $0xe0] sm:$0xff]
      %v1399 = vld [vmem:[%s1378 + $0xf0] sm:$0xff]
      %v1400 = vld [vmem:[%s1378 + $0xf8] sm:$0xff]
      %v1401 = vld [vmem:[%s1378 + $0x108] sm:$0xff]
      %v1402 = vld [vmem:[%s1378 + $0x110] sm:$0xff]
      %v1403 = vld [vmem:[%s1378 + $0x120] sm:$0xff]
      %v1404 = vld [vmem:[%s1378 + $0x128] sm:$0xff]
      %v1405 = vld [vmem:[%s1378 + $0x138] sm:$0xff]
      %v1406 = vld [vmem:[%s1378 + $0x140] sm:$0xff]
      %v1407 = vld [vmem:[%s1378 + $0x150] sm:$0xff]
      %v1408 = vld [vmem:[%s1378 + $0x158] sm:$0xff]
      %v1409 = vld [vmem:[%s1378 + $0x168] sm:$0xff]
      %v1410 = vld [vmem:[%s1378 + $0x170] sm:$0xff]
      %1443 = vrot.lane.b32.xlu0 %v1379, 24
      %v1444 = vpop.permute.xlu0 %1443
      %1445 = vrot.lane.b32.xlu0 %v1380, 24
      %v1446 = vpop.permute.xlu0 %1445
      %1447 = vrot.lane.b32.xlu0 %v1381, 24
      %v1448 = vpop.permute.xlu0 %1447
      %1449 = vrot.lane.b32.xlu0 %v1382, 24
      %v1450 = vpop.permute.xlu0 %1449
      %1451 = vrot.lane.b32.xlu0 %v1383, 24
      %v1452 = vpop.permute.xlu0 %1451
      %1453 = vrot.lane.b32.xlu0 %v1384, 24
      %v1454 = vpop.permute.xlu0 %1453
      %1455 = vrot.lane.b32.xlu0 %v1385, 24
      %v1456 = vpop.permute.xlu0 %1455
      %1457 = vrot.lane.b32.xlu0 %v1386, 24
      %v1458 = vpop.permute.xlu0 %1457
      %1459 = vrot.lane.b32.xlu0 %v1387, 24
      %v1460 = vpop.permute.xlu0 %1459
      %1461 = vrot.lane.b32.xlu0 %v1388, 24
      %v1462 = vpop.permute.xlu0 %1461
      %1463 = vrot.lane.b32.xlu0 %v1389, 24
      %v1464 = vpop.permute.xlu0 %1463
      %1465 = vrot.lane.b32.xlu0 %v1390, 24
      %v1466 = vpop.permute.xlu0 %1465
      %1467 = vrot.lane.b32.xlu0 %v1391, 24
      %v1468 = vpop.permute.xlu0 %1467
      %1469 = vrot.lane.b32.xlu0 %v1392, 24
      %v1470 = vpop.permute.xlu0 %1469
      %1471 = vrot.lane.b32.xlu0 %v1393, 24
      %v1472 = vpop.permute.xlu0 %1471
      %1473 = vrot.lane.b32.xlu0 %v1394, 24
      %v1474 = vpop.permute.xlu0 %1473
      %1475 = vrot.lane.b32.xlu0 %v1395, 24
      %v1476 = vpop.permute.xlu0 %1475
      %1477 = vrot.lane.b32.xlu0 %v1396, 24
      %v1478 = vpop.permute.xlu0 %1477
      %1479 = vrot.lane.b32.xlu0 %v1397, 24
      %v1480 = vpop.permute.xlu0 %1479
      %1481 = vrot.lane.b32.xlu0 %v1398, 24
      %v1482 = vpop.permute.xlu0 %1481
      %1483 = vrot.lane.b32.xlu0 %v1399, 24
      %v1484 = vpop.permute.xlu0 %1483
      %1485 = vrot.lane.b32.xlu0 %v1400, 24
      %v1486 = vpop.permute.xlu0 %1485
      %1487 = vrot.lane.b32.xlu0 %v1401, 24
      %v1488 = vpop.permute.xlu0 %1487
      %1489 = vrot.lane.b32.xlu0 %v1402, 24
      %v1490 = vpop.permute.xlu0 %1489
      %1491 = vrot.lane.b32.xlu0 %v1403, 24
      %v1492 = vpop.permute.xlu0 %1491
      %1493 = vrot.lane.b32.xlu0 %v1404, 24
      %v1494 = vpop.permute.xlu0 %1493
      %1495 = vrot.lane.b32.xlu0 %v1405, 24
      %v1496 = vpop.permute.xlu0 %1495
      %1497 = vrot.lane.b32.xlu0 %v1406, 24
      %v1498 = vpop.permute.xlu0 %1497
      %1499 = vrot.lane.b32.xlu0 %v1407, 24
      %v1500 = vpop.permute.xlu0 %1499
      %1501 = vrot.lane.b32.xlu0 %v1408, 24
      %v1502 = vpop.permute.xlu0 %1501
      %1503 = vrot.lane.b32.xlu0 %v1409, 24
      %v1504 = vpop.permute.xlu0 %1503
      %1505 = vrot.lane.b32.xlu0 %v1410, 24
      %v1506 = vpop.permute.xlu0 %1505
      %vm1539 = vcmask 228544
      %1540 = vst.msk [vmem:[#allocation3] sm:$0xff] %vm1539, %v1444
      %1541 = vst.msk [vmem:[#allocation3 + $0x8] sm:$0xff] %vm1539, %v1446
      %1542 = vst.msk [vmem:[#allocation3 + $0x10] sm:$0xff] %vm1539, %v1448
      %1543 = vst.msk [vmem:[#allocation3 + $0x18] sm:$0xff] %vm1539, %v1450
      %1544 = vst.msk [vmem:[#allocation3 + $0x20] sm:$0xff] %vm1539, %v1452
      %1545 = vst.msk [vmem:[#allocation3 + $0x28] sm:$0xff] %vm1539, %v1454
      %1546 = vst.msk [vmem:[#allocation3 + $0x30] sm:$0xff] %vm1539, %v1456
      %1547 = vst.msk [vmem:[#allocation3 + $0x38] sm:$0xff] %vm1539, %v1458
      %1548 = vst.msk [vmem:[#allocation3 + $0x40] sm:$0xff] %vm1539, %v1460
      %1549 = vst.msk [vmem:[#allocation3 + $0x48] sm:$0xff] %vm1539, %v1462
      %1550 = vst.msk [vmem:[#allocation3 + $0x50] sm:$0xff] %vm1539, %v1464
      %1551 = vst.msk [vmem:[#allocation3 + $0x58] sm:$0xff] %vm1539, %v1466
      %1552 = vst.msk [vmem:[#allocation3 + $0x60] sm:$0xff] %vm1539, %v1468
      %1553 = vst.msk [vmem:[#allocation3 + $0x68] sm:$0xff] %vm1539, %v1470
      %1554 = vst.msk [vmem:[#allocation3 + $0x70] sm:$0xff] %vm1539, %v1472
      %1555 = vst.msk [vmem:[#allocation3 + $0x78] sm:$0xff] %vm1539, %v1474
      %1556 = vst.msk [vmem:[#allocation3 + $0x80] sm:$0xff] %vm1539, %v1476
      %1557 = vst.msk [vmem:[#allocation3 + $0x88] sm:$0xff] %vm1539, %v1478
      %1558 = vst.msk [vmem:[#allocation3 + $0x90] sm:$0xff] %vm1539, %v1480
      %1559 = vst.msk [vmem:[#allocation3 + $0x98] sm:$0xff] %vm1539, %v1482
      %1560 = vst.msk [vmem:[#allocation3 + $0xa0] sm:$0xff] %vm1539, %v1484
      %1561 = vst.msk [vmem:[#allocation3 + $0xa8] sm:$0xff] %vm1539, %v1486
      %1562 = vst.msk [vmem:[#allocation3 + $0xb0] sm:$0xff] %vm1539, %v1488
      %1563 = vst.msk [vmem:[#allocation3 + $0xb8] sm:$0xff] %vm1539, %v1490
      %1564 = vst.msk [vmem:[#allocation3 + $0xc0] sm:$0xff] %vm1539, %v1492
      %1565 = vst.msk [vmem:[#allocation3 + $0xc8] sm:$0xff] %vm1539, %v1494
      %1566 = vst.msk [vmem:[#allocation3 + $0xd0] sm:$0xff] %vm1539, %v1496
      %1567 = vst.msk [vmem:[#allocation3 + $0xd8] sm:$0xff] %vm1539, %v1498
      %1568 = vst.msk [vmem:[#allocation3 + $0xe0] sm:$0xff] %vm1539, %v1500
      %1569 = vst.msk [vmem:[#allocation3 + $0xe8] sm:$0xff] %vm1539, %v1502
      %1570 = vst.msk [vmem:[#allocation3 + $0xf0] sm:$0xff] %vm1539, %v1504
      %1571 = vst.msk [vmem:[#allocation3 + $0xf8] sm:$0xff] %vm1539, %v1506
      %v1572 = vld [vmem:[%s1378 + $0x1] sm:$0xff]
      %v1573 = vld [vmem:[%s1378 + $0x9] sm:$0xff]
      %v1574 = vld [vmem:[%s1378 + $0x19] sm:$0xff]
      %v1575 = vld [vmem:[%s1378 + $0x21] sm:$0xff]
      %v1576 = vld [vmem:[%s1378 + $0x31] sm:$0xff]
      %v1577 = vld [vmem:[%s1378 + $0x39] sm:$0xff]
      %v1578 = vld [vmem:[%s1378 + $0x49] sm:$0xff]
      %v1579 = vld [vmem:[%s1378 + $0x51] sm:$0xff]
      %v1580 = vld [vmem:[%s1378 + $0x61] sm:$0xff]
      %v1581 = vld [vmem:[%s1378 + $0x69] sm:$0xff]
      %v1582 = vld [vmem:[%s1378 + $0x79] sm:$0xff]
      %v1583 = vld [vmem:[%s1378 + $0x81] sm:$0xff]
      %v1584 = vld [vmem:[%s1378 + $0x91] sm:$0xff]
      %v1585 = vld [vmem:[%s1378 + $0x99] sm:$0xff]
      %v1586 = vld [vmem:[%s1378 + $0xa9] sm:$0xff]
      %v1587 = vld [vmem:[%s1378 + $0xb1] sm:$0xff]
      %v1588 = vld [vmem:[%s1378 + $0xc1] sm:$0xff]
      %v1589 = vld [vmem:[%s1378 + $0xc9] sm:$0xff]
      %v1590 = vld [vmem:[%s1378 + $0xd9] sm:$0xff]
      %v1591 = vld [vmem:[%s1378 + $0xe1] sm:$0xff]
      %v1592 = vld [vmem:[%s1378 + $0xf1] sm:$0xff]
      %v1593 = vld [vmem:[%s1378 + $0xf9] sm:$0xff]
      %v1594 = vld [vmem:[%s1378 + $0x109] sm:$0xff]
      %v1595 = vld [vmem:[%s1378 + $0x111] sm:$0xff]
      %v1596 = vld [vmem:[%s1378 + $0x121] sm:$0xff]
      %v1597 = vld [vmem:[%s1378 + $0x129] sm:$0xff]
      %v1598 = vld [vmem:[%s1378 + $0x139] sm:$0xff]
      %v1599 = vld [vmem:[%s1378 + $0x141] sm:$0xff]
      %v1600 = vld [vmem:[%s1378 + $0x151] sm:$0xff]
      %v1601 = vld [vmem:[%s1378 + $0x159] sm:$0xff]
      %v1602 = vld [vmem:[%s1378 + $0x169] sm:$0xff]
      %v1603 = vld [vmem:[%s1378 + $0x171] sm:$0xff]
      %1636 = vrot.lane.b32.xlu0 %v1572, 28
      %v1637 = vpop.permute.xlu0 %1636
      %1638 = vrot.lane.b32.xlu0 %v1573, 28
      %v1639 = vpop.permute.xlu0 %1638
      %1640 = vrot.lane.b32.xlu0 %v1574, 28
      %v1641 = vpop.permute.xlu0 %1640
      %1642 = vrot.lane.b32.xlu0 %v1575, 28
      %v1643 = vpop.permute.xlu0 %1642
      %1644 = vrot.lane.b32.xlu0 %v1576, 28
      %v1645 = vpop.permute.xlu0 %1644
      %1646 = vrot.lane.b32.xlu0 %v1577, 28
      %v1647 = vpop.permute.xlu0 %1646
      %1648 = vrot.lane.b32.xlu0 %v1578, 28
      %v1649 = vpop.permute.xlu0 %1648
      %1650 = vrot.lane.b32.xlu0 %v1579, 28
      %v1651 = vpop.permute.xlu0 %1650
      %1652 = vrot.lane.b32.xlu0 %v1580, 28
      %v1653 = vpop.permute.xlu0 %1652
      %1654 = vrot.lane.b32.xlu0 %v1581, 28
      %v1655 = vpop.permute.xlu0 %1654
      %1656 = vrot.lane.b32.xlu0 %v1582, 28
      %v1657 = vpop.permute.xlu0 %1656
      %1658 = vrot.lane.b32.xlu0 %v1583, 28
      %v1659 = vpop.permute.xlu0 %1658
      %1660 = vrot.lane.b32.xlu0 %v1584, 28
      %v1661 = vpop.permute.xlu0 %1660
      %1662 = vrot.lane.b32.xlu0 %v1585, 28
      %v1663 = vpop.permute.xlu0 %1662
      %1664 = vrot.lane.b32.xlu0 %v1586, 28
      %v1665 = vpop.permute.xlu0 %1664
      %1666 = vrot.lane.b32.xlu0 %v1587, 28
      %v1667 = vpop.permute.xlu0 %1666
      %1668 = vrot.lane.b32.xlu0 %v1588, 28
      %v1669 = vpop.permute.xlu0 %1668
      %1670 = vrot.lane.b32.xlu0 %v1589, 28
      %v1671 = vpop.permute.xlu0 %1670
      %1672 = vrot.lane.b32.xlu0 %v1590, 28
      %v1673 = vpop.permute.xlu0 %1672
      %1674 = vrot.lane.b32.xlu0 %v1591, 28
      %v1675 = vpop.permute.xlu0 %1674
      %1676 = vrot.lane.b32.xlu0 %v1592, 28
      %v1677 = vpop.permute.xlu0 %1676
      %1678 = vrot.lane.b32.xlu0 %v1593, 28
      %v1679 = vpop.permute.xlu0 %1678
      %1680 = vrot.lane.b32.xlu0 %v1594, 28
      %v1681 = vpop.permute.xlu0 %1680
      %1682 = vrot.lane.b32.xlu0 %v1595, 28
      %v1683 = vpop.permute.xlu0 %1682
      %1684 = vrot.lane.b32.xlu0 %v1596, 28
      %v1685 = vpop.permute.xlu0 %1684
      %1686 = vrot.lane.b32.xlu0 %v1597, 28
      %v1687 = vpop.permute.xlu0 %1686
      %1688 = vrot.lane.b32.xlu0 %v1598, 28
      %v1689 = vpop.permute.xlu0 %1688
      %1690 = vrot.lane.b32.xlu0 %v1599, 28
      %v1691 = vpop.permute.xlu0 %1690
      %1692 = vrot.lane.b32.xlu0 %v1600, 28
      %v1693 = vpop.permute.xlu0 %1692
      %1694 = vrot.lane.b32.xlu0 %v1601, 28
      %v1695 = vpop.permute.xlu0 %1694
      %1696 = vrot.lane.b32.xlu0 %v1602, 28
      %v1697 = vpop.permute.xlu0 %1696
      %1698 = vrot.lane.b32.xlu0 %v1603, 28
      %v1699 = vpop.permute.xlu0 %1698
      %vm1732 = vcmask 261344
      %1733 = vst.msk [vmem:[#allocation3] sm:$0xff] %vm1732, %v1637
      %1734 = vst.msk [vmem:[#allocation3 + $0x8] sm:$0xff] %vm1732, %v1639
      %1735 = vst.msk [vmem:[#allocation3 + $0x10] sm:$0xff] %vm1732, %v1641
      %1736 = vst.msk [vmem:[#allocation3 + $0x18] sm:$0xff] %vm1732, %v1643
      %1737 = vst.msk [vmem:[#allocation3 + $0x20] sm:$0xff] %vm1732, %v1645
      %1738 = vst.msk [vmem:[#allocation3 + $0x28] sm:$0xff] %vm1732, %v1647
      %1739 = vst.msk [vmem:[#allocation3 + $0x30] sm:$0xff] %vm1732, %v1649
      %1740 = vst.msk [vmem:[#allocation3 + $0x38] sm:$0xff] %vm1732, %v1651
      %1741 = vst.msk [vmem:[#allocation3 + $0x40] sm:$0xff] %vm1732, %v1653
      %1742 = vst.msk [vmem:[#allocation3 + $0x48] sm:$0xff] %vm1732, %v1655
      %1743 = vst.msk [vmem:[#allocation3 + $0x50] sm:$0xff] %vm1732, %v1657
      %1744 = vst.msk [vmem:[#allocation3 + $0x58] sm:$0xff] %vm1732, %v1659
      %1745 = vst.msk [vmem:[#allocation3 + $0x60] sm:$0xff] %vm1732, %v1661
      %1746 = vst.msk [vmem:[#allocation3 + $0x68] sm:$0xff] %vm1732, %v1663
      %1747 = vst.msk [vmem:[#allocation3 + $0x70] sm:$0xff] %vm1732, %v1665
      %1748 = vst.msk [vmem:[#allocation3 + $0x78] sm:$0xff] %vm1732, %v1667
      %1749 = vst.msk [vmem:[#allocation3 + $0x80] sm:$0xff] %vm1732, %v1669
      %1750 = vst.msk [vmem:[#allocation3 + $0x88] sm:$0xff] %vm1732, %v1671
      %1751 = vst.msk [vmem:[#allocation3 + $0x90] sm:$0xff] %vm1732, %v1673
      %1752 = vst.msk [vmem:[#allocation3 + $0x98] sm:$0xff] %vm1732, %v1675
      %1753 = vst.msk [vmem:[#allocation3 + $0xa0] sm:$0xff] %vm1732, %v1677
      %1754 = vst.msk [vmem:[#allocation3 + $0xa8] sm:$0xff] %vm1732, %v1679
      %1755 = vst.msk [vmem:[#allocation3 + $0xb0] sm:$0xff] %vm1732, %v1681
      %1756 = vst.msk [vmem:[#allocation3 + $0xb8] sm:$0xff] %vm1732, %v1683
      %1757 = vst.msk [vmem:[#allocation3 + $0xc0] sm:$0xff] %vm1732, %v1685
      %1758 = vst.msk [vmem:[#allocation3 + $0xc8] sm:$0xff] %vm1732, %v1687
      %1759 = vst.msk [vmem:[#allocation3 + $0xd0] sm:$0xff] %vm1732, %v1689
      %1760 = vst.msk [vmem:[#allocation3 + $0xd8] sm:$0xff] %vm1732, %v1691
      %1761 = vst.msk [vmem:[#allocation3 + $0xe0] sm:$0xff] %vm1732, %v1693
      %1762 = vst.msk [vmem:[#allocation3 + $0xe8] sm:$0xff] %vm1732, %v1695
      %1763 = vst.msk [vmem:[#allocation3 + $0xf0] sm:$0xff] %vm1732, %v1697
      %1764 = vst.msk [vmem:[#allocation3 + $0xf8] sm:$0xff] %vm1732, %v1699
      %v1765 = vld [vmem:[%s1378 + $0x2] sm:$0xff]
      %v1766 = vld [vmem:[%s1378 + $0xa] sm:$0xff]
      %v1767 = vld [vmem:[%s1378 + $0x1a] sm:$0xff]
      %v1768 = vld [vmem:[%s1378 + $0x22] sm:$0xff]
      %v1769 = vld [vmem:[%s1378 + $0x32] sm:$0xff]
      %v1770 = vld [vmem:[%s1378 + $0x3a] sm:$0xff]
      %v1771 = vld [vmem:[%s1378 + $0x4a] sm:$0xff]
      %v1772 = vld [vmem:[%s1378 + $0x52] sm:$0xff]
      %v1773 = vld [vmem:[%s1378 + $0x62] sm:$0xff]
      %v1774 = vld [vmem:[%s1378 + $0x6a] sm:$0xff]
      %v1775 = vld [vmem:[%s1378 + $0x7a] sm:$0xff]
      %v1776 = vld [vmem:[%s1378 + $0x82] sm:$0xff]
      %v1777 = vld [vmem:[%s1378 + $0x92] sm:$0xff]
      %v1778 = vld [vmem:[%s1378 + $0x9a] sm:$0xff]
      %v1779 = vld [vmem:[%s1378 + $0xaa] sm:$0xff]
      %v1780 = vld [vmem:[%s1378 + $0xb2] sm:$0xff]
      %v1781 = vld [vmem:[%s1378 + $0xc2] sm:$0xff]
      %v1782 = vld [vmem:[%s1378 + $0xca] sm:$0xff]
      %v1783 = vld [vmem:[%s1378 + $0xda] sm:$0xff]
      %v1784 = vld [vmem:[%s1378 + $0xe2] sm:$0xff]
      %v1785 = vld [vmem:[%s1378 + $0xf2] sm:$0xff]
      %v1786 = vld [vmem:[%s1378 + $0xfa] sm:$0xff]
      %v1787 = vld [vmem:[%s1378 + $0x10a] sm:$0xff]
      %v1788 = vld [vmem:[%s1378 + $0x112] sm:$0xff]
      %v1789 = vld [vmem:[%s1378 + $0x122] sm:$0xff]
      %v1790 = vld [vmem:[%s1378 + $0x12a] sm:$0xff]
      %v1791 = vld [vmem:[%s1378 + $0x13a] sm:$0xff]
      %v1792 = vld [vmem:[%s1378 + $0x142] sm:$0xff]
      %v1793 = vld [vmem:[%s1378 + $0x152] sm:$0xff]
      %v1794 = vld [vmem:[%s1378 + $0x15a] sm:$0xff]
      %v1795 = vld [vmem:[%s1378 + $0x16a] sm:$0xff]
      %v1796 = vld [vmem:[%s1378 + $0x172] sm:$0xff]
      %1829 = vrot.lane.b32.xlu0 %v1765, 32
      %v1830 = vpop.permute.xlu0 %1829
      %1831 = vrot.lane.b32.xlu0 %v1766, 32
      %v1832 = vpop.permute.xlu0 %1831
      %1833 = vrot.lane.b32.xlu0 %v1767, 32
      %v1834 = vpop.permute.xlu0 %1833
      %1835 = vrot.lane.b32.xlu0 %v1768, 32
      %v1836 = vpop.permute.xlu0 %1835
      %1837 = vrot.lane.b32.xlu0 %v1769, 32
      %v1838 = vpop.permute.xlu0 %1837
      %1839 = vrot.lane.b32.xlu0 %v1770, 32
      %v1840 = vpop.permute.xlu0 %1839
      %1841 = vrot.lane.b32.xlu0 %v1771, 32
      %v1842 = vpop.permute.xlu0 %1841
      %1843 = vrot.lane.b32.xlu0 %v1772, 32
      %v1844 = vpop.permute.xlu0 %1843
      %1845 = vrot.lane.b32.xlu0 %v1773, 32
      %v1846 = vpop.permute.xlu0 %1845
      %1847 = vrot.lane.b32.xlu0 %v1774, 32
      %v1848 = vpop.permute.xlu0 %1847
      %1849 = vrot.lane.b32.xlu0 %v1775, 32
      %v1850 = vpop.permute.xlu0 %1849
      %1851 = vrot.lane.b32.xlu0 %v1776, 32
      %v1852 = vpop.permute.xlu0 %1851
      %1853 = vrot.lane.b32.xlu0 %v1777, 32
      %v1854 = vpop.permute.xlu0 %1853
      %1855 = vrot.lane.b32.xlu0 %v1778, 32
      %v1856 = vpop.permute.xlu0 %1855
      %1857 = vrot.lane.b32.xlu0 %v1779, 32
      %v1858 = vpop.permute.xlu0 %1857
      %1859 = vrot.lane.b32.xlu0 %v1780, 32
      %v1860 = vpop.permute.xlu0 %1859
      %1861 = vrot.lane.b32.xlu0 %v1781, 32
      %v1862 = vpop.permute.xlu0 %1861
      %1863 = vrot.lane.b32.xlu0 %v1782, 32
      %v1864 = vpop.permute.xlu0 %1863
      %1865 = vrot.lane.b32.xlu0 %v1783, 32
      %v1866 = vpop.permute.xlu0 %1865
      %1867 = vrot.lane.b32.xlu0 %v1784, 32
      %v1868 = vpop.permute.xlu0 %1867
      %1869 = vrot.lane.b32.xlu0 %v1785, 32
      %v1870 = vpop.permute.xlu0 %1869
      %1871 = vrot.lane.b32.xlu0 %v1786, 32
      %v1872 = vpop.permute.xlu0 %1871
      %1873 = vrot.lane.b32.xlu0 %v1787, 32
      %v1874 = vpop.permute.xlu0 %1873
      %1875 = vrot.lane.b32.xlu0 %v1788, 32
      %v1876 = vpop.permute.xlu0 %1875
      %1877 = vrot.lane.b32.xlu0 %v1789, 32
      %v1878 = vpop.permute.xlu0 %1877
      %1879 = vrot.lane.b32.xlu0 %v1790, 32
      %v1880 = vpop.permute.xlu0 %1879
      %1881 = vrot.lane.b32.xlu0 %v1791, 32
      %v1882 = vpop.permute.xlu0 %1881
      %1883 = vrot.lane.b32.xlu0 %v1792, 32
      %v1884 = vpop.permute.xlu0 %1883
      %1885 = vrot.lane.b32.xlu0 %v1793, 32
      %v1886 = vpop.permute.xlu0 %1885
      %1887 = vrot.lane.b32.xlu0 %v1794, 32
      %v1888 = vpop.permute.xlu0 %1887
      %1889 = vrot.lane.b32.xlu0 %v1795, 32
      %v1890 = vpop.permute.xlu0 %1889
      %1891 = vrot.lane.b32.xlu0 %v1796, 32
      %v1892 = vpop.permute.xlu0 %1891
      %vm1925 = vcmask 294144
      %1926 = vst.msk [vmem:[#allocation3] sm:$0xff] %vm1925, %v1830
      %1927 = vst.msk [vmem:[#allocation3 + $0x8] sm:$0xff] %vm1925, %v1832
      %1928 = vst.msk [vmem:[#allocation3 + $0x10] sm:$0xff] %vm1925, %v1834
      %1929 = vst.msk [vmem:[#allocation3 + $0x18] sm:$0xff] %vm1925, %v1836
      %1930 = vst.msk [vmem:[#allocation3 + $0x20] sm:$0xff] %vm1925, %v1838
      %1931 = vst.msk [vmem:[#allocation3 + $0x28] sm:$0xff] %vm1925, %v1840
      %1932 = vst.msk [vmem:[#allocation3 + $0x30] sm:$0xff] %vm1925, %v1842
      %1933 = vst.msk [vmem:[#allocation3 + $0x38] sm:$0xff] %vm1925, %v1844
      %1934 = vst.msk [vmem:[#allocation3 + $0x40] sm:$0xff] %vm1925, %v1846
      %1935 = vst.msk [vmem:[#allocation3 + $0x48] sm:$0xff] %vm1925, %v1848
      %1936 = vst.msk [vmem:[#allocation3 + $0x50] sm:$0xff] %vm1925, %v1850
      %1937 = vst.msk [vmem:[#allocation3 + $0x58] sm:$0xff] %vm1925, %v1852
      %1938 = vst.msk [vmem:[#allocation3 + $0x60] sm:$0xff] %vm1925, %v1854
      %1939 = vst.msk [vmem:[#allocation3 + $0x68] sm:$0xff] %vm1925, %v1856
      %1940 = vst.msk [vmem:[#allocation3 + $0x70] sm:$0xff] %vm1925, %v1858
      %1941 = vst.msk [vmem:[#allocation3 + $0x78] sm:$0xff] %vm1925, %v1860
      %1942 = vst.msk [vmem:[#allocation3 + $0x80] sm:$0xff] %vm1925, %v1862
      %1943 = vst.msk [vmem:[#allocation3 + $0x88] sm:$0xff] %vm1925, %v1864
      %1944 = vst.msk [vmem:[#allocation3 + $0x90] sm:$0xff] %vm1925, %v1866
      %1945 = vst.msk [vmem:[#allocation3 + $0x98] sm:$0xff] %vm1925, %v1868
      %1946 = vst.msk [vmem:[#allocation3 + $0xa0] sm:$0xff] %vm1925, %v1870
      %1947 = vst.msk [vmem:[#allocation3 + $0xa8] sm:$0xff] %vm1925, %v1872
      %1948 = vst.msk [vmem:[#allocation3 + $0xb0] sm:$0xff] %vm1925, %v1874
      %1949 = vst.msk [vmem:[#allocation3 + $0xb8] sm:$0xff] %vm1925, %v1876
      %1950 = vst.msk [vmem:[#allocation3 + $0xc0] sm:$0xff] %vm1925, %v1878
      %1951 = vst.msk [vmem:[#allocation3 + $0xc8] sm:$0xff] %vm1925, %v1880
      %1952 = vst.msk [vmem:[#allocation3 + $0xd0] sm:$0xff] %vm1925, %v1882
      %1953 = vst.msk [vmem:[#allocation3 + $0xd8] sm:$0xff] %vm1925, %v1884
      %1954 = vst.msk [vmem:[#allocation3 + $0xe0] sm:$0xff] %vm1925, %v1886
      %1955 = vst.msk [vmem:[#allocation3 + $0xe8] sm:$0xff] %vm1925, %v1888
      %1956 = vst.msk [vmem:[#allocation3 + $0xf0] sm:$0xff] %vm1925, %v1890
      %1957 = vst.msk [vmem:[#allocation3 + $0xf8] sm:$0xff] %vm1925, %v1892
      %v1958 = vld [vmem:[#allocation3] sm:$0xff]
      %v1959 = vld [vmem:[#allocation3 + $0x8] sm:$0xff]
      %v1960 = vld [vmem:[#allocation3 + $0x10] sm:$0xff]
      %v1961 = vld [vmem:[#allocation3 + $0x18] sm:$0xff]
      %v1962 = vld [vmem:[#allocation3 + $0x20] sm:$0xff]
      %v1963 = vld [vmem:[#allocation3 + $0x28] sm:$0xff]
      %v1964 = vld [vmem:[#allocation3 + $0x30] sm:$0xff]
      %v1965 = vld [vmem:[#allocation3 + $0x38] sm:$0xff]
      %v1966 = vld [vmem:[#allocation3 + $0x40] sm:$0xff]
      %v1967 = vld [vmem:[#allocation3 + $0x48] sm:$0xff]
      %v1968 = vld [vmem:[#allocation3 + $0x50] sm:$0xff]
      %v1969 = vld [vmem:[#allocation3 + $0x58] sm:$0xff]
      %v1970 = vld [vmem:[#allocation3 + $0x60] sm:$0xff]
      %v1971 = vld [vmem:[#allocation3 + $0x68] sm:$0xff]
      %v1972 = vld [vmem:[#allocation3 + $0x70] sm:$0xff]
      %v1973 = vld [vmem:[#allocation3 + $0x78] sm:$0xff]
      %v1974 = vld [vmem:[#allocation3 + $0x80] sm:$0xff]
      %v1975 = vld [vmem:[#allocation3 + $0x88] sm:$0xff]
      %v1976 = vld [vmem:[#allocation3 + $0x90] sm:$0xff]
      %v1977 = vld [vmem:[#allocation3 + $0x98] sm:$0xff]
      %v1978 = vld [vmem:[#allocation3 + $0xa0] sm:$0xff]
      %v1979 = vld [vmem:[#allocation3 + $0xa8] sm:$0xff]
      %v1980 = vld [vmem:[#allocation3 + $0xb0] sm:$0xff]
      %v1981 = vld [vmem:[#allocation3 + $0xb8] sm:$0xff]
      %v1982 = vld [vmem:[#allocation3 + $0xc0] sm:$0xff]
      %v1983 = vld [vmem:[#allocation3 + $0xc8] sm:$0xff]
      %v1984 = vld [vmem:[#allocation3 + $0xd0] sm:$0xff]
      %v1985 = vld [vmem:[#allocation3 + $0xd8] sm:$0xff]
      %v1986 = vld [vmem:[#allocation3 + $0xe0] sm:$0xff]
      %v1987 = vld [vmem:[#allocation3 + $0xe8] sm:$0xff]
      %v1988 = vld [vmem:[#allocation3 + $0xf0] sm:$0xff]
      %v1989 = vld [vmem:[#allocation3 + $0xf8] sm:$0xff]
      %v1990 = vld [vmem:[%s1] sm:$0xff]
      %v1991 = vld [vmem:[%s1 + $0x8] sm:$0xff]
      %v1992 = vld [vmem:[%s1 + $0x10] sm:$0xff]
      %v1993 = vld [vmem:[%s1 + $0x18] sm:$0xff]
      %v1994 = vld [vmem:[%s1 + $0x20] sm:$0xf]
      %v1995 = vld [vmem:[%s2] sm:$0x1]
      %v1997 = vperm.slane %v1995, 0
      %vm1999 = vcmask 293888
      %v2001 = vsel %vm1999, %v1958, 0
      %v2004 = vsel %vm1999, %v1959, 0
      %v2007 = vsel %vm1999, %v1960, 0
      %v2010 = vsel %vm1999, %v1961, 0
      %v2013 = vsel %vm1999, %v1962, 0
      %v2016 = vsel %vm1999, %v1963, 0
      %v2019 = vsel %vm1999, %v1964, 0
      %v2022 = vsel %vm1999, %v1965, 0
      %v2025 = vsel %vm1999, %v1966, 0
      %v2028 = vsel %vm1999, %v1967, 0
      %v2031 = vsel %vm1999, %v1968, 0
      %v2034 = vsel %vm1999, %v1969, 0
      %v2037 = vsel %vm1999, %v1970, 0
      %v2040 = vsel %vm1999, %v1971, 0
      %v2043 = vsel %vm1999, %v1972, 0
      %v2046 = vsel %vm1999, %v1973, 0
      %v2049 = vsel %vm1999, %v1974, 0
      %v2052 = vsel %vm1999, %v1975, 0
      %v2055 = vsel %vm1999, %v1976, 0
      %v2058 = vsel %vm1999, %v1977, 0
      %v2061 = vsel %vm1999, %v1978, 0
      %v2064 = vsel %vm1999, %v1979, 0
      %v2067 = vsel %vm1999, %v1980, 0
      %v2070 = vsel %vm1999, %v1981, 0
      %v2073 = vsel %vm1999, %v1982, 0
      %v2076 = vsel %vm1999, %v1983, 0
      %v2079 = vsel %vm1999, %v1984, 0
      %v2082 = vsel %vm1999, %v1985, 0
      %v2085 = vsel %vm1999, %v1986, 0
      %v2088 = vsel %vm1999, %v1987, 0
      %v2091 = vsel %vm1999, %v1988, 0
      %v2094 = vsel %vm1999, %v1989, 0
      %vm2096 = vcmask 1043456
      %v2098 = vsel %vm2096, %v1994, 0
      %2100 = vmatpush.msra.mxu0 0.0
      %2101 = vmatpush.msra.mxu0 0.0
      %2102 = vmatpush.msra.mxu0 0.0
      %2103 = vmatpush.msra.mxu0 0.0
      %2104 = vmatpush.msra.mxu0 0.0
      %2105 = vmatpush.msra.mxu0 0.0
      %2106 = vmatpush.msra.mxu0 0.0
      %2107 = vmatpush.msra.mxu0 0.0
      %2108 = vmatpush.msra.mxu0 0.0
      %2109 = vmatpush.msra.mxu0 0.0
      %2110 = vmatpush.msra.mxu0 0.0
      %2111 = vmatpush.msra.mxu0 %v2098
      %2112 = vmatpush.msra.mxu0 %v1993
      %2113 = vmatpush.msra.mxu0 %v1992
      %2114 = vmatpush.msra.mxu0 %v1991
      %2115 = vmatpush.msra.mxu0 %v1990
      %2116 = vmatmul.f32.gmra.mxu0 %v2001
      %v2117 = vpop.f32.mrf.mxu0
      %v2118 = vadd.f32 %v1997, %v2117
      %2119 = vmatmul.f32.gmra.mxu0 %v2004
      %v2120 = vpop.f32.mrf.mxu0
      %v2121 = vadd.f32 %v1997, %v2120
      %2122 = vmatmul.f32.gmra.mxu0 %v2007
      %v2123 = vpop.f32.mrf.mxu0
      %v2124 = vadd.f32 %v1997, %v2123
      %2125 = vmatmul.f32.gmra.mxu0 %v2010
      %v2126 = vpop.f32.mrf.mxu0
      %v2127 = vadd.f32 %v1997, %v2126
      %2128 = vmatmul.f32.gmra.mxu0 %v2013
      %v2129 = vpop.f32.mrf.mxu0
      %v2130 = vadd.f32 %v1997, %v2129
      %2131 = vmatmul.f32.gmra.mxu0 %v2016
      %v2132 = vpop.f32.mrf.mxu0
      %v2133 = vadd.f32 %v1997, %v2132
      %2134 = vmatmul.f32.gmra.mxu0 %v2019
      %v2135 = vpop.f32.mrf.mxu0
      %v2136 = vadd.f32 %v1997, %v2135
      %2137 = vmatmul.f32.gmra.mxu0 %v2022
      %v2138 = vpop.f32.mrf.mxu0
      %v2139 = vadd.f32 %v1997, %v2138
      %2140 = vmatmul.f32.gmra.mxu0 %v2025
      %v2141 = vpop.f32.mrf.mxu0
      %v2142 = vadd.f32 %v1997, %v2141
      %2143 = vmatmul.f32.gmra.mxu0 %v2028
      %v2144 = vpop.f32.mrf.mxu0
      %v2145 = vadd.f32 %v1997, %v2144
      %2146 = vmatmul.f32.gmra.mxu0 %v2031
      %v2147 = vpop.f32.mrf.mxu0
      %v2148 = vadd.f32 %v1997, %v2147
      %2149 = vmatmul.f32.gmra.mxu0 %v2034
      %v2150 = vpop.f32.mrf.mxu0
      %v2151 = vadd.f32 %v1997, %v2150
      %2152 = vmatmul.f32.gmra.mxu0 %v2037
      %v2153 = vpop.f32.mrf.mxu0
      %v2154 = vadd.f32 %v1997, %v2153
      %2155 = vmatmul.f32.gmra.mxu0 %v2040
      %v2156 = vpop.f32.mrf.mxu0
      %v2157 = vadd.f32 %v1997, %v2156
      %2158 = vmatmul.f32.gmra.mxu0 %v2043
      %v2159 = vpop.f32.mrf.mxu0
      %v2160 = vadd.f32 %v1997, %v2159
      %2161 = vmatmul.f32.gmra.mxu0 %v2046
      %v2162 = vpop.f32.mrf.mxu0
      %v2163 = vadd.f32 %v1997, %v2162
      %2164 = vmatmul.f32.gmra.mxu0 %v2049
      %v2165 = vpop.f32.mrf.mxu0
      %v2166 = vadd.f32 %v1997, %v2165
      %2167 = vmatmul.f32.gmra.mxu0 %v2052
      %v2168 = vpop.f32.mrf.mxu0
      %v2169 = vadd.f32 %v1997, %v2168
      %2170 = vmatmul.f32.gmra.mxu0 %v2055
      %v2171 = vpop.f32.mrf.mxu0
      %v2172 = vadd.f32 %v1997, %v2171
      %2173 = vmatmul.f32.gmra.mxu0 %v2058
      %v2174 = vpop.f32.mrf.mxu0
      %v2175 = vadd.f32 %v1997, %v2174
      %2176 = vmatmul.f32.gmra.mxu0 %v2061
      %v2177 = vpop.f32.mrf.mxu0
      %v2178 = vadd.f32 %v1997, %v2177
      %2179 = vmatmul.f32.gmra.mxu0 %v2064
      %v2180 = vpop.f32.mrf.mxu0
      %v2181 = vadd.f32 %v1997, %v2180
      %2182 = vmatmul.f32.gmra.mxu0 %v2067
      %v2183 = vpop.f32.mrf.mxu0
      %v2184 = vadd.f32 %v1997, %v2183
      %2185 = vmatmul.f32.gmra.mxu0 %v2070
      %v2186 = vpop.f32.mrf.mxu0
      %v2187 = vadd.f32 %v1997, %v2186
      %2188 = vmatmul.f32.gmra.mxu0 %v2073
      %v2189 = vpop.f32.mrf.mxu0
      %v2190 = vadd.f32 %v1997, %v2189
      %2191 = vmatmul.f32.gmra.mxu0 %v2076
      %v2192 = vpop.f32.mrf.mxu0
      %v2193 = vadd.f32 %v1997, %v2192
      %2194 = vmatmul.f32.gmra.mxu0 %v2079
      %v2195 = vpop.f32.mrf.mxu0
      %v2196 = vadd.f32 %v1997, %v2195
      %2197 = vmatmul.f32.gmra.mxu0 %v2082
      %v2198 = vpop.f32.mrf.mxu0
      %v2199 = vadd.f32 %v1997, %v2198
      %2200 = vmatmul.f32.gmra.mxu0 %v2085
      %v2201 = vpop.f32.mrf.mxu0
      %v2202 = vadd.f32 %v1997, %v2201
      %2203 = vmatmul.f32.gmra.mxu0 %v2088
      %v2204 = vpop.f32.mrf.mxu0
      %v2205 = vadd.f32 %v1997, %v2204
      %2206 = vmatmul.f32.gmra.mxu0 %v2091
      %v2207 = vpop.f32.mrf.mxu0
      %v2208 = vadd.f32 %v1997, %v2207
      %2209 = vmatmul.f32.gmra.mxu0 %v2094
      %v2210 = vpop.f32.mrf.mxu0
      %v2211 = vadd.f32 %v1997, %v2210
      %2212 = vdwg.mxu0
      %vm2213 = vcmask 64512
      %2214 = vst.msk [vmem:[%s235] sm:$0xff] %vm2213, %v2118
      %2215 = vst.msk [vmem:[%s235 + $0x8] sm:$0xff] %vm2213, %v2121
      %2216 = vst.msk [vmem:[%s235 + $0x10] sm:$0xff] %vm2213, %v2124
      %2217 = vst.msk [vmem:[%s235 + $0x18] sm:$0xff] %vm2213, %v2127
      %2218 = vst.msk [vmem:[%s235 + $0x20] sm:$0xff] %vm2213, %v2130
      %2219 = vst.msk [vmem:[%s235 + $0x28] sm:$0xff] %vm2213, %v2133
      %2220 = vst.msk [vmem:[%s235 + $0x30] sm:$0xff] %vm2213, %v2136
      %2221 = vst.msk [vmem:[%s235 + $0x38] sm:$0xff] %vm2213, %v2139
      %2222 = vst.msk [vmem:[%s235 + $0x40] sm:$0xff] %vm2213, %v2142
      %2223 = vst.msk [vmem:[%s235 + $0x48] sm:$0xff] %vm2213, %v2145
      %2224 = vst.msk [vmem:[%s235 + $0x50] sm:$0xff] %vm2213, %v2148
      %2225 = vst.msk [vmem:[%s235 + $0x58] sm:$0xff] %vm2213, %v2151
      %2226 = vst.msk [vmem:[%s235 + $0x60] sm:$0xff] %vm2213, %v2154
      %2227 = vst.msk [vmem:[%s235 + $0x68] sm:$0xff] %vm2213, %v2157
      %2228 = vst.msk [vmem:[%s235 + $0x70] sm:$0xff] %vm2213, %v2160
      %2229 = vst.msk [vmem:[%s235 + $0x78] sm:$0xff] %vm2213, %v2163
      %2230 = vst.msk [vmem:[%s235 + $0x80] sm:$0xff] %vm2213, %v2166
      %2231 = vst.msk [vmem:[%s235 + $0x88] sm:$0xff] %vm2213, %v2169
      %2232 = vst.msk [vmem:[%s235 + $0x90] sm:$0xff] %vm2213, %v2172
      %2233 = vst.msk [vmem:[%s235 + $0x98] sm:$0xff] %vm2213, %v2175
      %2234 = vst.msk [vmem:[%s235 + $0xa0] sm:$0xff] %vm2213, %v2178
      %2235 = vst.msk [vmem:[%s235 + $0xa8] sm:$0xff] %vm2213, %v2181
      %2236 = vst.msk [vmem:[%s235 + $0xb0] sm:$0xff] %vm2213, %v2184
      %2237 = vst.msk [vmem:[%s235 + $0xb8] sm:$0xff] %vm2213, %v2187
      %2238 = vst.msk [vmem:[%s235 + $0xc0] sm:$0xff] %vm2213, %v2190
      %2239 = vst.msk [vmem:[%s235 + $0xc8] sm:$0xff] %vm2213, %v2193
      %2240 = vst.msk [vmem:[%s235 + $0xd0] sm:$0xff] %vm2213, %v2196
      %2241 = vst.msk [vmem:[%s235 + $0xd8] sm:$0xff] %vm2213, %v2199
      %2242 = vst.msk [vmem:[%s235 + $0xe0] sm:$0xff] %vm2213, %v2202
      %2243 = vst.msk [vmem:[%s235 + $0xe8] sm:$0xff] %vm2213, %v2205
      %2244 = vst.msk [vmem:[%s235 + $0xf0] sm:$0xff] %vm2213, %v2208
      %2245 = vst.msk [vmem:[%s235 + $0xf8] sm:$0xff] %vm2213, %v2211
      %v2246 = vsel %vm2213, %v2118, 0.0
      %v2247 = vsel %vm2213, %v2121, 0.0
      %v2248 = vadd.f32 %v2246, %v2247
      %v2249 = vsel %vm2213, %v2124, 0.0
      %v2250 = vadd.f32 %v2248, %v2249
      %v2251 = vsel %vm2213, %v2127, 0.0
      %v2252 = vadd.f32 %v2250, %v2251
      %v2253 = vsel %vm2213, %v2130, 0.0
      %v2254 = vadd.f32 %v2252, %v2253
      %v2255 = vsel %vm2213, %v2133, 0.0
      %v2256 = vadd.f32 %v2254, %v2255
      %v2257 = vsel %vm2213, %v2136, 0.0
      %v2258 = vadd.f32 %v2256, %v2257
      %v2259 = vsel %vm2213, %v2139, 0.0
      %v2260 = vadd.f32 %v2258, %v2259
      %v2261 = vsel %vm2213, %v2142, 0.0
      %v2262 = vadd.f32 %v2260, %v2261
      %v2263 = vsel %vm2213, %v2145, 0.0
      %v2264 = vadd.f32 %v2262, %v2263
      %v2265 = vsel %vm2213, %v2148, 0.0
      %v2266 = vadd.f32 %v2264, %v2265
      %v2267 = vsel %vm2213, %v2151, 0.0
      %v2268 = vadd.f32 %v2266, %v2267
      %v2269 = vsel %vm2213, %v2154, 0.0
      %v2270 = vadd.f32 %v2268, %v2269
      %v2271 = vsel %vm2213, %v2157, 0.0
      %v2272 = vadd.f32 %v2270, %v2271
      %v2273 = vsel %vm2213, %v2160, 0.0
      %v2274 = vadd.f32 %v2272, %v2273
      %v2275 = vsel %vm2213, %v2163, 0.0
      %v2276 = vadd.f32 %v2274, %v2275
      %v2277 = vsel %vm2213, %v2166, 0.0
      %v2278 = vadd.f32 %v2276, %v2277
      %v2279 = vsel %vm2213, %v2169, 0.0
      %v2280 = vadd.f32 %v2278, %v2279
      %v2281 = vsel %vm2213, %v2172, 0.0
      %v2282 = vadd.f32 %v2280, %v2281
      %v2283 = vsel %vm2213, %v2175, 0.0
      %v2284 = vadd.f32 %v2282, %v2283
      %v2285 = vsel %vm2213, %v2178, 0.0
      %v2286 = vadd.f32 %v2284, %v2285
      %v2287 = vsel %vm2213, %v2181, 0.0
      %v2288 = vadd.f32 %v2286, %v2287
      %v2289 = vsel %vm2213, %v2184, 0.0
      %v2290 = vadd.f32 %v2288, %v2289
      %v2291 = vsel %vm2213, %v2187, 0.0
      %v2292 = vadd.f32 %v2290, %v2291
      %v2293 = vsel %vm2213, %v2190, 0.0
      %v2294 = vadd.f32 %v2292, %v2293
      %v2295 = vsel %vm2213, %v2193, 0.0
      %v2296 = vadd.f32 %v2294, %v2295
      %v2297 = vsel %vm2213, %v2196, 0.0
      %v2298 = vadd.f32 %v2296, %v2297
      %v2299 = vsel %vm2213, %v2199, 0.0
      %v2300 = vadd.f32 %v2298, %v2299
      %v2301 = vsel %vm2213, %v2202, 0.0
      %v2302 = vadd.f32 %v2300, %v2301
      %v2303 = vsel %vm2213, %v2205, 0.0
      %v2304 = vadd.f32 %v2302, %v2303
      %v2305 = vsel %vm2213, %v2208, 0.0
      %v2306 = vadd.f32 %v2304, %v2305
      %v2307 = vsel %vm2213, %v2211, 0.0
      %v2308 = vadd.f32 %v2306, %v2307
      %v2309 = vrot.slane %v2308, 4
      %v2310 = vadd.f32 %v2308, %v2309
      %v2311 = vrot.slane %v2310, 2
      %v2312 = vadd.f32 %v2310, %v2311
      %v2313 = vrot.slane %v2312, 1
      %v2314 = vadd.f32 %v2312, %v2313
      %vm2315 = vcmask 57344
      %2316 = vst.msk [vmem:[%s238] sm:$0x1] %vm2315, %v2314
      %v2317 = vmul.f32 %v2118, %v2118
      %v2318 = vmul.f32 %v2121, %v2121
      %v2319 = vmul.f32 %v2124, %v2124
      %v2320 = vmul.f32 %v2127, %v2127
      %v2321 = vmul.f32 %v2130, %v2130
      %v2322 = vmul.f32 %v2133, %v2133
      %v2323 = vmul.f32 %v2136, %v2136
      %v2324 = vmul.f32 %v2139, %v2139
      %v2325 = vmul.f32 %v2142, %v2142
      %v2326 = vmul.f32 %v2145, %v2145
      %v2327 = vmul.f32 %v2148, %v2148
      %v2328 = vmul.f32 %v2151, %v2151
      %v2329 = vmul.f32 %v2154, %v2154
      %v2330 = vmul.f32 %v2157, %v2157
      %v2331 = vmul.f32 %v2160, %v2160
      %v2332 = vmul.f32 %v2163, %v2163
      %v2333 = vmul.f32 %v2166, %v2166
      %v2334 = vmul.f32 %v2169, %v2169
      %v2335 = vmul.f32 %v2172, %v2172
      %v2336 = vmul.f32 %v2175, %v2175
      %v2337 = vmul.f32 %v2178, %v2178
      %v2338 = vmul.f32 %v2181, %v2181
      %v2339 = vmul.f32 %v2184, %v2184
      %v2340 = vmul.f32 %v2187, %v2187
      %v2341 = vmul.f32 %v2190, %v2190
      %v2342 = vmul.f32 %v2193, %v2193
      %v2343 = vmul.f32 %v2196, %v2196
      %v2344 = vmul.f32 %v2199, %v2199
      %v2345 = vmul.f32 %v2202, %v2202
      %v2346 = vmul.f32 %v2205, %v2205
      %v2347 = vmul.f32 %v2208, %v2208
      %v2348 = vmul.f32 %v2211, %v2211
      %v2349 = vsel %vm2213, %v2317, 0.0
      %v2350 = vsel %vm2213, %v2318, 0.0
      %v2351 = vadd.f32 %v2349, %v2350
      %v2352 = vsel %vm2213, %v2319, 0.0
      %v2353 = vadd.f32 %v2351, %v2352
      %v2354 = vsel %vm2213, %v2320, 0.0
      %v2355 = vadd.f32 %v2353, %v2354
      %v2356 = vsel %vm2213, %v2321, 0.0
      %v2357 = vadd.f32 %v2355, %v2356
      %v2358 = vsel %vm2213, %v2322, 0.0
      %v2359 = vadd.f32 %v2357, %v2358
      %v2360 = vsel %vm2213, %v2323, 0.0
      %v2361 = vadd.f32 %v2359, %v2360
      %v2362 = vsel %vm2213, %v2324, 0.0
      %v2363 = vadd.f32 %v2361, %v2362
      %v2364 = vsel %vm2213, %v2325, 0.0
      %v2365 = vadd.f32 %v2363, %v2364
      %v2366 = vsel %vm2213, %v2326, 0.0
      %v2367 = vadd.f32 %v2365, %v2366
      %v2368 = vsel %vm2213, %v2327, 0.0
      %v2369 = vadd.f32 %v2367, %v2368
      %v2370 = vsel %vm2213, %v2328, 0.0
      %v2371 = vadd.f32 %v2369, %v2370
      %v2372 = vsel %vm2213, %v2329, 0.0
      %v2373 = vadd.f32 %v2371, %v2372
      %v2374 = vsel %vm2213, %v2330, 0.0
      %v2375 = vadd.f32 %v2373, %v2374
      %v2376 = vsel %vm2213, %v2331, 0.0
      %v2377 = vadd.f32 %v2375, %v2376
      %v2378 = vsel %vm2213, %v2332, 0.0
      %v2379 = vadd.f32 %v2377, %v2378
      %v2380 = vsel %vm2213, %v2333, 0.0
      %v2381 = vadd.f32 %v2379, %v2380
      %v2382 = vsel %vm2213, %v2334, 0.0
      %v2383 = vadd.f32 %v2381, %v2382
      %v2384 = vsel %vm2213, %v2335, 0.0
      %v2385 = vadd.f32 %v2383, %v2384
      %v2386 = vsel %vm2213, %v2336, 0.0
      %v2387 = vadd.f32 %v2385, %v2386
      %v2388 = vsel %vm2213, %v2337, 0.0
      %v2389 = vadd.f32 %v2387, %v2388
      %v2390 = vsel %vm2213, %v2338, 0.0
      %v2391 = vadd.f32 %v2389, %v2390
      %v2392 = vsel %vm2213, %v2339, 0.0
      %v2393 = vadd.f32 %v2391, %v2392
      %v2394 = vsel %vm2213, %v2340, 0.0
      %v2395 = vadd.f32 %v2393, %v2394
      %v2396 = vsel %vm2213, %v2341, 0.0
      %v2397 = vadd.f32 %v2395, %v2396
      %v2398 = vsel %vm2213, %v2342, 0.0
      %v2399 = vadd.f32 %v2397, %v2398
      %v2400 = vsel %vm2213, %v2343, 0.0
      %v2401 = vadd.f32 %v2399, %v2400
      %v2402 = vsel %vm2213, %v2344, 0.0
      %v2403 = vadd.f32 %v2401, %v2402
      %v2404 = vsel %vm2213, %v2345, 0.0
      %v2405 = vadd.f32 %v2403, %v2404
      %v2406 = vsel %vm2213, %v2346, 0.0
      %v2407 = vadd.f32 %v2405, %v2406
      %v2408 = vsel %vm2213, %v2347, 0.0
      %v2409 = vadd.f32 %v2407, %v2408
      %v2410 = vsel %vm2213, %v2348, 0.0
      %v2411 = vadd.f32 %v2409, %v2410
      %v2412 = vrot.slane %v2411, 4
      %v2413 = vadd.f32 %v2411, %v2412
      %v2414 = vrot.slane %v2413, 2
      %v2415 = vadd.f32 %v2413, %v2414
      %v2416 = vrot.slane %v2415, 1
      %v2417 = vadd.f32 %v2415, %v2416
      %2418 = vst.msk [vmem:[%s241] sm:$0x1] %vm2315, %v2417
      %p2419 = scmp.lt.s32.totalorder %s17, 1
      %s2420 = scalar_select %p2419, %s17, 1
      %s2421 = smul.addr %s2420, 32
      %s2422 = smul.addr %s2421, 8
      %s2423 = scalar_lea.vmem %s3, %s2422
      %p2424 = scmp.lt.s32.totalorder %s17, 1
      %s2425 = scalar_select %p2424, %s17, 1
      %s2426 = scalar_lea.vmem %s4, %s2425
      %p2427 = scmp.lt.s32.totalorder %s17, 1
      %s2428 = scalar_select %p2427, %s17, 1
      %s2429 = scalar_lea.vmem %s5, %s2428
      // Predicated region
      $region33: #{double_conv_forward.3} parent=31 // pred_check
        %p2430 = pneg %p103
      $region34: #{double_conv_forward.3} parent=31 // pred_check_branch
        %2432 = sbr.rel (%p2430) target = $region36
      $region35: #{double_conv_forward.3} parent=31 // pred_region
        _
      $region36: #{double_conv_forward.3} parent=31 // pred_fallthru
        _
      // Predicated region
      $region37: #{double_conv_forward.3} parent=31 // pred_check
        %p2433 = pneg %p129
      $region38: #{double_conv_forward.3} parent=31 // pred_check_branch
        %2435 = sbr.rel (%p2433) target = $region40
      $region39: #{double_conv_forward.3} parent=31 // pred_region
        _
      $region40: #{double_conv_forward.3} parent=31 // pred_fallthru
        _
      // Predicated region
      $region41: #{double_conv_forward.3} parent=31 // pred_check
        %p2436 = pneg %p155
      $region42: #{double_conv_forward.3} parent=31 // pred_check_branch
        %2438 = sbr.rel (%p2436) target = $region44
      $region43: #{double_conv_forward.3} parent=31 // pred_region
        _
      $region44: #{double_conv_forward.3} parent=31 // pred_fallthru
        _
    $region32: #{double_conv_forward.3} parent=5 // pred_fallthru
      _
    %p2439 = scmp.le.s32.totalorder 2, %s12
    // Predicated region
    $region45: #{double_conv_forward.3} parent=5 // pred_check
      %p2440 = pneg %p2439
    $region46: #{double_conv_forward.3} parent=5 // pred_check_branch
      %2442 = sbr.rel (%p2440) target = $region48
    $region47: #{double_conv_forward.3} parent=5 // pred_region
      %s2443 = ssub.s32 %s12, 2
      // Predicated region
      $region49: #{double_conv_forward.3} parent=47 // pred_check
        %p2444 = pneg %p109
      $region50: #{double_conv_forward.3} parent=47 // pred_check_branch
        %2446 = sbr.rel (%p2444) target = $region52
      $region51: #{double_conv_forward.3} parent=47 // pred_region
        %p2447 = scmp.lt.s32.totalorder %s18, 1
        %s2448 = scalar_select %p2447, %s18, 1
        %s2449 = smul.addr %s2448, 32
        %s2450 = smul.addr %s2449, 8
        %s2451 = scalar_lea.vmem %s3, %s2450
      $region52: #{double_conv_forward.3} parent=47 // pred_fallthru
        _
      // Predicated region
      $region53: #{double_conv_forward.3} parent=47 // pred_check
        %p2452 = pneg %p135
      $region54: #{double_conv_forward.3} parent=47 // pred_check_branch
        %2454 = sbr.rel (%p2452) target = $region56
      $region55: #{double_conv_forward.3} parent=47 // pred_region
        %p2455 = scmp.lt.s32.totalorder %s18, 1
        %s2456 = scalar_select %p2455, %s18, 1
        %s2457 = scalar_lea.vmem %s4, %s2456
      $region56: #{double_conv_forward.3} parent=47 // pred_fallthru
        _
      // Predicated region
      $region57: #{double_conv_forward.3} parent=47 // pred_check
        %p2458 = pneg %p161
      $region58: #{double_conv_forward.3} parent=47 // pred_check_branch
        %2460 = sbr.rel (%p2458) target = $region60
      $region59: #{double_conv_forward.3} parent=47 // pred_region
        %p2461 = scmp.lt.s32.totalorder %s18, 1
        %s2462 = scalar_select %p2461, %s18, 1
        %s2463 = scalar_lea.vmem %s5, %s2462
      $region60: #{double_conv_forward.3} parent=47 // pred_fallthru
        _
    $region48: #{double_conv_forward.3} parent=5 // pred_fallthru
      _
  $region6: #{double_conv_forward.3} parent=0 // loop_footer
    %s16 = sadd.s32 1, %s12
  $region7: #{double_conv_forward.3} parent=0 // loop_footer_branch
    %11 = sbr.rel target = $region3
  $region8: #{double_conv_forward.3} parent=0 // loop_exit
    _

// kernel: double_conv_forward.4
$region0: #{double_conv_forward.4}
  #allocation0 [shape = 'u32[]', space=smem, size = 0x4, offset = 0x4, fixed_abs, tag = 'smem constant byte address 0x4 - core index']
  #allocation1 [shape = 'u32[72,128]{1,0:T(1,128)}', space=vmem, size = 0x9000, scoped, tag = 'internal scratch']
  #allocation2 [shape = 'f32[18,18,8]{2,1,0:T(8,128)}', space=vmem, size = 0x36000, scoped, tag = 'scratch operand']
  #allocation3 [shape = 'f32[256,72]{1,0:T(8,128)}', space=vmem, size = 0x20000, scoped, tag = 'scratch operand']
  %s0 = inlined_call_operand.vmem [shape: f32[2,256,8], index: 0, kind: input, shape index: {}]
  %s1 = inlined_call_operand.vmem [shape: f32[1,8], index: 1, kind: input, shape index: {}]
  %s2 = inlined_call_operand.vmem [shape: f32[1,8], index: 2, kind: input, shape index: {}]
  %s3 = inlined_call_operand.vmem [shape: f32[72,8], index: 3, kind: input, shape index: {}]
  %s4 = inlined_call_operand.vmem [shape: f32[1,8], index: 4, kind: input, shape index: {}]
  %s5 = inlined_call_operand.vmem [shape: f32[2,256,8], index: 5, kind: output, shape index: {0}]
  %s6 = inlined_call_operand.vmem [shape: f32[2,1,8], index: 6, kind: output, shape index: {1}]
  %s7 = inlined_call_operand.vmem [shape: f32[2,1,8], index: 7, kind: output, shape index: {2}]
  %8 = xla_tuple %s5, %s6, %s7
  %s9 = sld [smem:[#allocation0]]
  $region69: #{double_conv_forward.4} parent=0
    _
  %s11 = ssub.s32 1, %s9
  %s12 = scalar_select 0, %s11, %s9
  loop: start=0, step=1, limit=4
  $region2: #{double_conv_forward.4} parent=0 // loop_pre_header
    _
  $region3: #{double_conv_forward.4} parent=0 // loop_header
    %s14 = sphi 0, %s18
    %p15 = scmp.ge.s32.totalorder %s14, 4
    %s24 = sphi 0, %s26
    %s27 = sphi 0, %s24
    %s28 = sphi 0, %s27
    %s44 = sphi 0, %s28
    %s48 = sphi 0, %s48
    %s50 = sphi 0, %s48
    %s51 = sphi 0, %s50
    %s65 = sphi 0, %s51
    %s69 = sphi 0, %s69
    %s71 = sphi 0, %s69
    %s72 = sphi 0, %s71
    %s86 = sphi 0, %s72
    %s90 = sphi 0, %s90
    %s92 = sphi 0, %s90
    %s93 = sphi 0, %s92
    %s107 = sphi 0, %s93
    %s111 = sphi 0, %s111
    %s113 = sphi 0, %s111
    %s114 = sphi 0, %s113
    %s128 = sphi 0, %s114
    %s134 = sphi 0, %s136
    %s137 = sphi 0, %s134
    %s138 = sphi 0, %s137
    %s154 = sphi 0, %s138
    %s160 = sphi 0, %s162
    %s163 = sphi 0, %s160
    %s164 = sphi 0, %s163
    %s180 = sphi 0, %s164
    %s186 = sphi 0, %s188
    %s189 = sphi 0, %s186
    %s190 = sphi 0, %s189
    %s206 = sphi 0, %s190
  $region4: #{double_conv_forward.4} parent=0 // loop_header_branch
    %17 = sbr.rel (%p15) target = $region8
  $region5: #{double_conv_forward.4} parent=0 // loop_body
    %s19 = ssub.s32 %s14, 1
    %s20 = ssub.s32 %s14, 2
    %s21 = sadd.s32 %s14, 1
    %s22 = ssub.s32 %s14, %s21
    %p23 = scmp.eq.s32.totalorder %s22, 0
    %s25 = sadd.s32 %s24, 1
    %s26 = scalar_select %p23, %s24, %s25
    %p29 = pneg %p23
    %p30 = scmp.eq.s32.totalorder %s14, 1
    %p31 = por %p29, %p30
    %p32 = scmp.ne.s32.totalorder %s24, %s27
    %p33 = scmp.eq.s32.totalorder %s14, 0
    %p34 = por %p32, %p33
    %p35 = scmp.ne.s32.totalorder %s24, %s27
    %p36 = scmp.eq.s32.totalorder %s19, 1
    %p37 = por %p35, %p36
    %p38 = scmp.ne.s32.totalorder %s27, %s28
    %p39 = scmp.eq.s32.totalorder %s19, 0
    %p40 = por %p38, %p39
    %p41 = scmp.ne.s32.totalorder %s27, %s28
    %p42 = scmp.eq.s32.totalorder %s20, 1
    %p43 = por %p41, %p42
    %p45 = scmp.ne.s32.totalorder %s28, %s44
    %p46 = scmp.eq.s32.totalorder %s20, 0
    %p47 = por %p45, %p46
    %s49 = sadd.s32 %s48, 1
    %p52 = scmp.eq.s32.totalorder %s14, 1
    %p53 = scmp.ne.s32.totalorder %s48, %s50
    %p54 = scmp.eq.s32.totalorder %s14, 0
    %p55 = por %p53, %p54
    %p56 = scmp.ne.s32.totalorder %s48, %s50
    %p57 = scmp.eq.s32.totalorder %s19, 1
    %p58 = por %p56, %p57
    %p59 = scmp.ne.s32.totalorder %s50, %s51
    %p60 = scmp.eq.s32.totalorder %s19, 0
    %p61 = por %p59, %p60
    %p62 = scmp.ne.s32.totalorder %s50, %s51
    %p63 = scmp.eq.s32.totalorder %s20, 1
    %p64 = por %p62, %p63
    %p66 = scmp.ne.s32.totalorder %s51, %s65
    %p67 = scmp.eq.s32.totalorder %s20, 0
    %p68 = por %p66, %p67
    %s70 = sadd.s32 %s69, 1
    %p73 = scmp.eq.s32.totalorder %s14, 1
    %p74 = scmp.ne.s32.totalorder %s69, %s71
    %p75 = scmp.eq.s32.totalorder %s14, 0
    %p76 = por %p74, %p75
    %p77 = scmp.ne.s32.totalorder %s69, %s71
    %p78 = scmp.eq.s32.totalorder %s19, 1
    %p79 = por %p77, %p78
    %p80 = scmp.ne.s32.totalorder %s71, %s72
    %p81 = scmp.eq.s32.totalorder %s19, 0
    %p82 = por %p80, %p81
    %p83 = scmp.ne.s32.totalorder %s71, %s72
    %p84 = scmp.eq.s32.totalorder %s20, 1
    %p85 = por %p83, %p84
    %p87 = scmp.ne.s32.totalorder %s72, %s86
    %p88 = scmp.eq.s32.totalorder %s20, 0
    %p89 = por %p87, %p88
    %s91 = sadd.s32 %s90, 1
    %p94 = scmp.eq.s32.totalorder %s14, 1
    %p95 = scmp.ne.s32.totalorder %s90, %s92
    %p96 = scmp.eq.s32.totalorder %s14, 0
    %p97 = por %p95, %p96
    %p98 = scmp.ne.s32.totalorder %s90, %s92
    %p99 = scmp.eq.s32.totalorder %s19, 1
    %p100 = por %p98, %p99
    %p101 = scmp.ne.s32.totalorder %s92, %s93
    %p102 = scmp.eq.s32.totalorder %s19, 0
    %p103 = por %p101, %p102
    %p104 = scmp.ne.s32.totalorder %s92, %s93
    %p105 = scmp.eq.s32.totalorder %s20, 1
    %p106 = por %p104, %p105
    %p108 = scmp.ne.s32.totalorder %s93, %s107
    %p109 = scmp.eq.s32.totalorder %s20, 0
    %p110 = por %p108, %p109
    %s112 = sadd.s32 %s111, 1
    %p115 = scmp.eq.s32.totalorder %s14, 1
    %p116 = scmp.ne.s32.totalorder %s111, %s113
    %p117 = scmp.eq.s32.totalorder %s14, 0
    %p118 = por %p116, %p117
    %p119 = scmp.ne.s32.totalorder %s111, %s113
    %p120 = scmp.eq.s32.totalorder %s19, 1
    %p121 = por %p119, %p120
    %p122 = scmp.ne.s32.totalorder %s113, %s114
    %p123 = scmp.eq.s32.totalorder %s19, 0
    %p124 = por %p122, %p123
    %p125 = scmp.ne.s32.totalorder %s113, %s114
    %p126 = scmp.eq.s32.totalorder %s20, 1
    %p127 = por %p125, %p126
    %p129 = scmp.ne.s32.totalorder %s114, %s128
    %p130 = scmp.eq.s32.totalorder %s20, 0
    %p131 = por %p129, %p130
    %s132 = ssub.s32 %s14, %s21
    %p133 = scmp.eq.s32.totalorder %s132, 0
    %s135 = sadd.s32 %s134, 1
    %s136 = scalar_select %p133, %s134, %s135
    %p139 = pneg %p133
    %p140 = scmp.eq.s32.totalorder %s14, 1
    %p141 = por %p139, %p140
    %p142 = scmp.ne.s32.totalorder %s134, %s137
    %p143 = scmp.eq.s32.totalorder %s14, 0
    %p144 = por %p142, %p143
    %p145 = scmp.ne.s32.totalorder %s134, %s137
    %p146 = scmp.eq.s32.totalorder %s19, 1
    %p147 = por %p145, %p146
    %p148 = scmp.ne.s32.totalorder %s137, %s138
    %p149 = scmp.eq.s32.totalorder %s19, 0
    %p150 = por %p148, %p149
    %p151 = scmp.ne.s32.totalorder %s137, %s138
    %p152 = scmp.eq.s32.totalorder %s20, 1
    %p153 = por %p151, %p152
    %p155 = scmp.ne.s32.totalorder %s138, %s154
    %p156 = scmp.eq.s32.totalorder %s20, 0
    %p157 = por %p155, %p156
    %s158 = ssub.s32 %s14, %s21
    %p159 = scmp.eq.s32.totalorder %s158, 0
    %s161 = sadd.s32 %s160, 1
    %s162 = scalar_select %p159, %s160, %s161
    %p165 = pneg %p159
    %p166 = scmp.eq.s32.totalorder %s14, 1
    %p167 = por %p165, %p166
    %p168 = scmp.ne.s32.totalorder %s160, %s163
    %p169 = scmp.eq.s32.totalorder %s14, 0
    %p170 = por %p168, %p169
    %p171 = scmp.ne.s32.totalorder %s160, %s163
    %p172 = scmp.eq.s32.totalorder %s19, 1
    %p173 = por %p171, %p172
    %p174 = scmp.ne.s32.totalorder %s163, %s164
    %p175 = scmp.eq.s32.totalorder %s19, 0
    %p176 = por %p174, %p175
    %p177 = scmp.ne.s32.totalorder %s163, %s164
    %p178 = scmp.eq.s32.totalorder %s20, 1
    %p179 = por %p177, %p178
    %p181 = scmp.ne.s32.totalorder %s164, %s180
    %p182 = scmp.eq.s32.totalorder %s20, 0
    %p183 = por %p181, %p182
    %s184 = ssub.s32 %s14, %s21
    %p185 = scmp.eq.s32.totalorder %s184, 0
    %s187 = sadd.s32 %s186, 1
    %s188 = scalar_select %p185, %s186, %s187
    %p191 = pneg %p185
    %p192 = scmp.eq.s32.totalorder %s14, 1
    %p193 = por %p191, %p192
    %p194 = scmp.ne.s32.totalorder %s186, %s189
    %p195 = scmp.eq.s32.totalorder %s14, 0
    %p196 = por %p194, %p195
    %p197 = scmp.ne.s32.totalorder %s186, %s189
    %p198 = scmp.eq.s32.totalorder %s19, 1
    %p199 = por %p197, %p198
    %p200 = scmp.ne.s32.totalorder %s189, %s190
    %p201 = scmp.eq.s32.totalorder %s19, 0
    %p202 = por %p200, %p201
    %p203 = scmp.ne.s32.totalorder %s189, %s190
    %p204 = scmp.eq.s32.totalorder %s20, 1
    %p205 = por %p203, %p204
    %p207 = scmp.ne.s32.totalorder %s190, %s206
    %p208 = scmp.eq.s32.totalorder %s20, 0
    %p209 = por %p207, %p208
    %p210 = scmp.le.s32.totalorder 1, %s14
    %p211 = scmp.lt.s32.totalorder %s14, 3
    %p212 = pnand %p210, %p211
    %p213 = pneg %p212
    // Predicated region
    $region9: #{double_conv_forward.4} parent=5 // pred_check
      _
    $region10: #{double_conv_forward.4} parent=5 // pred_check_branch
      %215 = sbr.rel (%p212) target = $region12
    $region11: #{double_conv_forward.4} parent=5 // pred_region
      %s216 = ssub.s32 %s14, 1
      // Predicated region
      $region13: #{double_conv_forward.4} parent=11 // pred_check
        %p217 = pneg %p61
      $region14: #{double_conv_forward.4} parent=11 // pred_check_branch
        %219 = sbr.rel (%p217) target = $region16
      $region15: #{double_conv_forward.4} parent=11 // pred_region
        _
      $region16: #{double_conv_forward.4} parent=11 // pred_fallthru
        _
      // Predicated region
      $region17: #{double_conv_forward.4} parent=11 // pred_check
        %p220 = pneg %p82
      $region18: #{double_conv_forward.4} parent=11 // pred_check_branch
        %222 = sbr.rel (%p220) target = $region20
      $region19: #{double_conv_forward.4} parent=11 // pred_region
        _
      $region20: #{double_conv_forward.4} parent=11 // pred_fallthru
        _
      // Predicated region
      $region21: #{double_conv_forward.4} parent=11 // pred_check
        %p223 = pneg %p103
      $region22: #{double_conv_forward.4} parent=11 // pred_check_branch
        %225 = sbr.rel (%p223) target = $region24
      $region23: #{double_conv_forward.4} parent=11 // pred_region
        _
      $region24: #{double_conv_forward.4} parent=11 // pred_fallthru
        _
      // Predicated region
      $region25: #{double_conv_forward.4} parent=11 // pred_check
        %p226 = pneg %p124
      $region26: #{double_conv_forward.4} parent=11 // pred_check_branch
        %228 = sbr.rel (%p226) target = $region28
      $region27: #{double_conv_forward.4} parent=11 // pred_region
        _
      $region28: #{double_conv_forward.4} parent=11 // pred_fallthru
        _
    $region12: #{double_conv_forward.4} parent=5 // pred_fallthru
      _
    %p229 = scmp.lt.s32.totalorder %s14, 2
    // Predicated region
    $region29: #{double_conv_forward.4} parent=5 // pred_check
      %p230 = pneg %p229
    $region30: #{double_conv_forward.4} parent=5 // pred_check_branch
      %232 = sbr.rel (%p230) target = $region32
    $region31: #{double_conv_forward.4} parent=5 // pred_region
      // Predicated region
      $region33: #{double_conv_forward.4} parent=31 // pred_check
        %p233 = pneg %p34
      $region34: #{double_conv_forward.4} parent=31 // pred_check_branch
        %235 = sbr.rel (%p233) target = $region36
      $region35: #{double_conv_forward.4} parent=31 // pred_region
        %p236 = scmp.lt.s32.totalorder %s14, 1
        %s237 = scalar_select %p236, %s14, 1
        %s238 = smul.addr %s237, 32
        %s239 = smul.addr %s238, 8
        %s240 = scalar_lea.vmem %s0, %s239
      $region36: #{double_conv_forward.4} parent=31 // pred_fallthru
        _
    $region32: #{double_conv_forward.4} parent=5 // pred_fallthru
      _
    %p241 = scmp.le.s32.totalorder 1, %s14
    %p242 = scmp.lt.s32.totalorder %s14, 3
    %p243 = pnand %p241, %p242
    %p244 = pneg %p243
    // Predicated region
    $region37: #{double_conv_forward.4} parent=5 // pred_check
      _
    $region38: #{double_conv_forward.4} parent=5 // pred_check_branch
      %246 = sbr.rel (%p243) target = $region40
    $region39: #{double_conv_forward.4} parent=5 // pred_region
      %s247 = ssub.s32 %s14, 1
      %p248 = scmp.lt.s32.totalorder %s19, 1
      %s249 = scalar_select %p248, %s19, 1
      %s250 = smul.addr %s249, 32
      %s251 = smul.addr %s250, 8
      %s252 = scalar_lea.vmem %s0, %s251
      %p253 = pneg %p40
      %p254 = pneg %p37
      %p255 = pneg %p61
      %p256 = pneg %p58
      %p257 = pneg %p82
      %p258 = pneg %p79
      %p259 = pneg %p103
      %p260 = pneg %p100
      %p261 = pneg %p124
      %p262 = pneg %p121
      %p263 = pneg %p150
      %p264 = pneg %p147
      %p265 = scmp.lt.s32.totalorder %s19, 1
      %s266 = scalar_select %p265, %s19, 1
      %s267 = smul.addr %s266, 32
      %s268 = smul.addr %s267, 8
      %s269 = scalar_lea.vmem %s5, %s268
      %p270 = pneg %p176
      %p271 = pneg %p173
      %p272 = scmp.lt.s32.totalorder %s19, 1
      %s273 = scalar_select %p272, %s19, 1
      %s274 = scalar_lea.vmem %s6, %s273
      %p275 = pneg %p202
      %p276 = pneg %p199
      %p277 = scmp.lt.s32.totalorder %s19, 1
      %s278 = scalar_select %p277, %s19, 1
      %s279 = scalar_lea.vmem %s7, %s278
      %p280 = scmp.lt.s32.totalorder %s19, 1
      %s281 = scalar_select %p280, %s19, 1
      %s282 = smul.addr %s281, 32
      %s283 = smul.addr %s282, 8
      %s284 = scalar_lea.vmem %s0, %s283
      %p285 = scmp.lt.s32.totalorder %s19, 1
      %s286 = scalar_select %p285, %s19, 1
      %s287 = smul.addr %s286, 32
      %s288 = smul.addr %s287, 8
      %s289 = scalar_lea.vmem %s5, %s288
      %p290 = scmp.lt.s32.totalorder %s19, 1
      %s291 = scalar_select %p290, %s19, 1
      %s292 = scalar_lea.vmem %s6, %s291
      %p293 = scmp.lt.s32.totalorder %s19, 1
      %s294 = scalar_select %p293, %s19, 1
      %s295 = scalar_lea.vmem %s7, %s294
      %v296 = vld [vmem:[%s284] sm:$0xff]
      %v297 = vld [vmem:[%s284 + $0x8] sm:$0xff]
      %v298 = vld [vmem:[%s284 + $0x10] sm:$0xff]
      %v299 = vld [vmem:[%s284 + $0x18] sm:$0xff]
      %v300 = vld [vmem:[%s284 + $0x20] sm:$0xff]
      %v301 = vld [vmem:[%s284 + $0x28] sm:$0xff]
      %v302 = vld [vmem:[%s284 + $0x30] sm:$0xff]
      %v303 = vld [vmem:[%s284 + $0x38] sm:$0xff]
      %v304 = vld [vmem:[%s284 + $0x40] sm:$0xff]
      %v305 = vld [vmem:[%s284 + $0x48] sm:$0xff]
      %v306 = vld [vmem:[%s284 + $0x50] sm:$0xff]
      %v307 = vld [vmem:[%s284 + $0x58] sm:$0xff]
      %v308 = vld [vmem:[%s284 + $0x60] sm:$0xff]
      %v309 = vld [vmem:[%s284 + $0x68] sm:$0xff]
      %v310 = vld [vmem:[%s284 + $0x70] sm:$0xff]
      %v311 = vld [vmem:[%s284 + $0x78] sm:$0xff]
      %v312 = vld [vmem:[%s284 + $0x80] sm:$0xff]
      %v313 = vld [vmem:[%s284 + $0x88] sm:$0xff]
      %v314 = vld [vmem:[%s284 + $0x90] sm:$0xff]
      %v315 = vld [vmem:[%s284 + $0x98] sm:$0xff]
      %v316 = vld [vmem:[%s284 + $0xa0] sm:$0xff]
      %v317 = vld [vmem:[%s284 + $0xa8] sm:$0xff]
      %v318 = vld [vmem:[%s284 + $0xb0] sm:$0xff]
      %v319 = vld [vmem:[%s284 + $0xb8] sm:$0xff]
      %v320 = vld [vmem:[%s284 + $0xc0] sm:$0xff]
      %v321 = vld [vmem:[%s284 + $0xc8] sm:$0xff]
      %v322 = vld [vmem:[%s284 + $0xd0] sm:$0xff]
      %v323 = vld [vmem:[%s284 + $0xd8] sm:$0xff]
      %v324 = vld [vmem:[%s284 + $0xe0] sm:$0xff]
      %v325 = vld [vmem:[%s284 + $0xe8] sm:$0xff]
      %v326 = vld [vmem:[%s284 + $0xf0] sm:$0xff]
      %v327 = vld [vmem:[%s284 + $0xf8] sm:$0xff]
      %v328 = vld [vmem:[%s1] sm:$0x1]
      %v330 = vperm.slane %v328, 0
      %v332 = vmul.f32 %v296, %v330
      %v333 = vmul.f32 %v297, %v330
      %v334 = vmul.f32 %v298, %v330
      %v335 = vmul.f32 %v299, %v330
      %v336 = vmul.f32 %v300, %v330
      %v337 = vmul.f32 %v301, %v330
      %v338 = vmul.f32 %v302, %v330
      %v339 = vmul.f32 %v303, %v330
      %v340 = vmul.f32 %v304, %v330
      %v341 = vmul.f32 %v305, %v330
      %v342 = vmul.f32 %v306, %v330
      %v343 = vmul.f32 %v307, %v330
      %v344 = vmul.f32 %v308, %v330
      %v345 = vmul.f32 %v309, %v330
      %v346 = vmul.f32 %v310, %v330
      %v347 = vmul.f32 %v311, %v330
      %v348 = vmul.f32 %v312, %v330
      %v349 = vmul.f32 %v313, %v330
      %v350 = vmul.f32 %v314, %v330
      %v351 = vmul.f32 %v315, %v330
      %v352 = vmul.f32 %v316, %v330
      %v353 = vmul.f32 %v317, %v330
      %v354 = vmul.f32 %v318, %v330
      %v355 = vmul.f32 %v319, %v330
      %v356 = vmul.f32 %v320, %v330
      %v357 = vmul.f32 %v321, %v330
      %v358 = vmul.f32 %v322, %v330
      %v359 = vmul.f32 %v323, %v330
      %v360 = vmul.f32 %v324, %v330
      %v361 = vmul.f32 %v325, %v330
      %v362 = vmul.f32 %v326, %v330
      %v363 = vmul.f32 %v327, %v330
      %v364 = vld [vmem:[%s2] sm:$0x1]
      %v366 = vperm.slane %v364, 0
      %v368 = vadd.f32 %v332, %v366
      %v369 = vadd.f32 %v333, %v366
      %v370 = vadd.f32 %v334, %v366
      %v371 = vadd.f32 %v335, %v366
      %v372 = vadd.f32 %v336, %v366
      %v373 = vadd.f32 %v337, %v366
      %v374 = vadd.f32 %v338, %v366
      %v375 = vadd.f32 %v339, %v366
      %v376 = vadd.f32 %v340, %v366
      %v377 = vadd.f32 %v341, %v366
      %v378 = vadd.f32 %v342, %v366
      %v379 = vadd.f32 %v343, %v366
      %v380 = vadd.f32 %v344, %v366
      %v381 = vadd.f32 %v345, %v366
      %v382 = vadd.f32 %v346, %v366
      %v383 = vadd.f32 %v347, %v366
      %v384 = vadd.f32 %v348, %v366
      %v385 = vadd.f32 %v349, %v366
      %v386 = vadd.f32 %v350, %v366
      %v387 = vadd.f32 %v351, %v366
      %v388 = vadd.f32 %v352, %v366
      %v389 = vadd.f32 %v353, %v366
      %v390 = vadd.f32 %v354, %v366
      %v391 = vadd.f32 %v355, %v366
      %v392 = vadd.f32 %v356, %v366
      %v393 = vadd.f32 %v357, %v366
      %v394 = vadd.f32 %v358, %v366
      %v395 = vadd.f32 %v359, %v366
      %v396 = vadd.f32 %v360, %v366
      %v397 = vadd.f32 %v361, %v366
      %v398 = vadd.f32 %v362, %v366
      %v399 = vadd.f32 %v363, %v366
      %v400 = vmax.f32 %v368, 0.0
      %v401 = vmax.f32 %v369, 0.0
      %v402 = vmax.f32 %v370, 0.0
      %v403 = vmax.f32 %v371, 0.0
      %v404 = vmax.f32 %v372, 0.0
      %v405 = vmax.f32 %v373, 0.0
      %v406 = vmax.f32 %v374, 0.0
      %v407 = vmax.f32 %v375, 0.0
      %v408 = vmax.f32 %v376, 0.0
      %v409 = vmax.f32 %v377, 0.0
      %v410 = vmax.f32 %v378, 0.0
      %v411 = vmax.f32 %v379, 0.0
      %v412 = vmax.f32 %v380, 0.0
      %v413 = vmax.f32 %v381, 0.0
      %v414 = vmax.f32 %v382, 0.0
      %v415 = vmax.f32 %v383, 0.0
      %v416 = vmax.f32 %v384, 0.0
      %v417 = vmax.f32 %v385, 0.0
      %v418 = vmax.f32 %v386, 0.0
      %v419 = vmax.f32 %v387, 0.0
      %v420 = vmax.f32 %v388, 0.0
      %v421 = vmax.f32 %v389, 0.0
      %v422 = vmax.f32 %v390, 0.0
      %v423 = vmax.f32 %v391, 0.0
      %v424 = vmax.f32 %v392, 0.0
      %v425 = vmax.f32 %v393, 0.0
      %v426 = vmax.f32 %v394, 0.0
      %v427 = vmax.f32 %v395, 0.0
      %v428 = vmax.f32 %v396, 0.0
      %v429 = vmax.f32 %v397, 0.0
      %v430 = vmax.f32 %v398, 0.0
      %v431 = vmax.f32 %v399, 0.0
      %vm432 = vcmask 64512
      %433 = vst.msk [vmem:[#allocation2] sm:$0xff] %vm432, 0.0
      %434 = vst.msk [vmem:[#allocation2 + $0x8] sm:$0xff] %vm432, 0.0
      %vm435 = vcmask 58368
      %436 = vst.msk [vmem:[#allocation2 + $0x10] sm:$0x3] %vm435, 0.0
      %s437 = scalar_lea.vmem [#allocation2], 408
      %438 = vst.msk [vmem:[%s437] sm:$0xff] %vm432, 0.0
      %439 = vst.msk [vmem:[%s437 + $0x8] sm:$0xff] %vm432, 0.0
      %440 = vst.msk [vmem:[%s437 + $0x10] sm:$0x3] %vm435, 0.0
      %s441 = scalar_lea.vmem [#allocation2], 24
      %vm442 = vcmask 57344
      %443 = vst.msk [vmem:[%s441] sm:$0x1] %vm442, 0.0
      %444 = vst.msk [vmem:[%s441 + $0x18] sm:$0x1] %vm442, 0.0
      %445 = vst.msk [vmem:[%s441 + $0x30] sm:$0x1] %vm442, 0.0
      %446 = vst.msk [vmem:[%s441 + $0x48] sm:$0x1] %vm442, 0.0
      %447 = vst.msk [vmem:[%s441 + $0x60] sm:$0x1] %vm442, 0.0
      %448 = vst.msk [vmem:[%s441 + $0x78] sm:$0x1] %vm442, 0.0
      %449 = vst.msk [vmem:[%s441 + $0x90] sm:$0x1] %vm442, 0.0
      %450 = vst.msk [vmem:[%s441 + $0xa8] sm:$0x1] %vm442, 0.0
      %451 = vst.msk [vmem:[%s441 + $0xc0] sm:$0x1] %vm442, 0.0
      %452 = vst.msk [vmem:[%s441 + $0xd8] sm:$0x1] %vm442, 0.0
      %453 = vst.msk [vmem:[%s441 + $0xf0] sm:$0x1] %vm442, 0.0
      %454 = vst.msk [vmem:[%s441 + $0x108] sm:$0x1] %vm442, 0.0
      %455 = vst.msk [vmem:[%s441 + $0x120] sm:$0x1] %vm442, 0.0
      %456 = vst.msk [vmem:[%s441 + $0x138] sm:$0x1] %vm442, 0.0
      %457 = vst.msk [vmem:[%s441 + $0x150] sm:$0x1] %vm442, 0.0
      %458 = vst.msk [vmem:[%s441 + $0x168] sm:$0x1] %vm442, 0.0
      %459 = vst.msk [vmem:[%s441 + $0x11] sm:$0x1] %vm442, 0.0
      %460 = vst.msk [vmem:[%s441 + $0x29] sm:$0x1] %vm442, 0.0
      %461 = vst.msk [vmem:[%s441 + $0x41] sm:$0x1] %vm442, 0.0
      %462 = vst.msk [vmem:[%s441 + $0x59] sm:$0x1] %vm442, 0.0
      %463 = vst.msk [vmem:[%s441 + $0x71] sm:$0x1] %vm442, 0.0
      %464 = vst.msk [vmem:[%s441 + $0x89] sm:$0x1] %vm442, 0.0
      %465 = vst.msk [vmem:[%s441 + $0xa1] sm:$0x1] %vm442, 0.0
      %466 = vst.msk [vmem:[%s441 + $0xb9] sm:$0x1] %vm442, 0.0
      %467 = vst.msk [vmem:[%s441 + $0xd1] sm:$0x1] %vm442, 0.0
      %468 = vst.msk [vmem:[%s441 + $0xe9] sm:$0x1] %vm442, 0.0
      %469 = vst.msk [vmem:[%s441 + $0x101] sm:$0x1] %vm442, 0.0
      %470 = vst.msk [vmem:[%s441 + $0x119] sm:$0x1] %vm442, 0.0
      %471 = vst.msk [vmem:[%s441 + $0x131] sm:$0x1] %vm442, 0.0
      %472 = vst.msk [vmem:[%s441 + $0x149] sm:$0x1] %vm442, 0.0
      %473 = vst.msk [vmem:[%s441 + $0x161] sm:$0x1] %vm442, 0.0
      %474 = vst.msk [vmem:[%s441 + $0x179] sm:$0x1] %vm442, 0.0
      %475 = vst.msk [vmem:[%s441 + $0x1] sm:$0xff] %vm432, %v400
      %476 = vst.msk [vmem:[%s441 + $0x9] sm:$0xff] %vm432, %v401
      %477 = vst.msk [vmem:[%s441 + $0x19] sm:$0xff] %vm432, %v402
      %478 = vst.msk [vmem:[%s441 + $0x21] sm:$0xff] %vm432, %v403
      %479 = vst.msk [vmem:[%s441 + $0x31] sm:$0xff] %vm432, %v404
      %480 = vst.msk [vmem:[%s441 + $0x39] sm:$0xff] %vm432, %v405
      %481 = vst.msk [vmem:[%s441 + $0x49] sm:$0xff] %vm432, %v406
      %482 = vst.msk [vmem:[%s441 + $0x51] sm:$0xff] %vm432, %v407
      %483 = vst.msk [vmem:[%s441 + $0x61] sm:$0xff] %vm432, %v408
      %484 = vst.msk [vmem:[%s441 + $0x69] sm:$0xff] %vm432, %v409
      %485 = vst.msk [vmem:[%s441 + $0x79] sm:$0xff] %vm432, %v410
      %486 = vst.msk [vmem:[%s441 + $0x81] sm:$0xff] %vm432, %v411
      %487 = vst.msk [vmem:[%s441 + $0x91] sm:$0xff] %vm432, %v412
      %488 = vst.msk [vmem:[%s441 + $0x99] sm:$0xff] %vm432, %v413
      %489 = vst.msk [vmem:[%s441 + $0xa9] sm:$0xff] %vm432, %v414
      %490 = vst.msk [vmem:[%s441 + $0xb1] sm:$0xff] %vm432, %v415
      %491 = vst.msk [vmem:[%s441 + $0xc1] sm:$0xff] %vm432, %v416
      %492 = vst.msk [vmem:[%s441 + $0xc9] sm:$0xff] %vm432, %v417
      %493 = vst.msk [vmem:[%s441 + $0xd9] sm:$0xff] %vm432, %v418
      %494 = vst.msk [vmem:[%s441 + $0xe1] sm:$0xff] %vm432, %v419
      %495 = vst.msk [vmem:[%s441 + $0xf1] sm:$0xff] %vm432, %v420
      %496 = vst.msk [vmem:[%s441 + $0xf9] sm:$0xff] %vm432, %v421
      %497 = vst.msk [vmem:[%s441 + $0x109] sm:$0xff] %vm432, %v422
      %498 = vst.msk [vmem:[%s441 + $0x111] sm:$0xff] %vm432, %v423
      %499 = vst.msk [vmem:[%s441 + $0x121] sm:$0xff] %vm432, %v424
      %500 = vst.msk [vmem:[%s441 + $0x129] sm:$0xff] %vm432, %v425
      %501 = vst.msk [vmem:[%s441 + $0x139] sm:$0xff] %vm432, %v426
      %502 = vst.msk [vmem:[%s441 + $0x141] sm:$0xff] %vm432, %v427
      %503 = vst.msk [vmem:[%s441 + $0x151] sm:$0xff] %vm432, %v428
      %504 = vst.msk [vmem:[%s441 + $0x159] sm:$0xff] %vm432, %v429
      %505 = vst.msk [vmem:[%s441 + $0x169] sm:$0xff] %vm432, %v430
      %506 = vst.msk [vmem:[%s441 + $0x171] sm:$0xff] %vm432, %v431
      %v507 = vld [vmem:[#allocation2] sm:$0xff]
      %v508 = vld [vmem:[#allocation2 + $0x8] sm:$0xff]
      %v509 = vld [vmem:[#allocation2 + $0x18] sm:$0xff]
      %v510 = vld [vmem:[#allocation2 + $0x20] sm:$0xff]
      %v511 = vld [vmem:[#allocation2 + $0x30] sm:$0xff]
      %v512 = vld [vmem:[#allocation2 + $0x38] sm:$0xff]
      %v513 = vld [vmem:[#allocation2 + $0x48] sm:$0xff]
      %v514 = vld [vmem:[#allocation2 + $0x50] sm:$0xff]
      %v515 = vld [vmem:[#allocation2 + $0x60] sm:$0xff]
      %v516 = vld [vmem:[#allocation2 + $0x68] sm:$0xff]
      %v517 = vld [vmem:[#allocation2 + $0x78] sm:$0xff]
      %v518 = vld [vmem:[#allocation2 + $0x80] sm:$0xff]
      %v519 = vld [vmem:[#allocation2 + $0x90] sm:$0xff]
      %v520 = vld [vmem:[#allocation2 + $0x98] sm:$0xff]
      %v521 = vld [vmem:[#allocation2 + $0xa8] sm:$0xff]
      %v522 = vld [vmem:[#allocation2 + $0xb0] sm:$0xff]
      %v523 = vld [vmem:[#allocation2 + $0xc0] sm:$0xff]
      %v524 = vld [vmem:[#allocation2 + $0xc8] sm:$0xff]
      %v525 = vld [vmem:[#allocation2 + $0xd8] sm:$0xff]
      %v526 = vld [vmem:[#allocation2 + $0xe0] sm:$0xff]
      %v527 = vld [vmem:[#allocation2 + $0xf0] sm:$0xff]
      %v528 = vld [vmem:[#allocation2 + $0xf8] sm:$0xff]
      %v529 = vld [vmem:[#allocation2 + $0x108] sm:$0xff]
      %v530 = vld [vmem:[#allocation2 + $0x110] sm:$0xff]
      %v531 = vld [vmem:[#allocation2 + $0x120] sm:$0xff]
      %v532 = vld [vmem:[#allocation2 + $0x128] sm:$0xff]
      %v533 = vld [vmem:[#allocation2 + $0x138] sm:$0xff]
      %v534 = vld [vmem:[#allocation2 + $0x140] sm:$0xff]
      %v535 = vld [vmem:[#allocation2 + $0x150] sm:$0xff]
      %v536 = vld [vmem:[#allocation2 + $0x158] sm:$0xff]
      %v537 = vld [vmem:[#allocation2 + $0x168] sm:$0xff]
      %v538 = vld [vmem:[#allocation2 + $0x170] sm:$0xff]
      %539 = vst.msk [vmem:[#allocation3] sm:$0xff] %vm432, %v507
      %540 = vst.msk [vmem:[#allocation3 + $0x8] sm:$0xff] %vm432, %v508
      %541 = vst.msk [vmem:[#allocation3 + $0x10] sm:$0xff] %vm432, %v509
      %542 = vst.msk [vmem:[#allocation3 + $0x18] sm:$0xff] %vm432, %v510
      %543 = vst.msk [vmem:[#allocation3 + $0x20] sm:$0xff] %vm432, %v511
      %544 = vst.msk [vmem:[#allocation3 + $0x28] sm:$0xff] %vm432, %v512
      %545 = vst.msk [vmem:[#allocation3 + $0x30] sm:$0xff] %vm432, %v513
      %546 = vst.msk [vmem:[#allocation3 + $0x38] sm:$0xff] %vm432, %v514
      %547 = vst.msk [vmem:[#allocation3 + $0x40] sm:$0xff] %vm432, %v515
      %548 = vst.msk [vmem:[#allocation3 + $0x48] sm:$0xff] %vm432, %v516
      %549 = vst.msk [vmem:[#allocation3 + $0x50] sm:$0xff] %vm432, %v517
      %550 = vst.msk [vmem:[#allocation3 + $0x58] sm:$0xff] %vm432, %v518
      %551 = vst.msk [vmem:[#allocation3 + $0x60] sm:$0xff] %vm432, %v519
      %552 = vst.msk [vmem:[#allocation3 + $0x68] sm:$0xff] %vm432, %v520
      %553 = vst.msk [vmem:[#allocation3 + $0x70] sm:$0xff] %vm432, %v521
      %554 = vst.msk [vmem:[#allocation3 + $0x78] sm:$0xff] %vm432, %v522
      %555 = vst.msk [vmem:[#allocation3 + $0x80] sm:$0xff] %vm432, %v523
      %556 = vst.msk [vmem:[#allocation3 + $0x88] sm:$0xff] %vm432, %v524
      %557 = vst.msk [vmem:[#allocation3 + $0x90] sm:$0xff] %vm432, %v525
      %558 = vst.msk [vmem:[#allocation3 + $0x98] sm:$0xff] %vm432, %v526
      %559 = vst.msk [vmem:[#allocation3 + $0xa0] sm:$0xff] %vm432, %v527
      %560 = vst.msk [vmem:[#allocation3 + $0xa8] sm:$0xff] %vm432, %v528
      %561 = vst.msk [vmem:[#allocation3 + $0xb0] sm:$0xff] %vm432, %v529
      %562 = vst.msk [vmem:[#allocation3 + $0xb8] sm:$0xff] %vm432, %v530
      %563 = vst.msk [vmem:[#allocation3 + $0xc0] sm:$0xff] %vm432, %v531
      %564 = vst.msk [vmem:[#allocation3 + $0xc8] sm:$0xff] %vm432, %v532
      %565 = vst.msk [vmem:[#allocation3 + $0xd0] sm:$0xff] %vm432, %v533
      %566 = vst.msk [vmem:[#allocation3 + $0xd8] sm:$0xff] %vm432, %v534
      %567 = vst.msk [vmem:[#allocation3 + $0xe0] sm:$0xff] %vm432, %v535
      %568 = vst.msk [vmem:[#allocation3 + $0xe8] sm:$0xff] %vm432, %v536
      %569 = vst.msk [vmem:[#allocation3 + $0xf0] sm:$0xff] %vm432, %v537
      %570 = vst.msk [vmem:[#allocation3 + $0xf8] sm:$0xff] %vm432, %v538
      %v571 = vld [vmem:[#allocation2 + $0x1] sm:$0xff]
      %v572 = vld [vmem:[#allocation2 + $0x9] sm:$0xff]
      %v573 = vld [vmem:[#allocation2 + $0x19] sm:$0xff]
      %v574 = vld [vmem:[#allocation2 + $0x21] sm:$0xff]
      %v575 = vld [vmem:[#allocation2 + $0x31] sm:$0xff]
      %v576 = vld [vmem:[#allocation2 + $0x39] sm:$0xff]
      %v577 = vld [vmem:[#allocation2 + $0x49] sm:$0xff]
      %v578 = vld [vmem:[#allocation2 + $0x51] sm:$0xff]
      %v579 = vld [vmem:[#allocation2 + $0x61] sm:$0xff]
      %v580 = vld [vmem:[#allocation2 + $0x69] sm:$0xff]
      %v581 = vld [vmem:[#allocation2 + $0x79] sm:$0xff]
      %v582 = vld [vmem:[#allocation2 + $0x81] sm:$0xff]
      %v583 = vld [vmem:[#allocation2 + $0x91] sm:$0xff]
      %v584 = vld [vmem:[#allocation2 + $0x99] sm:$0xff]
      %v585 = vld [vmem:[#allocation2 + $0xa9] sm:$0xff]
      %v586 = vld [vmem:[#allocation2 + $0xb1] sm:$0xff]
      %v587 = vld [vmem:[#allocation2 + $0xc1] sm:$0xff]
      %v588 = vld [vmem:[#allocation2 + $0xc9] sm:$0xff]
      %v589 = vld [vmem:[#allocation2 + $0xd9] sm:$0xff]
      %v590 = vld [vmem:[#allocation2 + $0xe1] sm:$0xff]
      %v591 = vld [vmem:[#allocation2 + $0xf1] sm:$0xff]
      %v592 = vld [vmem:[#allocation2 + $0xf9] sm:$0xff]
      %v593 = vld [vmem:[#allocation2 + $0x109] sm:$0xff]
      %v594 = vld [vmem:[#allocation2 + $0x111] sm:$0xff]
      %v595 = vld [vmem:[#allocation2 + $0x121] sm:$0xff]
      %v596 = vld [vmem:[#allocation2 + $0x129] sm:$0xff]
      %v597 = vld [vmem:[#allocation2 + $0x139] sm:$0xff]
      %v598 = vld [vmem:[#allocation2 + $0x141] sm:$0xff]
      %v599 = vld [vmem:[#allocation2 + $0x151] sm:$0xff]
      %v600 = vld [vmem:[#allocation2 + $0x159] sm:$0xff]
      %v601 = vld [vmem:[#allocation2 + $0x169] sm:$0xff]
      %v602 = vld [vmem:[#allocation2 + $0x171] sm:$0xff]
      %635 = vrot.lane.b32.xlu0 %v571, 8
      %v636 = vpop.permute.xlu0 %635
      %637 = vrot.lane.b32.xlu0 %v572, 8
      %v638 = vpop.permute.xlu0 %637
      %639 = vrot.lane.b32.xlu0 %v573, 8
      %v640 = vpop.permute.xlu0 %639
      %641 = vrot.lane.b32.xlu0 %v574, 8
      %v642 = vpop.permute.xlu0 %641
      %643 = vrot.lane.b32.xlu0 %v575, 8
      %v644 = vpop.permute.xlu0 %643
      %645 = vrot.lane.b32.xlu0 %v576, 8
      %v646 = vpop.permute.xlu0 %645
      %647 = vrot.lane.b32.xlu0 %v577, 8
      %v648 = vpop.permute.xlu0 %647
      %649 = vrot.lane.b32.xlu0 %v578, 8
      %v650 = vpop.permute.xlu0 %649
      %651 = vrot.lane.b32.xlu0 %v579, 8
      %v652 = vpop.permute.xlu0 %651
      %653 = vrot.lane.b32.xlu0 %v580, 8
      %v654 = vpop.permute.xlu0 %653
      %655 = vrot.lane.b32.xlu0 %v581, 8
      %v656 = vpop.permute.xlu0 %655
      %657 = vrot.lane.b32.xlu0 %v582, 8
      %v658 = vpop.permute.xlu0 %657
      %659 = vrot.lane.b32.xlu0 %v583, 8
      %v660 = vpop.permute.xlu0 %659
      %661 = vrot.lane.b32.xlu0 %v584, 8
      %v662 = vpop.permute.xlu0 %661
      %663 = vrot.lane.b32.xlu0 %v585, 8
      %v664 = vpop.permute.xlu0 %663
      %665 = vrot.lane.b32.xlu0 %v586, 8
      %v666 = vpop.permute.xlu0 %665
      %667 = vrot.lane.b32.xlu0 %v587, 8
      %v668 = vpop.permute.xlu0 %667
      %669 = vrot.lane.b32.xlu0 %v588, 8
      %v670 = vpop.permute.xlu0 %669
      %671 = vrot.lane.b32.xlu0 %v589, 8
      %v672 = vpop.permute.xlu0 %671
      %673 = vrot.lane.b32.xlu0 %v590, 8
      %v674 = vpop.permute.xlu0 %673
      %675 = vrot.lane.b32.xlu0 %v591, 8
      %v676 = vpop.permute.xlu0 %675
      %677 = vrot.lane.b32.xlu0 %v592, 8
      %v678 = vpop.permute.xlu0 %677
      %679 = vrot.lane.b32.xlu0 %v593, 8
      %v680 = vpop.permute.xlu0 %679
      %681 = vrot.lane.b32.xlu0 %v594, 8
      %v682 = vpop.permute.xlu0 %681
      %683 = vrot.lane.b32.xlu0 %v595, 8
      %v684 = vpop.permute.xlu0 %683
      %685 = vrot.lane.b32.xlu0 %v596, 8
      %v686 = vpop.permute.xlu0 %685
      %687 = vrot.lane.b32.xlu0 %v597, 8
      %v688 = vpop.permute.xlu0 %687
      %689 = vrot.lane.b32.xlu0 %v598, 8
      %v690 = vpop.permute.xlu0 %689
      %691 = vrot.lane.b32.xlu0 %v599, 8
      %v692 = vpop.permute.xlu0 %691
      %693 = vrot.lane.b32.xlu0 %v600, 8
      %v694 = vpop.permute.xlu0 %693
      %695 = vrot.lane.b32.xlu0 %v601, 8
      %v696 = vpop.permute.xlu0 %695
      %697 = vrot.lane.b32.xlu0 %v602, 8
      %v698 = vpop.permute.xlu0 %697
      %vm731 = vcmask 130112
      %732 = vst.msk [vmem:[#allocation3] sm:$0xff] %vm731, %v636
      %733 = vst.msk [vmem:[#allocation3 + $0x8] sm:$0xff] %vm731, %v638
      %734 = vst.msk [vmem:[#allocation3 + $0x10] sm:$0xff] %vm731, %v640
      %735 = vst.msk [vmem:[#allocation3 + $0x18] sm:$0xff] %vm731, %v642
      %736 = vst.msk [vmem:[#allocation3 + $0x20] sm:$0xff] %vm731, %v644
      %737 = vst.msk [vmem:[#allocation3 + $0x28] sm:$0xff] %vm731, %v646
      %738 = vst.msk [vmem:[#allocation3 + $0x30] sm:$0xff] %vm731, %v648
      %739 = vst.msk [vmem:[#allocation3 + $0x38] sm:$0xff] %vm731, %v650
      %740 = vst.msk [vmem:[#allocation3 + $0x40] sm:$0xff] %vm731, %v652
      %741 = vst.msk [vmem:[#allocation3 + $0x48] sm:$0xff] %vm731, %v654
      %742 = vst.msk [vmem:[#allocation3 + $0x50] sm:$0xff] %vm731, %v656
      %743 = vst.msk [vmem:[#allocation3 + $0x58] sm:$0xff] %vm731, %v658
      %744 = vst.msk [vmem:[#allocation3 + $0x60] sm:$0xff] %vm731, %v660
      %745 = vst.msk [vmem:[#allocation3 + $0x68] sm:$0xff] %vm731, %v662
      %746 = vst.msk [vmem:[#allocation3 + $0x70] sm:$0xff] %vm731, %v664
      %747 = vst.msk [vmem:[#allocation3 + $0x78] sm:$0xff] %vm731, %v666
      %748 = vst.msk [vmem:[#allocation3 + $0x80] sm:$0xff] %vm731, %v668
      %749 = vst.msk [vmem:[#allocation3 + $0x88] sm:$0xff] %vm731, %v670
      %750 = vst.msk [vmem:[#allocation3 + $0x90] sm:$0xff] %vm731, %v672
      %751 = vst.msk [vmem:[#allocation3 + $0x98] sm:$0xff] %vm731, %v674
      %752 = vst.msk [vmem:[#allocation3 + $0xa0] sm:$0xff] %vm731, %v676
      %753 = vst.msk [vmem:[#allocation3 + $0xa8] sm:$0xff] %vm731, %v678
      %754 = vst.msk [vmem:[#allocation3 + $0xb0] sm:$0xff] %vm731, %v680
      %755 = vst.msk [vmem:[#allocation3 + $0xb8] sm:$0xff] %vm731, %v682
      %756 = vst.msk [vmem:[#allocation3 + $0xc0] sm:$0xff] %vm731, %v684
      %757 = vst.msk [vmem:[#allocation3 + $0xc8] sm:$0xff] %vm731, %v686
      %758 = vst.msk [vmem:[#allocation3 + $0xd0] sm:$0xff] %vm731, %v688
      %759 = vst.msk [vmem:[#allocation3 + $0xd8] sm:$0xff] %vm731, %v690
      %760 = vst.msk [vmem:[#allocation3 + $0xe0] sm:$0xff] %vm731, %v692
      %761 = vst.msk [vmem:[#allocation3 + $0xe8] sm:$0xff] %vm731, %v694
      %762 = vst.msk [vmem:[#allocation3 + $0xf0] sm:$0xff] %vm731, %v696
      %763 = vst.msk [vmem:[#allocation3 + $0xf8] sm:$0xff] %vm731, %v698
      %v764 = vld [vmem:[#allocation2 + $0x2] sm:$0xff]
      %v765 = vld [vmem:[#allocation2 + $0xa] sm:$0xff]
      %v766 = vld [vmem:[#allocation2 + $0x1a] sm:$0xff]
      %v767 = vld [vmem:[#allocation2 + $0x22] sm:$0xff]
      %v768 = vld [vmem:[#allocation2 + $0x32] sm:$0xff]
      %v769 = vld [vmem:[#allocation2 + $0x3a] sm:$0xff]
      %v770 = vld [vmem:[#allocation2 + $0x4a] sm:$0xff]
      %v771 = vld [vmem:[#allocation2 + $0x52] sm:$0xff]
      %v772 = vld [vmem:[#allocation2 + $0x62] sm:$0xff]
      %v773 = vld [vmem:[#allocation2 + $0x6a] sm:$0xff]
      %v774 = vld [vmem:[#allocation2 + $0x7a] sm:$0xff]
      %v775 = vld [vmem:[#allocation2 + $0x82] sm:$0xff]
      %v776 = vld [vmem:[#allocation2 + $0x92] sm:$0xff]
      %v777 = vld [vmem:[#allocation2 + $0x9a] sm:$0xff]
      %v778 = vld [vmem:[#allocation2 + $0xaa] sm:$0xff]
      %v779 = vld [vmem:[#allocation2 + $0xb2] sm:$0xff]
      %v780 = vld [vmem:[#allocation2 + $0xc2] sm:$0xff]
      %v781 = vld [vmem:[#allocation2 + $0xca] sm:$0xff]
      %v782 = vld [vmem:[#allocation2 + $0xda] sm:$0xff]
      %v783 = vld [vmem:[#allocation2 + $0xe2] sm:$0xff]
      %v784 = vld [vmem:[#allocation2 + $0xf2] sm:$0xff]
      %v785 = vld [vmem:[#allocation2 + $0xfa] sm:$0xff]
      %v786 = vld [vmem:[#allocation2 + $0x10a] sm:$0xff]
      %v787 = vld [vmem:[#allocation2 + $0x112] sm:$0xff]
      %v788 = vld [vmem:[#allocation2 + $0x122] sm:$0xff]
      %v789 = vld [vmem:[#allocation2 + $0x12a] sm:$0xff]
      %v790 = vld [vmem:[#allocation2 + $0x13a] sm:$0xff]
      %v791 = vld [vmem:[#allocation2 + $0x142] sm:$0xff]
      %v792 = vld [vmem:[#allocation2 + $0x152] sm:$0xff]
      %v793 = vld [vmem:[#allocation2 + $0x15a] sm:$0xff]
      %v794 = vld [vmem:[#allocation2 + $0x16a] sm:$0xff]
      %v795 = vld [vmem:[#allocation2 + $0x172] sm:$0xff]
      %828 = vrot.lane.b32.xlu0 %v764, 16
      %v829 = vpop.permute.xlu0 %828
      %830 = vrot.lane.b32.xlu0 %v765, 16
      %v831 = vpop.permute.xlu0 %830
      %832 = vrot.lane.b32.xlu0 %v766, 16
      %v833 = vpop.permute.xlu0 %832
      %834 = vrot.lane.b32.xlu0 %v767, 16
      %v835 = vpop.permute.xlu0 %834
      %836 = vrot.lane.b32.xlu0 %v768, 16
      %v837 = vpop.permute.xlu0 %836
      %838 = vrot.lane.b32.xlu0 %v769, 16
      %v839 = vpop.permute.xlu0 %838
      %840 = vrot.lane.b32.xlu0 %v770, 16
      %v841 = vpop.permute.xlu0 %840
      %842 = vrot.lane.b32.xlu0 %v771, 16
      %v843 = vpop.permute.xlu0 %842
      %844 = vrot.lane.b32.xlu0 %v772, 16
      %v845 = vpop.permute.xlu0 %844
      %846 = vrot.lane.b32.xlu0 %v773, 16
      %v847 = vpop.permute.xlu0 %846
      %848 = vrot.lane.b32.xlu0 %v774, 16
      %v849 = vpop.permute.xlu0 %848
      %850 = vrot.lane.b32.xlu0 %v775, 16
      %v851 = vpop.permute.xlu0 %850
      %852 = vrot.lane.b32.xlu0 %v776, 16
      %v853 = vpop.permute.xlu0 %852
      %854 = vrot.lane.b32.xlu0 %v777, 16
      %v855 = vpop.permute.xlu0 %854
      %856 = vrot.lane.b32.xlu0 %v778, 16
      %v857 = vpop.permute.xlu0 %856
      %858 = vrot.lane.b32.xlu0 %v779, 16
      %v859 = vpop.permute.xlu0 %858
      %860 = vrot.lane.b32.xlu0 %v780, 16
      %v861 = vpop.permute.xlu0 %860
      %862 = vrot.lane.b32.xlu0 %v781, 16
      %v863 = vpop.permute.xlu0 %862
      %864 = vrot.lane.b32.xlu0 %v782, 16
      %v865 = vpop.permute.xlu0 %864
      %866 = vrot.lane.b32.xlu0 %v783, 16
      %v867 = vpop.permute.xlu0 %866
      %868 = vrot.lane.b32.xlu0 %v784, 16
      %v869 = vpop.permute.xlu0 %868
      %870 = vrot.lane.b32.xlu0 %v785, 16
      %v871 = vpop.permute.xlu0 %870
      %872 = vrot.lane.b32.xlu0 %v786, 16
      %v873 = vpop.permute.xlu0 %872
      %874 = vrot.lane.b32.xlu0 %v787, 16
      %v875 = vpop.permute.xlu0 %874
      %876 = vrot.lane.b32.xlu0 %v788, 16
      %v877 = vpop.permute.xlu0 %876
      %878 = vrot.lane.b32.xlu0 %v789, 16
      %v879 = vpop.permute.xlu0 %878
      %880 = vrot.lane.b32.xlu0 %v790, 16
      %v881 = vpop.permute.xlu0 %880
      %882 = vrot.lane.b32.xlu0 %v791, 16
      %v883 = vpop.permute.xlu0 %882
      %884 = vrot.lane.b32.xlu0 %v792, 16
      %v885 = vpop.permute.xlu0 %884
      %886 = vrot.lane.b32.xlu0 %v793, 16
      %v887 = vpop.permute.xlu0 %886
      %888 = vrot.lane.b32.xlu0 %v794, 16
      %v889 = vpop.permute.xlu0 %888
      %890 = vrot.lane.b32.xlu0 %v795, 16
      %v891 = vpop.permute.xlu0 %890
      %vm924 = vcmask 195712
      %925 = vst.msk [vmem:[#allocation3] sm:$0xff] %vm924, %v829
      %926 = vst.msk [vmem:[#allocation3 + $0x8] sm:$0xff] %vm924, %v831
      %927 = vst.msk [vmem:[#allocation3 + $0x10] sm:$0xff] %vm924, %v833
      %928 = vst.msk [vmem:[#allocation3 + $0x18] sm:$0xff] %vm924, %v835
      %929 = vst.msk [vmem:[#allocation3 + $0x20] sm:$0xff] %vm924, %v837
      %930 = vst.msk [vmem:[#allocation3 + $0x28] sm:$0xff] %vm924, %v839
      %931 = vst.msk [vmem:[#allocation3 + $0x30] sm:$0xff] %vm924, %v841
      %932 = vst.msk [vmem:[#allocation3 + $0x38] sm:$0xff] %vm924, %v843
      %933 = vst.msk [vmem:[#allocation3 + $0x40] sm:$0xff] %vm924, %v845
      %934 = vst.msk [vmem:[#allocation3 + $0x48] sm:$0xff] %vm924, %v847
      %935 = vst.msk [vmem:[#allocation3 + $0x50] sm:$0xff] %vm924, %v849
      %936 = vst.msk [vmem:[#allocation3 + $0x58] sm:$0xff] %vm924, %v851
      %937 = vst.msk [vmem:[#allocation3 + $0x60] sm:$0xff] %vm924, %v853
      %938 = vst.msk [vmem:[#allocation3 + $0x68] sm:$0xff] %vm924, %v855
      %939 = vst.msk [vmem:[#allocation3 + $0x70] sm:$0xff] %vm924, %v857
      %940 = vst.msk [vmem:[#allocation3 + $0x78] sm:$0xff] %vm924, %v859
      %941 = vst.msk [vmem:[#allocation3 + $0x80] sm:$0xff] %vm924, %v861
      %942 = vst.msk [vmem:[#allocation3 + $0x88] sm:$0xff] %vm924, %v863
      %943 = vst.msk [vmem:[#allocation3 + $0x90] sm:$0xff] %vm924, %v865
      %944 = vst.msk [vmem:[#allocation3 + $0x98] sm:$0xff] %vm924, %v867
      %945 = vst.msk [vmem:[#allocation3 + $0xa0] sm:$0xff] %vm924, %v869
      %946 = vst.msk [vmem:[#allocation3 + $0xa8] sm:$0xff] %vm924, %v871
      %947 = vst.msk [vmem:[#allocation3 + $0xb0] sm:$0xff] %vm924, %v873
      %948 = vst.msk [vmem:[#allocation3 + $0xb8] sm:$0xff] %vm924, %v875
      %949 = vst.msk [vmem:[#allocation3 + $0xc0] sm:$0xff] %vm924, %v877
      %950 = vst.msk [vmem:[#allocation3 + $0xc8] sm:$0xff] %vm924, %v879
      %951 = vst.msk [vmem:[#allocation3 + $0xd0] sm:$0xff] %vm924, %v881
      %952 = vst.msk [vmem:[#allocation3 + $0xd8] sm:$0xff] %vm924, %v883
      %953 = vst.msk [vmem:[#allocation3 + $0xe0] sm:$0xff] %vm924, %v885
      %954 = vst.msk [vmem:[#allocation3 + $0xe8] sm:$0xff] %vm924, %v887
      %955 = vst.msk [vmem:[#allocation3 + $0xf0] sm:$0xff] %vm924, %v889
      %956 = vst.msk [vmem:[#allocation3 + $0xf8] sm:$0xff] %vm924, %v891
      %v957 = vld [vmem:[%s441] sm:$0xff]
      %v958 = vld [vmem:[%s441 + $0x8] sm:$0xff]
      %v959 = vld [vmem:[%s441 + $0x18] sm:$0xff]
      %v960 = vld [vmem:[%s441 + $0x20] sm:$0xff]
      %v961 = vld [vmem:[%s441 + $0x30] sm:$0xff]
      %v962 = vld [vmem:[%s441 + $0x38] sm:$0xff]
      %v963 = vld [vmem:[%s441 + $0x48] sm:$0xff]
      %v964 = vld [vmem:[%s441 + $0x50] sm:$0xff]
      %v965 = vld [vmem:[%s441 + $0x60] sm:$0xff]
      %v966 = vld [vmem:[%s441 + $0x68] sm:$0xff]
      %v967 = vld [vmem:[%s441 + $0x78] sm:$0xff]
      %v968 = vld [vmem:[%s441 + $0x80] sm:$0xff]
      %v969 = vld [vmem:[%s441 + $0x90] sm:$0xff]
      %v970 = vld [vmem:[%s441 + $0x98] sm:$0xff]
      %v971 = vld [vmem:[%s441 + $0xa8] sm:$0xff]
      %v972 = vld [vmem:[%s441 + $0xb0] sm:$0xff]
      %v973 = vld [vmem:[%s441 + $0xc0] sm:$0xff]
      %v974 = vld [vmem:[%s441 + $0xc8] sm:$0xff]
      %v975 = vld [vmem:[%s441 + $0xd8] sm:$0xff]
      %v976 = vld [vmem:[%s441 + $0xe0] sm:$0xff]
      %v977 = vld [vmem:[%s441 + $0xf0] sm:$0xff]
      %v978 = vld [vmem:[%s441 + $0xf8] sm:$0xff]
      %v979 = vld [vmem:[%s441 + $0x108] sm:$0xff]
      %v980 = vld [vmem:[%s441 + $0x110] sm:$0xff]
      %v981 = vld [vmem:[%s441 + $0x120] sm:$0xff]
      %v982 = vld [vmem:[%s441 + $0x128] sm:$0xff]
      %v983 = vld [vmem:[%s441 + $0x138] sm:$0xff]
      %v984 = vld [vmem:[%s441 + $0x140] sm:$0xff]
      %v985 = vld [vmem:[%s441 + $0x150] sm:$0xff]
      %v986 = vld [vmem:[%s441 + $0x158] sm:$0xff]
      %v987 = vld [vmem:[%s441 + $0x168] sm:$0xff]
      %v988 = vld [vmem:[%s441 + $0x170] sm:$0xff]
      %1021 = vrot.lane.b32.xlu0 %v957, 24
      %v1022 = vpop.permute.xlu0 %1021
      %1023 = vrot.lane.b32.xlu0 %v958, 24
      %v1024 = vpop.permute.xlu0 %1023
      %1025 = vrot.lane.b32.xlu0 %v959, 24
      %v1026 = vpop.permute.xlu0 %1025
      %1027 = vrot.lane.b32.xlu0 %v960, 24
      %v1028 = vpop.permute.xlu0 %1027
      %1029 = vrot.lane.b32.xlu0 %v961, 24
      %v1030 = vpop.permute.xlu0 %1029
      %1031 = vrot.lane.b32.xlu0 %v962, 24
      %v1032 = vpop.permute.xlu0 %1031
      %1033 = vrot.lane.b32.xlu0 %v963, 24
      %v1034 = vpop.permute.xlu0 %1033
      %1035 = vrot.lane.b32.xlu0 %v964, 24
      %v1036 = vpop.permute.xlu0 %1035
      %1037 = vrot.lane.b32.xlu0 %v965, 24
      %v1038 = vpop.permute.xlu0 %1037
      %1039 = vrot.lane.b32.xlu0 %v966, 24
      %v1040 = vpop.permute.xlu0 %1039
      %1041 = vrot.lane.b32.xlu0 %v967, 24
      %v1042 = vpop.permute.xlu0 %1041
      %1043 = vrot.lane.b32.xlu0 %v968, 24
      %v1044 = vpop.permute.xlu0 %1043
      %1045 = vrot.lane.b32.xlu0 %v969, 24
      %v1046 = vpop.permute.xlu0 %1045
      %1047 = vrot.lane.b32.xlu0 %v970, 24
      %v1048 = vpop.permute.xlu0 %1047
      %1049 = vrot.lane.b32.xlu0 %v971, 24
      %v1050 = vpop.permute.xlu0 %1049
      %1051 = vrot.lane.b32.xlu0 %v972, 24
      %v1052 = vpop.permute.xlu0 %1051
      %1053 = vrot.lane.b32.xlu0 %v973, 24
      %v1054 = vpop.permute.xlu0 %1053
      %1055 = vrot.lane.b32.xlu0 %v974, 24
      %v1056 = vpop.permute.xlu0 %1055
      %1057 = vrot.lane.b32.xlu0 %v975, 24
      %v1058 = vpop.permute.xlu0 %1057
      %1059 = vrot.lane.b32.xlu0 %v976, 24
      %v1060 = vpop.permute.xlu0 %1059
      %1061 = vrot.lane.b32.xlu0 %v977, 24
      %v1062 = vpop.permute.xlu0 %1061
      %1063 = vrot.lane.b32.xlu0 %v978, 24
      %v1064 = vpop.permute.xlu0 %1063
      %1065 = vrot.lane.b32.xlu0 %v979, 24
      %v1066 = vpop.permute.xlu0 %1065
      %1067 = vrot.lane.b32.xlu0 %v980, 24
      %v1068 = vpop.permute.xlu0 %1067
      %1069 = vrot.lane.b32.xlu0 %v981, 24
      %v1070 = vpop.permute.xlu0 %1069
      %1071 = vrot.lane.b32.xlu0 %v982, 24
      %v1072 = vpop.permute.xlu0 %1071
      %1073 = vrot.lane.b32.xlu0 %v983, 24
      %v1074 = vpop.permute.xlu0 %1073
      %1075 = vrot.lane.b32.xlu0 %v984, 24
      %v1076 = vpop.permute.xlu0 %1075
      %1077 = vrot.lane.b32.xlu0 %v985, 24
      %v1078 = vpop.permute.xlu0 %1077
      %1079 = vrot.lane.b32.xlu0 %v986, 24
      %v1080 = vpop.permute.xlu0 %1079
      %1081 = vrot.lane.b32.xlu0 %v987, 24
      %v1082 = vpop.permute.xlu0 %1081
      %1083 = vrot.lane.b32.xlu0 %v988, 24
      %v1084 = vpop.permute.xlu0 %1083
      %vm1117 = vcmask 261312
      %1118 = vst.msk [vmem:[#allocation3] sm:$0xff] %vm1117, %v1022
      %1119 = vst.msk [vmem:[#allocation3 + $0x8] sm:$0xff] %vm1117, %v1024
      %1120 = vst.msk [vmem:[#allocation3 + $0x10] sm:$0xff] %vm1117, %v1026
      %1121 = vst.msk [vmem:[#allocation3 + $0x18] sm:$0xff] %vm1117, %v1028
      %1122 = vst.msk [vmem:[#allocation3 + $0x20] sm:$0xff] %vm1117, %v1030
      %1123 = vst.msk [vmem:[#allocation3 + $0x28] sm:$0xff] %vm1117, %v1032
      %1124 = vst.msk [vmem:[#allocation3 + $0x30] sm:$0xff] %vm1117, %v1034
      %1125 = vst.msk [vmem:[#allocation3 + $0x38] sm:$0xff] %vm1117, %v1036
      %1126 = vst.msk [vmem:[#allocation3 + $0x40] sm:$0xff] %vm1117, %v1038
      %1127 = vst.msk [vmem:[#allocation3 + $0x48] sm:$0xff] %vm1117, %v1040
      %1128 = vst.msk [vmem:[#allocation3 + $0x50] sm:$0xff] %vm1117, %v1042
      %1129 = vst.msk [vmem:[#allocation3 + $0x58] sm:$0xff] %vm1117, %v1044
      %1130 = vst.msk [vmem:[#allocation3 + $0x60] sm:$0xff] %vm1117, %v1046
      %1131 = vst.msk [vmem:[#allocation3 + $0x68] sm:$0xff] %vm1117, %v1048
      %1132 = vst.msk [vmem:[#allocation3 + $0x70] sm:$0xff] %vm1117, %v1050
      %1133 = vst.msk [vmem:[#allocation3 + $0x78] sm:$0xff] %vm1117, %v1052
      %1134 = vst.msk [vmem:[#allocation3 + $0x80] sm:$0xff] %vm1117, %v1054
      %1135 = vst.msk [vmem:[#allocation3 + $0x88] sm:$0xff] %vm1117, %v1056
      %1136 = vst.msk [vmem:[#allocation3 + $0x90] sm:$0xff] %vm1117, %v1058
      %1137 = vst.msk [vmem:[#allocation3 + $0x98] sm:$0xff] %vm1117, %v1060
      %1138 = vst.msk [vmem:[#allocation3 + $0xa0] sm:$0xff] %vm1117, %v1062
      %1139 = vst.msk [vmem:[#allocation3 + $0xa8] sm:$0xff] %vm1117, %v1064
      %1140 = vst.msk [vmem:[#allocation3 + $0xb0] sm:$0xff] %vm1117, %v1066
      %1141 = vst.msk [vmem:[#allocation3 + $0xb8] sm:$0xff] %vm1117, %v1068
      %1142 = vst.msk [vmem:[#allocation3 + $0xc0] sm:$0xff] %vm1117, %v1070
      %1143 = vst.msk [vmem:[#allocation3 + $0xc8] sm:$0xff] %vm1117, %v1072
      %1144 = vst.msk [vmem:[#allocation3 + $0xd0] sm:$0xff] %vm1117, %v1074
      %1145 = vst.msk [vmem:[#allocation3 + $0xd8] sm:$0xff] %vm1117, %v1076
      %1146 = vst.msk [vmem:[#allocation3 + $0xe0] sm:$0xff] %vm1117, %v1078
      %1147 = vst.msk [vmem:[#allocation3 + $0xe8] sm:$0xff] %vm1117, %v1080
      %1148 = vst.msk [vmem:[#allocation3 + $0xf0] sm:$0xff] %vm1117, %v1082
      %1149 = vst.msk [vmem:[#allocation3 + $0xf8] sm:$0xff] %vm1117, %v1084
      %v1150 = vld [vmem:[%s441 + $0x1] sm:$0xff]
      %v1151 = vld [vmem:[%s441 + $0x9] sm:$0xff]
      %v1152 = vld [vmem:[%s441 + $0x19] sm:$0xff]
      %v1153 = vld [vmem:[%s441 + $0x21] sm:$0xff]
      %v1154 = vld [vmem:[%s441 + $0x31] sm:$0xff]
      %v1155 = vld [vmem:[%s441 + $0x39] sm:$0xff]
      %v1156 = vld [vmem:[%s441 + $0x49] sm:$0xff]
      %v1157 = vld [vmem:[%s441 + $0x51] sm:$0xff]
      %v1158 = vld [vmem:[%s441 + $0x61] sm:$0xff]
      %v1159 = vld [vmem:[%s441 + $0x69] sm:$0xff]
      %v1160 = vld [vmem:[%s441 + $0x79] sm:$0xff]
      %v1161 = vld [vmem:[%s441 + $0x81] sm:$0xff]
      %v1162 = vld [vmem:[%s441 + $0x91] sm:$0xff]
      %v1163 = vld [vmem:[%s441 + $0x99] sm:$0xff]
      %v1164 = vld [vmem:[%s441 + $0xa9] sm:$0xff]
      %v1165 = vld [vmem:[%s441 + $0xb1] sm:$0xff]
      %v1166 = vld [vmem:[%s441 + $0xc1] sm:$0xff]
      %v1167 = vld [vmem:[%s441 + $0xc9] sm:$0xff]
      %v1168 = vld [vmem:[%s441 + $0xd9] sm:$0xff]
      %v1169 = vld [vmem:[%s441 + $0xe1] sm:$0xff]
      %v1170 = vld [vmem:[%s441 + $0xf1] sm:$0xff]
      %v1171 = vld [vmem:[%s441 + $0xf9] sm:$0xff]
      %v1172 = vld [vmem:[%s441 + $0x109] sm:$0xff]
      %v1173 = vld [vmem:[%s441 + $0x111] sm:$0xff]
      %v1174 = vld [vmem:[%s441 + $0x121] sm:$0xff]
      %v1175 = vld [vmem:[%s441 + $0x129] sm:$0xff]
      %v1176 = vld [vmem:[%s441 + $0x139] sm:$0xff]
      %v1177 = vld [vmem:[%s441 + $0x141] sm:$0xff]
      %v1178 = vld [vmem:[%s441 + $0x151] sm:$0xff]
      %v1179 = vld [vmem:[%s441 + $0x159] sm:$0xff]
      %v1180 = vld [vmem:[%s441 + $0x169] sm:$0xff]
      %v1181 = vld [vmem:[%s441 + $0x171] sm:$0xff]
      %1214 = vrot.lane.b32.xlu0 %v1150, 32
      %v1215 = vpop.permute.xlu0 %1214
      %1216 = vrot.lane.b32.xlu0 %v1151, 32
      %v1217 = vpop.permute.xlu0 %1216
      %1218 = vrot.lane.b32.xlu0 %v1152, 32
      %v1219 = vpop.permute.xlu0 %1218
      %1220 = vrot.lane.b32.xlu0 %v1153, 32
      %v1221 = vpop.permute.xlu0 %1220
      %1222 = vrot.lane.b32.xlu0 %v1154, 32
      %v1223 = vpop.permute.xlu0 %1222
      %1224 = vrot.lane.b32.xlu0 %v1155, 32
      %v1225 = vpop.permute.xlu0 %1224
      %1226 = vrot.lane.b32.xlu0 %v1156, 32
      %v1227 = vpop.permute.xlu0 %1226
      %1228 = vrot.lane.b32.xlu0 %v1157, 32
      %v1229 = vpop.permute.xlu0 %1228
      %1230 = vrot.lane.b32.xlu0 %v1158, 32
      %v1231 = vpop.permute.xlu0 %1230
      %1232 = vrot.lane.b32.xlu0 %v1159, 32
      %v1233 = vpop.permute.xlu0 %1232
      %1234 = vrot.lane.b32.xlu0 %v1160, 32
      %v1235 = vpop.permute.xlu0 %1234
      %1236 = vrot.lane.b32.xlu0 %v1161, 32
      %v1237 = vpop.permute.xlu0 %1236
      %1238 = vrot.lane.b32.xlu0 %v1162, 32
      %v1239 = vpop.permute.xlu0 %1238
      %1240 = vrot.lane.b32.xlu0 %v1163, 32
      %v1241 = vpop.permute.xlu0 %1240
      %1242 = vrot.lane.b32.xlu0 %v1164, 32
      %v1243 = vpop.permute.xlu0 %1242
      %1244 = vrot.lane.b32.xlu0 %v1165, 32
      %v1245 = vpop.permute.xlu0 %1244
      %1246 = vrot.lane.b32.xlu0 %v1166, 32
      %v1247 = vpop.permute.xlu0 %1246
      %1248 = vrot.lane.b32.xlu0 %v1167, 32
      %v1249 = vpop.permute.xlu0 %1248
      %1250 = vrot.lane.b32.xlu0 %v1168, 32
      %v1251 = vpop.permute.xlu0 %1250
      %1252 = vrot.lane.b32.xlu0 %v1169, 32
      %v1253 = vpop.permute.xlu0 %1252
      %1254 = vrot.lane.b32.xlu0 %v1170, 32
      %v1255 = vpop.permute.xlu0 %1254
      %1256 = vrot.lane.b32.xlu0 %v1171, 32
      %v1257 = vpop.permute.xlu0 %1256
      %1258 = vrot.lane.b32.xlu0 %v1172, 32
      %v1259 = vpop.permute.xlu0 %1258
      %1260 = vrot.lane.b32.xlu0 %v1173, 32
      %v1261 = vpop.permute.xlu0 %1260
      %1262 = vrot.lane.b32.xlu0 %v1174, 32
      %v1263 = vpop.permute.xlu0 %1262
      %1264 = vrot.lane.b32.xlu0 %v1175, 32
      %v1265 = vpop.permute.xlu0 %1264
      %1266 = vrot.lane.b32.xlu0 %v1176, 32
      %v1267 = vpop.permute.xlu0 %1266
      %1268 = vrot.lane.b32.xlu0 %v1177, 32
      %v1269 = vpop.permute.xlu0 %1268
      %1270 = vrot.lane.b32.xlu0 %v1178, 32
      %v1271 = vpop.permute.xlu0 %1270
      %1272 = vrot.lane.b32.xlu0 %v1179, 32
      %v1273 = vpop.permute.xlu0 %1272
      %1274 = vrot.lane.b32.xlu0 %v1180, 32
      %v1275 = vpop.permute.xlu0 %1274
      %1276 = vrot.lane.b32.xlu0 %v1181, 32
      %v1277 = vpop.permute.xlu0 %1276
      %vm1310 = vcmask 326912
      %1311 = vst.msk [vmem:[#allocation3] sm:$0xff] %vm1310, %v1215
      %1312 = vst.msk [vmem:[#allocation3 + $0x8] sm:$0xff] %vm1310, %v1217
      %1313 = vst.msk [vmem:[#allocation3 + $0x10] sm:$0xff] %vm1310, %v1219
      %1314 = vst.msk [vmem:[#allocation3 + $0x18] sm:$0xff] %vm1310, %v1221
      %1315 = vst.msk [vmem:[#allocation3 + $0x20] sm:$0xff] %vm1310, %v1223
      %1316 = vst.msk [vmem:[#allocation3 + $0x28] sm:$0xff] %vm1310, %v1225
      %1317 = vst.msk [vmem:[#allocation3 + $0x30] sm:$0xff] %vm1310, %v1227
      %1318 = vst.msk [vmem:[#allocation3 + $0x38] sm:$0xff] %vm1310, %v1229
      %1319 = vst.msk [vmem:[#allocation3 + $0x40] sm:$0xff] %vm1310, %v1231
      %1320 = vst.msk [vmem:[#allocation3 + $0x48] sm:$0xff] %vm1310, %v1233
      %1321 = vst.msk [vmem:[#allocation3 + $0x50] sm:$0xff] %vm1310, %v1235
      %1322 = vst.msk [vmem:[#allocation3 + $0x58] sm:$0xff] %vm1310, %v1237
      %1323 = vst.msk [vmem:[#allocation3 + $0x60] sm:$0xff] %vm1310, %v1239
      %1324 = vst.msk [vmem:[#allocation3 + $0x68] sm:$0xff] %vm1310, %v1241
      %1325 = vst.msk [vmem:[#allocation3 + $0x70] sm:$0xff] %vm1310, %v1243
      %1326 = vst.msk [vmem:[#allocation3 + $0x78] sm:$0xff] %vm1310, %v1245
      %1327 = vst.msk [vmem:[#allocation3 + $0x80] sm:$0xff] %vm1310, %v1247
      %1328 = vst.msk [vmem:[#allocation3 + $0x88] sm:$0xff] %vm1310, %v1249
      %1329 = vst.msk [vmem:[#allocation3 + $0x90] sm:$0xff] %vm1310, %v1251
      %1330 = vst.msk [vmem:[#allocation3 + $0x98] sm:$0xff] %vm1310, %v1253
      %1331 = vst.msk [vmem:[#allocation3 + $0xa0] sm:$0xff] %vm1310, %v1255
      %1332 = vst.msk [vmem:[#allocation3 + $0xa8] sm:$0xff] %vm1310, %v1257
      %1333 = vst.msk [vmem:[#allocation3 + $0xb0] sm:$0xff] %vm1310, %v1259
      %1334 = vst.msk [vmem:[#allocation3 + $0xb8] sm:$0xff] %vm1310, %v1261
      %1335 = vst.msk [vmem:[#allocation3 + $0xc0] sm:$0xff] %vm1310, %v1263
      %1336 = vst.msk [vmem:[#allocation3 + $0xc8] sm:$0xff] %vm1310, %v1265
      %1337 = vst.msk [vmem:[#allocation3 + $0xd0] sm:$0xff] %vm1310, %v1267
      %1338 = vst.msk [vmem:[#allocation3 + $0xd8] sm:$0xff] %vm1310, %v1269
      %1339 = vst.msk [vmem:[#allocation3 + $0xe0] sm:$0xff] %vm1310, %v1271
      %1340 = vst.msk [vmem:[#allocation3 + $0xe8] sm:$0xff] %vm1310, %v1273
      %1341 = vst.msk [vmem:[#allocation3 + $0xf0] sm:$0xff] %vm1310, %v1275
      %1342 = vst.msk [vmem:[#allocation3 + $0xf8] sm:$0xff] %vm1310, %v1277
      %v1343 = vld [vmem:[%s441 + $0x2] sm:$0xff]
      %v1344 = vld [vmem:[%s441 + $0xa] sm:$0xff]
      %v1345 = vld [vmem:[%s441 + $0x1a] sm:$0xff]
      %v1346 = vld [vmem:[%s441 + $0x22] sm:$0xff]
      %v1347 = vld [vmem:[%s441 + $0x32] sm:$0xff]
      %v1348 = vld [vmem:[%s441 + $0x3a] sm:$0xff]
      %v1349 = vld [vmem:[%s441 + $0x4a] sm:$0xff]
      %v1350 = vld [vmem:[%s441 + $0x52] sm:$0xff]
      %v1351 = vld [vmem:[%s441 + $0x62] sm:$0xff]
      %v1352 = vld [vmem:[%s441 + $0x6a] sm:$0xff]
      %v1353 = vld [vmem:[%s441 + $0x7a] sm:$0xff]
      %v1354 = vld [vmem:[%s441 + $0x82] sm:$0xff]
      %v1355 = vld [vmem:[%s441 + $0x92] sm:$0xff]
      %v1356 = vld [vmem:[%s441 + $0x9a] sm:$0xff]
      %v1357 = vld [vmem:[%s441 + $0xaa] sm:$0xff]
      %v1358 = vld [vmem:[%s441 + $0xb2] sm:$0xff]
      %v1359 = vld [vmem:[%s441 + $0xc2] sm:$0xff]
      %v1360 = vld [vmem:[%s441 + $0xca] sm:$0xff]
      %v1361 = vld [vmem:[%s441 + $0xda] sm:$0xff]
      %v1362 = vld [vmem:[%s441 + $0xe2] sm:$0xff]
      %v1363 = vld [vmem:[%s441 + $0xf2] sm:$0xff]
      %v1364 = vld [vmem:[%s441 + $0xfa] sm:$0xff]
      %v1365 = vld [vmem:[%s441 + $0x10a] sm:$0xff]
      %v1366 = vld [vmem:[%s441 + $0x112] sm:$0xff]
      %v1367 = vld [vmem:[%s441 + $0x122] sm:$0xff]
      %v1368 = vld [vmem:[%s441 + $0x12a] sm:$0xff]
      %v1369 = vld [vmem:[%s441 + $0x13a] sm:$0xff]
      %v1370 = vld [vmem:[%s441 + $0x142] sm:$0xff]
      %v1371 = vld [vmem:[%s441 + $0x152] sm:$0xff]
      %v1372 = vld [vmem:[%s441 + $0x15a] sm:$0xff]
      %v1373 = vld [vmem:[%s441 + $0x16a] sm:$0xff]
      %v1374 = vld [vmem:[%s441 + $0x172] sm:$0xff]
      %1407 = vrot.lane.b32.xlu0 %v1343, 40
      %v1408 = vpop.permute.xlu0 %1407
      %1409 = vrot.lane.b32.xlu0 %v1344, 40
      %v1410 = vpop.permute.xlu0 %1409
      %1411 = vrot.lane.b32.xlu0 %v1345, 40
      %v1412 = vpop.permute.xlu0 %1411
      %1413 = vrot.lane.b32.xlu0 %v1346, 40
      %v1414 = vpop.permute.xlu0 %1413
      %1415 = vrot.lane.b32.xlu0 %v1347, 40
      %v1416 = vpop.permute.xlu0 %1415
      %1417 = vrot.lane.b32.xlu0 %v1348, 40
      %v1418 = vpop.permute.xlu0 %1417
      %1419 = vrot.lane.b32.xlu0 %v1349, 40
      %v1420 = vpop.permute.xlu0 %1419
      %1421 = vrot.lane.b32.xlu0 %v1350, 40
      %v1422 = vpop.permute.xlu0 %1421
      %1423 = vrot.lane.b32.xlu0 %v1351, 40
      %v1424 = vpop.permute.xlu0 %1423
      %1425 = vrot.lane.b32.xlu0 %v1352, 40
      %v1426 = vpop.permute.xlu0 %1425
      %1427 = vrot.lane.b32.xlu0 %v1353, 40
      %v1428 = vpop.permute.xlu0 %1427
      %1429 = vrot.lane.b32.xlu0 %v1354, 40
      %v1430 = vpop.permute.xlu0 %1429
      %1431 = vrot.lane.b32.xlu0 %v1355, 40
      %v1432 = vpop.permute.xlu0 %1431
      %1433 = vrot.lane.b32.xlu0 %v1356, 40
      %v1434 = vpop.permute.xlu0 %1433
      %1435 = vrot.lane.b32.xlu0 %v1357, 40
      %v1436 = vpop.permute.xlu0 %1435
      %1437 = vrot.lane.b32.xlu0 %v1358, 40
      %v1438 = vpop.permute.xlu0 %1437
      %1439 = vrot.lane.b32.xlu0 %v1359, 40
      %v1440 = vpop.permute.xlu0 %1439
      %1441 = vrot.lane.b32.xlu0 %v1360, 40
      %v1442 = vpop.permute.xlu0 %1441
      %1443 = vrot.lane.b32.xlu0 %v1361, 40
      %v1444 = vpop.permute.xlu0 %1443
      %1445 = vrot.lane.b32.xlu0 %v1362, 40
      %v1446 = vpop.permute.xlu0 %1445
      %1447 = vrot.lane.b32.xlu0 %v1363, 40
      %v1448 = vpop.permute.xlu0 %1447
      %1449 = vrot.lane.b32.xlu0 %v1364, 40
      %v1450 = vpop.permute.xlu0 %1449
      %1451 = vrot.lane.b32.xlu0 %v1365, 40
      %v1452 = vpop.permute.xlu0 %1451
      %1453 = vrot.lane.b32.xlu0 %v1366, 40
      %v1454 = vpop.permute.xlu0 %1453
      %1455 = vrot.lane.b32.xlu0 %v1367, 40
      %v1456 = vpop.permute.xlu0 %1455
      %1457 = vrot.lane.b32.xlu0 %v1368, 40
      %v1458 = vpop.permute.xlu0 %1457
      %1459 = vrot.lane.b32.xlu0 %v1369, 40
      %v1460 = vpop.permute.xlu0 %1459
      %1461 = vrot.lane.b32.xlu0 %v1370, 40
      %v1462 = vpop.permute.xlu0 %1461
      %1463 = vrot.lane.b32.xlu0 %v1371, 40
      %v1464 = vpop.permute.xlu0 %1463
      %1465 = vrot.lane.b32.xlu0 %v1372, 40
      %v1466 = vpop.permute.xlu0 %1465
      %1467 = vrot.lane.b32.xlu0 %v1373, 40
      %v1468 = vpop.permute.xlu0 %1467
      %1469 = vrot.lane.b32.xlu0 %v1374, 40
      %v1470 = vpop.permute.xlu0 %1469
      %vm1503 = vcmask 392512
      %1504 = vst.msk [vmem:[#allocation3] sm:$0xff] %vm1503, %v1408
      %1505 = vst.msk [vmem:[#allocation3 + $0x8] sm:$0xff] %vm1503, %v1410
      %1506 = vst.msk [vmem:[#allocation3 + $0x10] sm:$0xff] %vm1503, %v1412
      %1507 = vst.msk [vmem:[#allocation3 + $0x18] sm:$0xff] %vm1503, %v1414
      %1508 = vst.msk [vmem:[#allocation3 + $0x20] sm:$0xff] %vm1503, %v1416
      %1509 = vst.msk [vmem:[#allocation3 + $0x28] sm:$0xff] %vm1503, %v1418
      %1510 = vst.msk [vmem:[#allocation3 + $0x30] sm:$0xff] %vm1503, %v1420
      %1511 = vst.msk [vmem:[#allocation3 + $0x38] sm:$0xff] %vm1503, %v1422
      %1512 = vst.msk [vmem:[#allocation3 + $0x40] sm:$0xff] %vm1503, %v1424
      %1513 = vst.msk [vmem:[#allocation3 + $0x48] sm:$0xff] %vm1503, %v1426
      %1514 = vst.msk [vmem:[#allocation3 + $0x50] sm:$0xff] %vm1503, %v1428
      %1515 = vst.msk [vmem:[#allocation3 + $0x58] sm:$0xff] %vm1503, %v1430
      %1516 = vst.msk [vmem:[#allocation3 + $0x60] sm:$0xff] %vm1503, %v1432
      %1517 = vst.msk [vmem:[#allocation3 + $0x68] sm:$0xff] %vm1503, %v1434
      %1518 = vst.msk [vmem:[#allocation3 + $0x70] sm:$0xff] %vm1503, %v1436
      %1519 = vst.msk [vmem:[#allocation3 + $0x78] sm:$0xff] %vm1503, %v1438
      %1520 = vst.msk [vmem:[#allocation3 + $0x80] sm:$0xff] %vm1503, %v1440
      %1521 = vst.msk [vmem:[#allocation3 + $0x88] sm:$0xff] %vm1503, %v1442
      %1522 = vst.msk [vmem:[#allocation3 + $0x90] sm:$0xff] %vm1503, %v1444
      %1523 = vst.msk [vmem:[#allocation3 + $0x98] sm:$0xff] %vm1503, %v1446
      %1524 = vst.msk [vmem:[#allocation3 + $0xa0] sm:$0xff] %vm1503, %v1448
      %1525 = vst.msk [vmem:[#allocation3 + $0xa8] sm:$0xff] %vm1503, %v1450
      %1526 = vst.msk [vmem:[#allocation3 + $0xb0] sm:$0xff] %vm1503, %v1452
      %1527 = vst.msk [vmem:[#allocation3 + $0xb8] sm:$0xff] %vm1503, %v1454
      %1528 = vst.msk [vmem:[#allocation3 + $0xc0] sm:$0xff] %vm1503, %v1456
      %1529 = vst.msk [vmem:[#allocation3 + $0xc8] sm:$0xff] %vm1503, %v1458
      %1530 = vst.msk [vmem:[#allocation3 + $0xd0] sm:$0xff] %vm1503, %v1460
      %1531 = vst.msk [vmem:[#allocation3 + $0xd8] sm:$0xff] %vm1503, %v1462
      %1532 = vst.msk [vmem:[#allocation3 + $0xe0] sm:$0xff] %vm1503, %v1464
      %1533 = vst.msk [vmem:[#allocation3 + $0xe8] sm:$0xff] %vm1503, %v1466
      %1534 = vst.msk [vmem:[#allocation3 + $0xf0] sm:$0xff] %vm1503, %v1468
      %1535 = vst.msk [vmem:[#allocation3 + $0xf8] sm:$0xff] %vm1503, %v1470
      %s1536 = scalar_lea.vmem [#allocation2], 48
      %v1537 = vld [vmem:[%s1536] sm:$0xff]
      %v1538 = vld [vmem:[%s1536 + $0x8] sm:$0xff]
      %v1539 = vld [vmem:[%s1536 + $0x18] sm:$0xff]
      %v1540 = vld [vmem:[%s1536 + $0x20] sm:$0xff]
      %v1541 = vld [vmem:[%s1536 + $0x30] sm:$0xff]
      %v1542 = vld [vmem:[%s1536 + $0x38] sm:$0xff]
      %v1543 = vld [vmem:[%s1536 + $0x48] sm:$0xff]
      %v1544 = vld [vmem:[%s1536 + $0x50] sm:$0xff]
      %v1545 = vld [vmem:[%s1536 + $0x60] sm:$0xff]
      %v1546 = vld [vmem:[%s1536 + $0x68] sm:$0xff]
      %v1547 = vld [vmem:[%s1536 + $0x78] sm:$0xff]
      %v1548 = vld [vmem:[%s1536 + $0x80] sm:$0xff]
      %v1549 = vld [vmem:[%s1536 + $0x90] sm:$0xff]
      %v1550 = vld [vmem:[%s1536 + $0x98] sm:$0xff]
      %v1551 = vld [vmem:[%s1536 + $0xa8] sm:$0xff]
      %v1552 = vld [vmem:[%s1536 + $0xb0] sm:$0xff]
      %v1553 = vld [vmem:[%s1536 + $0xc0] sm:$0xff]
      %v1554 = vld [vmem:[%s1536 + $0xc8] sm:$0xff]
      %v1555 = vld [vmem:[%s1536 + $0xd8] sm:$0xff]
      %v1556 = vld [vmem:[%s1536 + $0xe0] sm:$0xff]
      %v1557 = vld [vmem:[%s1536 + $0xf0] sm:$0xff]
      %v1558 = vld [vmem:[%s1536 + $0xf8] sm:$0xff]
      %v1559 = vld [vmem:[%s1536 + $0x108] sm:$0xff]
      %v1560 = vld [vmem:[%s1536 + $0x110] sm:$0xff]
      %v1561 = vld [vmem:[%s1536 + $0x120] sm:$0xff]
      %v1562 = vld [vmem:[%s1536 + $0x128] sm:$0xff]
      %v1563 = vld [vmem:[%s1536 + $0x138] sm:$0xff]
      %v1564 = vld [vmem:[%s1536 + $0x140] sm:$0xff]
      %v1565 = vld [vmem:[%s1536 + $0x150] sm:$0xff]
      %v1566 = vld [vmem:[%s1536 + $0x158] sm:$0xff]
      %v1567 = vld [vmem:[%s1536 + $0x168] sm:$0xff]
      %v1568 = vld [vmem:[%s1536 + $0x170] sm:$0xff]
      %1601 = vrot.lane.b32.xlu0 %v1537, 48
      %v1602 = vpop.permute.xlu0 %1601
      %1603 = vrot.lane.b32.xlu0 %v1538, 48
      %v1604 = vpop.permute.xlu0 %1603
      %1605 = vrot.lane.b32.xlu0 %v1539, 48
      %v1606 = vpop.permute.xlu0 %1605
      %1607 = vrot.lane.b32.xlu0 %v1540, 48
      %v1608 = vpop.permute.xlu0 %1607
      %1609 = vrot.lane.b32.xlu0 %v1541, 48
      %v1610 = vpop.permute.xlu0 %1609
      %1611 = vrot.lane.b32.xlu0 %v1542, 48
      %v1612 = vpop.permute.xlu0 %1611
      %1613 = vrot.lane.b32.xlu0 %v1543, 48
      %v1614 = vpop.permute.xlu0 %1613
      %1615 = vrot.lane.b32.xlu0 %v1544, 48
      %v1616 = vpop.permute.xlu0 %1615
      %1617 = vrot.lane.b32.xlu0 %v1545, 48
      %v1618 = vpop.permute.xlu0 %1617
      %1619 = vrot.lane.b32.xlu0 %v1546, 48
      %v1620 = vpop.permute.xlu0 %1619
      %1621 = vrot.lane.b32.xlu0 %v1547, 48
      %v1622 = vpop.permute.xlu0 %1621
      %1623 = vrot.lane.b32.xlu0 %v1548, 48
      %v1624 = vpop.permute.xlu0 %1623
      %1625 = vrot.lane.b32.xlu0 %v1549, 48
      %v1626 = vpop.permute.xlu0 %1625
      %1627 = vrot.lane.b32.xlu0 %v1550, 48
      %v1628 = vpop.permute.xlu0 %1627
      %1629 = vrot.lane.b32.xlu0 %v1551, 48
      %v1630 = vpop.permute.xlu0 %1629
      %1631 = vrot.lane.b32.xlu0 %v1552, 48
      %v1632 = vpop.permute.xlu0 %1631
      %1633 = vrot.lane.b32.xlu0 %v1553, 48
      %v1634 = vpop.permute.xlu0 %1633
      %1635 = vrot.lane.b32.xlu0 %v1554, 48
      %v1636 = vpop.permute.xlu0 %1635
      %1637 = vrot.lane.b32.xlu0 %v1555, 48
      %v1638 = vpop.permute.xlu0 %1637
      %1639 = vrot.lane.b32.xlu0 %v1556, 48
      %v1640 = vpop.permute.xlu0 %1639
      %1641 = vrot.lane.b32.xlu0 %v1557, 48
      %v1642 = vpop.permute.xlu0 %1641
      %1643 = vrot.lane.b32.xlu0 %v1558, 48
      %v1644 = vpop.permute.xlu0 %1643
      %1645 = vrot.lane.b32.xlu0 %v1559, 48
      %v1646 = vpop.permute.xlu0 %1645
      %1647 = vrot.lane.b32.xlu0 %v1560, 48
      %v1648 = vpop.permute.xlu0 %1647
      %1649 = vrot.lane.b32.xlu0 %v1561, 48
      %v1650 = vpop.permute.xlu0 %1649
      %1651 = vrot.lane.b32.xlu0 %v1562, 48
      %v1652 = vpop.permute.xlu0 %1651
      %1653 = vrot.lane.b32.xlu0 %v1563, 48
      %v1654 = vpop.permute.xlu0 %1653
      %1655 = vrot.lane.b32.xlu0 %v1564, 48
      %v1656 = vpop.permute.xlu0 %1655
      %1657 = vrot.lane.b32.xlu0 %v1565, 48
      %v1658 = vpop.permute.xlu0 %1657
      %1659 = vrot.lane.b32.xlu0 %v1566, 48
      %v1660 = vpop.permute.xlu0 %1659
      %1661 = vrot.lane.b32.xlu0 %v1567, 48
      %v1662 = vpop.permute.xlu0 %1661
      %1663 = vrot.lane.b32.xlu0 %v1568, 48
      %v1664 = vpop.permute.xlu0 %1663
      %vm1697 = vcmask 458112
      %1698 = vst.msk [vmem:[#allocation3] sm:$0xff] %vm1697, %v1602
      %1699 = vst.msk [vmem:[#allocation3 + $0x8] sm:$0xff] %vm1697, %v1604
      %1700 = vst.msk [vmem:[#allocation3 + $0x10] sm:$0xff] %vm1697, %v1606
      %1701 = vst.msk [vmem:[#allocation3 + $0x18] sm:$0xff] %vm1697, %v1608
      %1702 = vst.msk [vmem:[#allocation3 + $0x20] sm:$0xff] %vm1697, %v1610
      %1703 = vst.msk [vmem:[#allocation3 + $0x28] sm:$0xff] %vm1697, %v1612
      %1704 = vst.msk [vmem:[#allocation3 + $0x30] sm:$0xff] %vm1697, %v1614
      %1705 = vst.msk [vmem:[#allocation3 + $0x38] sm:$0xff] %vm1697, %v1616
      %1706 = vst.msk [vmem:[#allocation3 + $0x40] sm:$0xff] %vm1697, %v1618
      %1707 = vst.msk [vmem:[#allocation3 + $0x48] sm:$0xff] %vm1697, %v1620
      %1708 = vst.msk [vmem:[#allocation3 + $0x50] sm:$0xff] %vm1697, %v1622
      %1709 = vst.msk [vmem:[#allocation3 + $0x58] sm:$0xff] %vm1697, %v1624
      %1710 = vst.msk [vmem:[#allocation3 + $0x60] sm:$0xff] %vm1697, %v1626
      %1711 = vst.msk [vmem:[#allocation3 + $0x68] sm:$0xff] %vm1697, %v1628
      %1712 = vst.msk [vmem:[#allocation3 + $0x70] sm:$0xff] %vm1697, %v1630
      %1713 = vst.msk [vmem:[#allocation3 + $0x78] sm:$0xff] %vm1697, %v1632
      %1714 = vst.msk [vmem:[#allocation3 + $0x80] sm:$0xff] %vm1697, %v1634
      %1715 = vst.msk [vmem:[#allocation3 + $0x88] sm:$0xff] %vm1697, %v1636
      %1716 = vst.msk [vmem:[#allocation3 + $0x90] sm:$0xff] %vm1697, %v1638
      %1717 = vst.msk [vmem:[#allocation3 + $0x98] sm:$0xff] %vm1697, %v1640
      %1718 = vst.msk [vmem:[#allocation3 + $0xa0] sm:$0xff] %vm1697, %v1642
      %1719 = vst.msk [vmem:[#allocation3 + $0xa8] sm:$0xff] %vm1697, %v1644
      %1720 = vst.msk [vmem:[#allocation3 + $0xb0] sm:$0xff] %vm1697, %v1646
      %1721 = vst.msk [vmem:[#allocation3 + $0xb8] sm:$0xff] %vm1697, %v1648
      %1722 = vst.msk [vmem:[#allocation3 + $0xc0] sm:$0xff] %vm1697, %v1650
      %1723 = vst.msk [vmem:[#allocation3 + $0xc8] sm:$0xff] %vm1697, %v1652
      %1724 = vst.msk [vmem:[#allocation3 + $0xd0] sm:$0xff] %vm1697, %v1654
      %1725 = vst.msk [vmem:[#allocation3 + $0xd8] sm:$0xff] %vm1697, %v1656
      %1726 = vst.msk [vmem:[#allocation3 + $0xe0] sm:$0xff] %vm1697, %v1658
      %1727 = vst.msk [vmem:[#allocation3 + $0xe8] sm:$0xff] %vm1697, %v1660
      %1728 = vst.msk [vmem:[#allocation3 + $0xf0] sm:$0xff] %vm1697, %v1662
      %1729 = vst.msk [vmem:[#allocation3 + $0xf8] sm:$0xff] %vm1697, %v1664
      %v1730 = vld [vmem:[%s1536 + $0x1] sm:$0xff]
      %v1731 = vld [vmem:[%s1536 + $0x9] sm:$0xff]
      %v1732 = vld [vmem:[%s1536 + $0x19] sm:$0xff]
      %v1733 = vld [vmem:[%s1536 + $0x21] sm:$0xff]
      %v1734 = vld [vmem:[%s1536 + $0x31] sm:$0xff]
      %v1735 = vld [vmem:[%s1536 + $0x39] sm:$0xff]
      %v1736 = vld [vmem:[%s1536 + $0x49] sm:$0xff]
      %v1737 = vld [vmem:[%s1536 + $0x51] sm:$0xff]
      %v1738 = vld [vmem:[%s1536 + $0x61] sm:$0xff]
      %v1739 = vld [vmem:[%s1536 + $0x69] sm:$0xff]
      %v1740 = vld [vmem:[%s1536 + $0x79] sm:$0xff]
      %v1741 = vld [vmem:[%s1536 + $0x81] sm:$0xff]
      %v1742 = vld [vmem:[%s1536 + $0x91] sm:$0xff]
      %v1743 = vld [vmem:[%s1536 + $0x99] sm:$0xff]
      %v1744 = vld [vmem:[%s1536 + $0xa9] sm:$0xff]
      %v1745 = vld [vmem:[%s1536 + $0xb1] sm:$0xff]
      %v1746 = vld [vmem:[%s1536 + $0xc1] sm:$0xff]
      %v1747 = vld [vmem:[%s1536 + $0xc9] sm:$0xff]
      %v1748 = vld [vmem:[%s1536 + $0xd9] sm:$0xff]
      %v1749 = vld [vmem:[%s1536 + $0xe1] sm:$0xff]
      %v1750 = vld [vmem:[%s1536 + $0xf1] sm:$0xff]
      %v1751 = vld [vmem:[%s1536 + $0xf9] sm:$0xff]
      %v1752 = vld [vmem:[%s1536 + $0x109] sm:$0xff]
      %v1753 = vld [vmem:[%s1536 + $0x111] sm:$0xff]
      %v1754 = vld [vmem:[%s1536 + $0x121] sm:$0xff]
      %v1755 = vld [vmem:[%s1536 + $0x129] sm:$0xff]
      %v1756 = vld [vmem:[%s1536 + $0x139] sm:$0xff]
      %v1757 = vld [vmem:[%s1536 + $0x141] sm:$0xff]
      %v1758 = vld [vmem:[%s1536 + $0x151] sm:$0xff]
      %v1759 = vld [vmem:[%s1536 + $0x159] sm:$0xff]
      %v1760 = vld [vmem:[%s1536 + $0x169] sm:$0xff]
      %v1761 = vld [vmem:[%s1536 + $0x171] sm:$0xff]
      %1794 = vrot.lane.b32.xlu0 %v1730, 56
      %v1795 = vpop.permute.xlu0 %1794
      %1796 = vrot.lane.b32.xlu0 %v1731, 56
      %v1797 = vpop.permute.xlu0 %1796
      %1798 = vrot.lane.b32.xlu0 %v1732, 56
      %v1799 = vpop.permute.xlu0 %1798
      %1800 = vrot.lane.b32.xlu0 %v1733, 56
      %v1801 = vpop.permute.xlu0 %1800
      %1802 = vrot.lane.b32.xlu0 %v1734, 56
      %v1803 = vpop.permute.xlu0 %1802
      %1804 = vrot.lane.b32.xlu0 %v1735, 56
      %v1805 = vpop.permute.xlu0 %1804
      %1806 = vrot.lane.b32.xlu0 %v1736, 56
      %v1807 = vpop.permute.xlu0 %1806
      %1808 = vrot.lane.b32.xlu0 %v1737, 56
      %v1809 = vpop.permute.xlu0 %1808
      %1810 = vrot.lane.b32.xlu0 %v1738, 56
      %v1811 = vpop.permute.xlu0 %1810
      %1812 = vrot.lane.b32.xlu0 %v1739, 56
      %v1813 = vpop.permute.xlu0 %1812
      %1814 = vrot.lane.b32.xlu0 %v1740, 56
      %v1815 = vpop.permute.xlu0 %1814
      %1816 = vrot.lane.b32.xlu0 %v1741, 56
      %v1817 = vpop.permute.xlu0 %1816
      %1818 = vrot.lane.b32.xlu0 %v1742, 56
      %v1819 = vpop.permute.xlu0 %1818
      %1820 = vrot.lane.b32.xlu0 %v1743, 56
      %v1821 = vpop.permute.xlu0 %1820
      %1822 = vrot.lane.b32.xlu0 %v1744, 56
      %v1823 = vpop.permute.xlu0 %1822
      %1824 = vrot.lane.b32.xlu0 %v1745, 56
      %v1825 = vpop.permute.xlu0 %1824
      %1826 = vrot.lane.b32.xlu0 %v1746, 56
      %v1827 = vpop.permute.xlu0 %1826
      %1828 = vrot.lane.b32.xlu0 %v1747, 56
      %v1829 = vpop.permute.xlu0 %1828
      %1830 = vrot.lane.b32.xlu0 %v1748, 56
      %v1831 = vpop.permute.xlu0 %1830
      %1832 = vrot.lane.b32.xlu0 %v1749, 56
      %v1833 = vpop.permute.xlu0 %1832
      %1834 = vrot.lane.b32.xlu0 %v1750, 56
      %v1835 = vpop.permute.xlu0 %1834
      %1836 = vrot.lane.b32.xlu0 %v1751, 56
      %v1837 = vpop.permute.xlu0 %1836
      %1838 = vrot.lane.b32.xlu0 %v1752, 56
      %v1839 = vpop.permute.xlu0 %1838
      %1840 = vrot.lane.b32.xlu0 %v1753, 56
      %v1841 = vpop.permute.xlu0 %1840
      %1842 = vrot.lane.b32.xlu0 %v1754, 56
      %v1843 = vpop.permute.xlu0 %1842
      %1844 = vrot.lane.b32.xlu0 %v1755, 56
      %v1845 = vpop.permute.xlu0 %1844
      %1846 = vrot.lane.b32.xlu0 %v1756, 56
      %v1847 = vpop.permute.xlu0 %1846
      %1848 = vrot.lane.b32.xlu0 %v1757, 56
      %v1849 = vpop.permute.xlu0 %1848
      %1850 = vrot.lane.b32.xlu0 %v1758, 56
      %v1851 = vpop.permute.xlu0 %1850
      %1852 = vrot.lane.b32.xlu0 %v1759, 56
      %v1853 = vpop.permute.xlu0 %1852
      %1854 = vrot.lane.b32.xlu0 %v1760, 56
      %v1855 = vpop.permute.xlu0 %1854
      %1856 = vrot.lane.b32.xlu0 %v1761, 56
      %v1857 = vpop.permute.xlu0 %1856
      %vm1890 = vcmask 523712
      %1891 = vst.msk [vmem:[#allocation3] sm:$0xff] %vm1890, %v1795
      %1892 = vst.msk [vmem:[#allocation3 + $0x8] sm:$0xff] %vm1890, %v1797
      %1893 = vst.msk [vmem:[#allocation3 + $0x10] sm:$0xff] %vm1890, %v1799
      %1894 = vst.msk [vmem:[#allocation3 + $0x18] sm:$0xff] %vm1890, %v1801
      %1895 = vst.msk [vmem:[#allocation3 + $0x20] sm:$0xff] %vm1890, %v1803
      %1896 = vst.msk [vmem:[#allocation3 + $0x28] sm:$0xff] %vm1890, %v1805
      %1897 = vst.msk [vmem:[#allocation3 + $0x30] sm:$0xff] %vm1890, %v1807
      %1898 = vst.msk [vmem:[#allocation3 + $0x38] sm:$0xff] %vm1890, %v1809
      %1899 = vst.msk [vmem:[#allocation3 + $0x40] sm:$0xff] %vm1890, %v1811
      %1900 = vst.msk [vmem:[#allocation3 + $0x48] sm:$0xff] %vm1890, %v1813
      %1901 = vst.msk [vmem:[#allocation3 + $0x50] sm:$0xff] %vm1890, %v1815
      %1902 = vst.msk [vmem:[#allocation3 + $0x58] sm:$0xff] %vm1890, %v1817
      %1903 = vst.msk [vmem:[#allocation3 + $0x60] sm:$0xff] %vm1890, %v1819
      %1904 = vst.msk [vmem:[#allocation3 + $0x68] sm:$0xff] %vm1890, %v1821
      %1905 = vst.msk [vmem:[#allocation3 + $0x70] sm:$0xff] %vm1890, %v1823
      %1906 = vst.msk [vmem:[#allocation3 + $0x78] sm:$0xff] %vm1890, %v1825
      %1907 = vst.msk [vmem:[#allocation3 + $0x80] sm:$0xff] %vm1890, %v1827
      %1908 = vst.msk [vmem:[#allocation3 + $0x88] sm:$0xff] %vm1890, %v1829
      %1909 = vst.msk [vmem:[#allocation3 + $0x90] sm:$0xff] %vm1890, %v1831
      %1910 = vst.msk [vmem:[#allocation3 + $0x98] sm:$0xff] %vm1890, %v1833
      %1911 = vst.msk [vmem:[#allocation3 + $0xa0] sm:$0xff] %vm1890, %v1835
      %1912 = vst.msk [vmem:[#allocation3 + $0xa8] sm:$0xff] %vm1890, %v1837
      %1913 = vst.msk [vmem:[#allocation3 + $0xb0] sm:$0xff] %vm1890, %v1839
      %1914 = vst.msk [vmem:[#allocation3 + $0xb8] sm:$0xff] %vm1890, %v1841
      %1915 = vst.msk [vmem:[#allocation3 + $0xc0] sm:$0xff] %vm1890, %v1843
      %1916 = vst.msk [vmem:[#allocation3 + $0xc8] sm:$0xff] %vm1890, %v1845
      %1917 = vst.msk [vmem:[#allocation3 + $0xd0] sm:$0xff] %vm1890, %v1847
      %1918 = vst.msk [vmem:[#allocation3 + $0xd8] sm:$0xff] %vm1890, %v1849
      %1919 = vst.msk [vmem:[#allocation3 + $0xe0] sm:$0xff] %vm1890, %v1851
      %1920 = vst.msk [vmem:[#allocation3 + $0xe8] sm:$0xff] %vm1890, %v1853
      %1921 = vst.msk [vmem:[#allocation3 + $0xf0] sm:$0xff] %vm1890, %v1855
      %1922 = vst.msk [vmem:[#allocation3 + $0xf8] sm:$0xff] %vm1890, %v1857
      %v1923 = vld [vmem:[%s1536 + $0x2] sm:$0xff]
      %v1924 = vld [vmem:[%s1536 + $0xa] sm:$0xff]
      %v1925 = vld [vmem:[%s1536 + $0x1a] sm:$0xff]
      %v1926 = vld [vmem:[%s1536 + $0x22] sm:$0xff]
      %v1927 = vld [vmem:[%s1536 + $0x32] sm:$0xff]
      %v1928 = vld [vmem:[%s1536 + $0x3a] sm:$0xff]
      %v1929 = vld [vmem:[%s1536 + $0x4a] sm:$0xff]
      %v1930 = vld [vmem:[%s1536 + $0x52] sm:$0xff]
      %v1931 = vld [vmem:[%s1536 + $0x62] sm:$0xff]
      %v1932 = vld [vmem:[%s1536 + $0x6a] sm:$0xff]
      %v1933 = vld [vmem:[%s1536 + $0x7a] sm:$0xff]
      %v1934 = vld [vmem:[%s1536 + $0x82] sm:$0xff]
      %v1935 = vld [vmem:[%s1536 + $0x92] sm:$0xff]
      %v1936 = vld [vmem:[%s1536 + $0x9a] sm:$0xff]
      %v1937 = vld [vmem:[%s1536 + $0xaa] sm:$0xff]
      %v1938 = vld [vmem:[%s1536 + $0xb2] sm:$0xff]
      %v1939 = vld [vmem:[%s1536 + $0xc2] sm:$0xff]
      %v1940 = vld [vmem:[%s1536 + $0xca] sm:$0xff]
      %v1941 = vld [vmem:[%s1536 + $0xda] sm:$0xff]
      %v1942 = vld [vmem:[%s1536 + $0xe2] sm:$0xff]
      %v1943 = vld [vmem:[%s1536 + $0xf2] sm:$0xff]
      %v1944 = vld [vmem:[%s1536 + $0xfa] sm:$0xff]
      %v1945 = vld [vmem:[%s1536 + $0x10a] sm:$0xff]
      %v1946 = vld [vmem:[%s1536 + $0x112] sm:$0xff]
      %v1947 = vld [vmem:[%s1536 + $0x122] sm:$0xff]
      %v1948 = vld [vmem:[%s1536 + $0x12a] sm:$0xff]
      %v1949 = vld [vmem:[%s1536 + $0x13a] sm:$0xff]
      %v1950 = vld [vmem:[%s1536 + $0x142] sm:$0xff]
      %v1951 = vld [vmem:[%s1536 + $0x152] sm:$0xff]
      %v1952 = vld [vmem:[%s1536 + $0x15a] sm:$0xff]
      %v1953 = vld [vmem:[%s1536 + $0x16a] sm:$0xff]
      %v1954 = vld [vmem:[%s1536 + $0x172] sm:$0xff]
      %1987 = vrot.lane.b32.xlu0 %v1923, 64
      %v1988 = vpop.permute.xlu0 %1987
      %1989 = vrot.lane.b32.xlu0 %v1924, 64
      %v1990 = vpop.permute.xlu0 %1989
      %1991 = vrot.lane.b32.xlu0 %v1925, 64
      %v1992 = vpop.permute.xlu0 %1991
      %1993 = vrot.lane.b32.xlu0 %v1926, 64
      %v1994 = vpop.permute.xlu0 %1993
      %1995 = vrot.lane.b32.xlu0 %v1927, 64
      %v1996 = vpop.permute.xlu0 %1995
      %1997 = vrot.lane.b32.xlu0 %v1928, 64
      %v1998 = vpop.permute.xlu0 %1997
      %1999 = vrot.lane.b32.xlu0 %v1929, 64
      %v2000 = vpop.permute.xlu0 %1999
      %2001 = vrot.lane.b32.xlu0 %v1930, 64
      %v2002 = vpop.permute.xlu0 %2001
      %2003 = vrot.lane.b32.xlu0 %v1931, 64
      %v2004 = vpop.permute.xlu0 %2003
      %2005 = vrot.lane.b32.xlu0 %v1932, 64
      %v2006 = vpop.permute.xlu0 %2005
      %2007 = vrot.lane.b32.xlu0 %v1933, 64
      %v2008 = vpop.permute.xlu0 %2007
      %2009 = vrot.lane.b32.xlu0 %v1934, 64
      %v2010 = vpop.permute.xlu0 %2009
      %2011 = vrot.lane.b32.xlu0 %v1935, 64
      %v2012 = vpop.permute.xlu0 %2011
      %2013 = vrot.lane.b32.xlu0 %v1936, 64
      %v2014 = vpop.permute.xlu0 %2013
      %2015 = vrot.lane.b32.xlu0 %v1937, 64
      %v2016 = vpop.permute.xlu0 %2015
      %2017 = vrot.lane.b32.xlu0 %v1938, 64
      %v2018 = vpop.permute.xlu0 %2017
      %2019 = vrot.lane.b32.xlu0 %v1939, 64
      %v2020 = vpop.permute.xlu0 %2019
      %2021 = vrot.lane.b32.xlu0 %v1940, 64
      %v2022 = vpop.permute.xlu0 %2021
      %2023 = vrot.lane.b32.xlu0 %v1941, 64
      %v2024 = vpop.permute.xlu0 %2023
      %2025 = vrot.lane.b32.xlu0 %v1942, 64
      %v2026 = vpop.permute.xlu0 %2025
      %2027 = vrot.lane.b32.xlu0 %v1943, 64
      %v2028 = vpop.permute.xlu0 %2027
      %2029 = vrot.lane.b32.xlu0 %v1944, 64
      %v2030 = vpop.permute.xlu0 %2029
      %2031 = vrot.lane.b32.xlu0 %v1945, 64
      %v2032 = vpop.permute.xlu0 %2031
      %2033 = vrot.lane.b32.xlu0 %v1946, 64
      %v2034 = vpop.permute.xlu0 %2033
      %2035 = vrot.lane.b32.xlu0 %v1947, 64
      %v2036 = vpop.permute.xlu0 %2035
      %2037 = vrot.lane.b32.xlu0 %v1948, 64
      %v2038 = vpop.permute.xlu0 %2037
      %2039 = vrot.lane.b32.xlu0 %v1949, 64
      %v2040 = vpop.permute.xlu0 %2039
      %2041 = vrot.lane.b32.xlu0 %v1950, 64
      %v2042 = vpop.permute.xlu0 %2041
      %2043 = vrot.lane.b32.xlu0 %v1951, 64
      %v2044 = vpop.permute.xlu0 %2043
      %2045 = vrot.lane.b32.xlu0 %v1952, 64
      %v2046 = vpop.permute.xlu0 %2045
      %2047 = vrot.lane.b32.xlu0 %v1953, 64
      %v2048 = vpop.permute.xlu0 %2047
      %2049 = vrot.lane.b32.xlu0 %v1954, 64
      %v2050 = vpop.permute.xlu0 %2049
      %vm2083 = vcmask 589312
      %2084 = vst.msk [vmem:[#allocation3] sm:$0xff] %vm2083, %v1988
      %2085 = vst.msk [vmem:[#allocation3 + $0x8] sm:$0xff] %vm2083, %v1990
      %2086 = vst.msk [vmem:[#allocation3 + $0x10] sm:$0xff] %vm2083, %v1992
      %2087 = vst.msk [vmem:[#allocation3 + $0x18] sm:$0xff] %vm2083, %v1994
      %2088 = vst.msk [vmem:[#allocation3 + $0x20] sm:$0xff] %vm2083, %v1996
      %2089 = vst.msk [vmem:[#allocation3 + $0x28] sm:$0xff] %vm2083, %v1998
      %2090 = vst.msk [vmem:[#allocation3 + $0x30] sm:$0xff] %vm2083, %v2000
      %2091 = vst.msk [vmem:[#allocation3 + $0x38] sm:$0xff] %vm2083, %v2002
      %2092 = vst.msk [vmem:[#allocation3 + $0x40] sm:$0xff] %vm2083, %v2004
      %2093 = vst.msk [vmem:[#allocation3 + $0x48] sm:$0xff] %vm2083, %v2006
      %2094 = vst.msk [vmem:[#allocation3 + $0x50] sm:$0xff] %vm2083, %v2008
      %2095 = vst.msk [vmem:[#allocation3 + $0x58] sm:$0xff] %vm2083, %v2010
      %2096 = vst.msk [vmem:[#allocation3 + $0x60] sm:$0xff] %vm2083, %v2012
      %2097 = vst.msk [vmem:[#allocation3 + $0x68] sm:$0xff] %vm2083, %v2014
      %2098 = vst.msk [vmem:[#allocation3 + $0x70] sm:$0xff] %vm2083, %v2016
      %2099 = vst.msk [vmem:[#allocation3 + $0x78] sm:$0xff] %vm2083, %v2018
      %2100 = vst.msk [vmem:[#allocation3 + $0x80] sm:$0xff] %vm2083, %v2020
      %2101 = vst.msk [vmem:[#allocation3 + $0x88] sm:$0xff] %vm2083, %v2022
      %2102 = vst.msk [vmem:[#allocation3 + $0x90] sm:$0xff] %vm2083, %v2024
      %2103 = vst.msk [vmem:[#allocation3 + $0x98] sm:$0xff] %vm2083, %v2026
      %2104 = vst.msk [vmem:[#allocation3 + $0xa0] sm:$0xff] %vm2083, %v2028
      %2105 = vst.msk [vmem:[#allocation3 + $0xa8] sm:$0xff] %vm2083, %v2030
      %2106 = vst.msk [vmem:[#allocation3 + $0xb0] sm:$0xff] %vm2083, %v2032
      %2107 = vst.msk [vmem:[#allocation3 + $0xb8] sm:$0xff] %vm2083, %v2034
      %2108 = vst.msk [vmem:[#allocation3 + $0xc0] sm:$0xff] %vm2083, %v2036
      %2109 = vst.msk [vmem:[#allocation3 + $0xc8] sm:$0xff] %vm2083, %v2038
      %2110 = vst.msk [vmem:[#allocation3 + $0xd0] sm:$0xff] %vm2083, %v2040
      %2111 = vst.msk [vmem:[#allocation3 + $0xd8] sm:$0xff] %vm2083, %v2042
      %2112 = vst.msk [vmem:[#allocation3 + $0xe0] sm:$0xff] %vm2083, %v2044
      %2113 = vst.msk [vmem:[#allocation3 + $0xe8] sm:$0xff] %vm2083, %v2046
      %2114 = vst.msk [vmem:[#allocation3 + $0xf0] sm:$0xff] %vm2083, %v2048
      %2115 = vst.msk [vmem:[#allocation3 + $0xf8] sm:$0xff] %vm2083, %v2050
      %v2116 = vld [vmem:[#allocation3] sm:$0xff]
      %v2117 = vld [vmem:[#allocation3 + $0x8] sm:$0xff]
      %v2118 = vld [vmem:[#allocation3 + $0x10] sm:$0xff]
      %v2119 = vld [vmem:[#allocation3 + $0x18] sm:$0xff]
      %v2120 = vld [vmem:[#allocation3 + $0x20] sm:$0xff]
      %v2121 = vld [vmem:[#allocation3 + $0x28] sm:$0xff]
      %v2122 = vld [vmem:[#allocation3 + $0x30] sm:$0xff]
      %v2123 = vld [vmem:[#allocation3 + $0x38] sm:$0xff]
      %v2124 = vld [vmem:[#allocation3 + $0x40] sm:$0xff]
      %v2125 = vld [vmem:[#allocation3 + $0x48] sm:$0xff]
      %v2126 = vld [vmem:[#allocation3 + $0x50] sm:$0xff]
      %v2127 = vld [vmem:[#allocation3 + $0x58] sm:$0xff]
      %v2128 = vld [vmem:[#allocation3 + $0x60] sm:$0xff]
      %v2129 = vld [vmem:[#allocation3 + $0x68] sm:$0xff]
      %v2130 = vld [vmem:[#allocation3 + $0x70] sm:$0xff]
      %v2131 = vld [vmem:[#allocation3 + $0x78] sm:$0xff]
      %v2132 = vld [vmem:[#allocation3 + $0x80] sm:$0xff]
      %v2133 = vld [vmem:[#allocation3 + $0x88] sm:$0xff]
      %v2134 = vld [vmem:[#allocation3 + $0x90] sm:$0xff]
      %v2135 = vld [vmem:[#allocation3 + $0x98] sm:$0xff]
      %v2136 = vld [vmem:[#allocation3 + $0xa0] sm:$0xff]
      %v2137 = vld [vmem:[#allocation3 + $0xa8] sm:$0xff]
      %v2138 = vld [vmem:[#allocation3 + $0xb0] sm:$0xff]
      %v2139 = vld [vmem:[#allocation3 + $0xb8] sm:$0xff]
      %v2140 = vld [vmem:[#allocation3 + $0xc0] sm:$0xff]
      %v2141 = vld [vmem:[#allocation3 + $0xc8] sm:$0xff]
      %v2142 = vld [vmem:[#allocation3 + $0xd0] sm:$0xff]
      %v2143 = vld [vmem:[#allocation3 + $0xd8] sm:$0xff]
      %v2144 = vld [vmem:[#allocation3 + $0xe0] sm:$0xff]
      %v2145 = vld [vmem:[#allocation3 + $0xe8] sm:$0xff]
      %v2146 = vld [vmem:[#allocation3 + $0xf0] sm:$0xff]
      %v2147 = vld [vmem:[#allocation3 + $0xf8] sm:$0xff]
      %v2148 = vld [vmem:[%s3] sm:$0xff]
      %v2149 = vld [vmem:[%s3 + $0x8] sm:$0xff]
      %v2150 = vld [vmem:[%s3 + $0x10] sm:$0xff]
      %v2151 = vld [vmem:[%s3 + $0x18] sm:$0xff]
      %v2152 = vld [vmem:[%s3 + $0x20] sm:$0xff]
      %v2153 = vld [vmem:[%s3 + $0x28] sm:$0xff]
      %v2154 = vld [vmem:[%s3 + $0x30] sm:$0xff]
      %v2155 = vld [vmem:[%s3 + $0x38] sm:$0xff]
      %v2156 = vld [vmem:[%s3 + $0x40] sm:$0xff]
      %v2157 = vld [vmem:[%s4] sm:$0x1]
      %v2159 = vperm.slane %v2157, 0
      %vm2161 = vcmask 588800
      %v2163 = vsel %vm2161, %v2116, 0
      %v2166 = vsel %vm2161, %v2117, 0
      %v2169 = vsel %vm2161, %v2118, 0
      %v2172 = vsel %vm2161, %v2119, 0
      %v2175 = vsel %vm2161, %v2120, 0
      %v2178 = vsel %vm2161, %v2121, 0
      %v2181 = vsel %vm2161, %v2122, 0
      %v2184 = vsel %vm2161, %v2123, 0
      %v2187 = vsel %vm2161, %v2124, 0
      %v2190 = vsel %vm2161, %v2125, 0
      %v2193 = vsel %vm2161, %v2126, 0
      %v2196 = vsel %vm2161, %v2127, 0
      %v2199 = vsel %vm2161, %v2128, 0
      %v2202 = vsel %vm2161, %v2129, 0
      %v2205 = vsel %vm2161, %v2130, 0
      %v2208 = vsel %vm2161, %v2131, 0
      %v2211 = vsel %vm2161, %v2132, 0
      %v2214 = vsel %vm2161, %v2133, 0
      %v2217 = vsel %vm2161, %v2134, 0
      %v2220 = vsel %vm2161, %v2135, 0
      %v2223 = vsel %vm2161, %v2136, 0
      %v2226 = vsel %vm2161, %v2137, 0
      %v2229 = vsel %vm2161, %v2138, 0
      %v2232 = vsel %vm2161, %v2139, 0
      %v2235 = vsel %vm2161, %v2140, 0
      %v2238 = vsel %vm2161, %v2141, 0
      %v2241 = vsel %vm2161, %v2142, 0
      %v2244 = vsel %vm2161, %v2143, 0
      %v2247 = vsel %vm2161, %v2144, 0
      %v2250 = vsel %vm2161, %v2145, 0
      %v2253 = vsel %vm2161, %v2146, 0
      %v2256 = vsel %vm2161, %v2147, 0
      %2258 = vmatpush.msra.mxu0 0.0
      %2259 = vmatpush.msra.mxu0 0.0
      %2260 = vmatpush.msra.mxu0 0.0
      %2261 = vmatpush.msra.mxu0 0.0
      %2262 = vmatpush.msra.mxu0 0.0
      %2263 = vmatpush.msra.mxu0 0.0
      %2264 = vmatpush.msra.mxu0 0.0
      %2265 = vmatpush.msra.mxu0 %v2156
      %2266 = vmatpush.msra.mxu0 %v2155
      %2267 = vmatpush.msra.mxu0 %v2154
      %2268 = vmatpush.msra.mxu0 %v2153
      %2269 = vmatpush.msra.mxu0 %v2152
      %2270 = vmatpush.msra.mxu0 %v2151
      %2271 = vmatpush.msra.mxu0 %v2150
      %2272 = vmatpush.msra.mxu0 %v2149
      %2273 = vmatpush.msra.mxu0 %v2148
      %2274 = vmatmul.f32.gmra.mxu0 %v2163
      %v2275 = vpop.f32.mrf.mxu0
      %v2276 = vadd.f32 %v2159, %v2275
      %2277 = vmatmul.f32.gmra.mxu0 %v2166
      %v2278 = vpop.f32.mrf.mxu0
      %v2279 = vadd.f32 %v2159, %v2278
      %2280 = vmatmul.f32.gmra.mxu0 %v2169
      %v2281 = vpop.f32.mrf.mxu0
      %v2282 = vadd.f32 %v2159, %v2281
      %2283 = vmatmul.f32.gmra.mxu0 %v2172
      %v2284 = vpop.f32.mrf.mxu0
      %v2285 = vadd.f32 %v2159, %v2284
      %2286 = vmatmul.f32.gmra.mxu0 %v2175
      %v2287 = vpop.f32.mrf.mxu0
      %v2288 = vadd.f32 %v2159, %v2287
      %2289 = vmatmul.f32.gmra.mxu0 %v2178
      %v2290 = vpop.f32.mrf.mxu0
      %v2291 = vadd.f32 %v2159, %v2290
      %2292 = vmatmul.f32.gmra.mxu0 %v2181
      %v2293 = vpop.f32.mrf.mxu0
      %v2294 = vadd.f32 %v2159, %v2293
      %2295 = vmatmul.f32.gmra.mxu0 %v2184
      %v2296 = vpop.f32.mrf.mxu0
      %v2297 = vadd.f32 %v2159, %v2296
      %2298 = vmatmul.f32.gmra.mxu0 %v2187
      %v2299 = vpop.f32.mrf.mxu0
      %v2300 = vadd.f32 %v2159, %v2299
      %2301 = vmatmul.f32.gmra.mxu0 %v2190
      %v2302 = vpop.f32.mrf.mxu0
      %v2303 = vadd.f32 %v2159, %v2302
      %2304 = vmatmul.f32.gmra.mxu0 %v2193
      %v2305 = vpop.f32.mrf.mxu0
      %v2306 = vadd.f32 %v2159, %v2305
      %2307 = vmatmul.f32.gmra.mxu0 %v2196
      %v2308 = vpop.f32.mrf.mxu0
      %v2309 = vadd.f32 %v2159, %v2308
      %2310 = vmatmul.f32.gmra.mxu0 %v2199
      %v2311 = vpop.f32.mrf.mxu0
      %v2312 = vadd.f32 %v2159, %v2311
      %2313 = vmatmul.f32.gmra.mxu0 %v2202
      %v2314 = vpop.f32.mrf.mxu0
      %v2315 = vadd.f32 %v2159, %v2314
      %2316 = vmatmul.f32.gmra.mxu0 %v2205
      %v2317 = vpop.f32.mrf.mxu0
      %v2318 = vadd.f32 %v2159, %v2317
      %2319 = vmatmul.f32.gmra.mxu0 %v2208
      %v2320 = vpop.f32.mrf.mxu0
      %v2321 = vadd.f32 %v2159, %v2320
      %2322 = vmatmul.f32.gmra.mxu0 %v2211
      %v2323 = vpop.f32.mrf.mxu0
      %v2324 = vadd.f32 %v2159, %v2323
      %2325 = vmatmul.f32.gmra.mxu0 %v2214
      %v2326 = vpop.f32.mrf.mxu0
      %v2327 = vadd.f32 %v2159, %v2326
      %2328 = vmatmul.f32.gmra.mxu0 %v2217
      %v2329 = vpop.f32.mrf.mxu0
      %v2330 = vadd.f32 %v2159, %v2329
      %2331 = vmatmul.f32.gmra.mxu0 %v2220
      %v2332 = vpop.f32.mrf.mxu0
      %v2333 = vadd.f32 %v2159, %v2332
      %2334 = vmatmul.f32.gmra.mxu0 %v2223
      %v2335 = vpop.f32.mrf.mxu0
      %v2336 = vadd.f32 %v2159, %v2335
      %2337 = vmatmul.f32.gmra.mxu0 %v2226
      %v2338 = vpop.f32.mrf.mxu0
      %v2339 = vadd.f32 %v2159, %v2338
      %2340 = vmatmul.f32.gmra.mxu0 %v2229
      %v2341 = vpop.f32.mrf.mxu0
      %v2342 = vadd.f32 %v2159, %v2341
      %2343 = vmatmul.f32.gmra.mxu0 %v2232
      %v2344 = vpop.f32.mrf.mxu0
      %v2345 = vadd.f32 %v2159, %v2344
      %2346 = vmatmul.f32.gmra.mxu0 %v2235
      %v2347 = vpop.f32.mrf.mxu0
      %v2348 = vadd.f32 %v2159, %v2347
      %2349 = vmatmul.f32.gmra.mxu0 %v2238
      %v2350 = vpop.f32.mrf.mxu0
      %v2351 = vadd.f32 %v2159, %v2350
      %2352 = vmatmul.f32.gmra.mxu0 %v2241
      %v2353 = vpop.f32.mrf.mxu0
      %v2354 = vadd.f32 %v2159, %v2353
      %2355 = vmatmul.f32.gmra.mxu0 %v2244
      %v2356 = vpop.f32.mrf.mxu0
      %v2357 = vadd.f32 %v2159, %v2356
      %2358 = vmatmul.f32.gmra.mxu0 %v2247
      %v2359 = vpop.f32.mrf.mxu0
      %v2360 = vadd.f32 %v2159, %v2359
      %2361 = vmatmul.f32.gmra.mxu0 %v2250
      %v2362 = vpop.f32.mrf.mxu0
      %v2363 = vadd.f32 %v2159, %v2362
      %2364 = vmatmul.f32.gmra.mxu0 %v2253
      %v2365 = vpop.f32.mrf.mxu0
      %v2366 = vadd.f32 %v2159, %v2365
      %2367 = vmatmul.f32.gmra.mxu0 %v2256
      %v2368 = vpop.f32.mrf.mxu0
      %v2369 = vadd.f32 %v2159, %v2368
      %2370 = vdwg.mxu0
      %2371 = vst.msk [vmem:[%s289] sm:$0xff] %vm432, %v2276
      %2372 = vst.msk [vmem:[%s289 + $0x8] sm:$0xff] %vm432, %v2279
      %2373 = vst.msk [vmem:[%s289 + $0x10] sm:$0xff] %vm432, %v2282
      %2374 = vst.msk [vmem:[%s289 + $0x18] sm:$0xff] %vm432, %v2285
      %2375 = vst.msk [vmem:[%s289 + $0x20] sm:$0xff] %vm432, %v2288
      %2376 = vst.msk [vmem:[%s289 + $0x28] sm:$0xff] %vm432, %v2291
      %2377 = vst.msk [vmem:[%s289 + $0x30] sm:$0xff] %vm432, %v2294
      %2378 = vst.msk [vmem:[%s289 + $0x38] sm:$0xff] %vm432, %v2297
      %2379 = vst.msk [vmem:[%s289 + $0x40] sm:$0xff] %vm432, %v2300
      %2380 = vst.msk [vmem:[%s289 + $0x48] sm:$0xff] %vm432, %v2303
      %2381 = vst.msk [vmem:[%s289 + $0x50] sm:$0xff] %vm432, %v2306
      %2382 = vst.msk [vmem:[%s289 + $0x58] sm:$0xff] %vm432, %v2309
      %2383 = vst.msk [vmem:[%s289 + $0x60] sm:$0xff] %vm432, %v2312
      %2384 = vst.msk [vmem:[%s289 + $0x68] sm:$0xff] %vm432, %v2315
      %2385 = vst.msk [vmem:[%s289 + $0x70] sm:$0xff] %vm432, %v2318
      %2386 = vst.msk [vmem:[%s289 + $0x78] sm:$0xff] %vm432, %v2321
      %2387 = vst.msk [vmem:[%s289 + $0x80] sm:$0xff] %vm432, %v2324
      %2388 = vst.msk [vmem:[%s289 + $0x88] sm:$0xff] %vm432, %v2327
      %2389 = vst.msk [vmem:[%s289 + $0x90] sm:$0xff] %vm432, %v2330
      %2390 = vst.msk [vmem:[%s289 + $0x98] sm:$0xff] %vm432, %v2333
      %2391 = vst.msk [vmem:[%s289 + $0xa0] sm:$0xff] %vm432, %v2336
      %2392 = vst.msk [vmem:[%s289 + $0xa8] sm:$0xff] %vm432, %v2339
      %2393 = vst.msk [vmem:[%s289 + $0xb0] sm:$0xff] %vm432, %v2342
      %2394 = vst.msk [vmem:[%s289 + $0xb8] sm:$0xff] %vm432, %v2345
      %2395 = vst.msk [vmem:[%s289 + $0xc0] sm:$0xff] %vm432, %v2348
      %2396 = vst.msk [vmem:[%s289 + $0xc8] sm:$0xff] %vm432, %v2351
      %2397 = vst.msk [vmem:[%s289 + $0xd0] sm:$0xff] %vm432, %v2354
      %2398 = vst.msk [vmem:[%s289 + $0xd8] sm:$0xff] %vm432, %v2357
      %2399 = vst.msk [vmem:[%s289 + $0xe0] sm:$0xff] %vm432, %v2360
      %2400 = vst.msk [vmem:[%s289 + $0xe8] sm:$0xff] %vm432, %v2363
      %2401 = vst.msk [vmem:[%s289 + $0xf0] sm:$0xff] %vm432, %v2366
      %2402 = vst.msk [vmem:[%s289 + $0xf8] sm:$0xff] %vm432, %v2369
      %v2403 = vsel %vm432, %v2276, 0.0
      %v2404 = vsel %vm432, %v2279, 0.0
      %v2405 = vadd.f32 %v2403, %v2404
      %v2406 = vsel %vm432, %v2282, 0.0
      %v2407 = vadd.f32 %v2405, %v2406
      %v2408 = vsel %vm432, %v2285, 0.0
      %v2409 = vadd.f32 %v2407, %v2408
      %v2410 = vsel %vm432, %v2288, 0.0
      %v2411 = vadd.f32 %v2409, %v2410
      %v2412 = vsel %vm432, %v2291, 0.0
      %v2413 = vadd.f32 %v2411, %v2412
      %v2414 = vsel %vm432, %v2294, 0.0
      %v2415 = vadd.f32 %v2413, %v2414
      %v2416 = vsel %vm432, %v2297, 0.0
      %v2417 = vadd.f32 %v2415, %v2416
      %v2418 = vsel %vm432, %v2300, 0.0
      %v2419 = vadd.f32 %v2417, %v2418
      %v2420 = vsel %vm432, %v2303, 0.0
      %v2421 = vadd.f32 %v2419, %v2420
      %v2422 = vsel %vm432, %v2306, 0.0
      %v2423 = vadd.f32 %v2421, %v2422
      %v2424 = vsel %vm432, %v2309, 0.0
      %v2425 = vadd.f32 %v2423, %v2424
      %v2426 = vsel %vm432, %v2312, 0.0
      %v2427 = vadd.f32 %v2425, %v2426
      %v2428 = vsel %vm432, %v2315, 0.0
      %v2429 = vadd.f32 %v2427, %v2428
      %v2430 = vsel %vm432, %v2318, 0.0
      %v2431 = vadd.f32 %v2429, %v2430
      %v2432 = vsel %vm432, %v2321, 0.0
      %v2433 = vadd.f32 %v2431, %v2432
      %v2434 = vsel %vm432, %v2324, 0.0
      %v2435 = vadd.f32 %v2433, %v2434
      %v2436 = vsel %vm432, %v2327, 0.0
      %v2437 = vadd.f32 %v2435, %v2436
      %v2438 = vsel %vm432, %v2330, 0.0
      %v2439 = vadd.f32 %v2437, %v2438
      %v2440 = vsel %vm432, %v2333, 0.0
      %v2441 = vadd.f32 %v2439, %v2440
      %v2442 = vsel %vm432, %v2336, 0.0
      %v2443 = vadd.f32 %v2441, %v2442
      %v2444 = vsel %vm432, %v2339, 0.0
      %v2445 = vadd.f32 %v2443, %v2444
      %v2446 = vsel %vm432, %v2342, 0.0
      %v2447 = vadd.f32 %v2445, %v2446
      %v2448 = vsel %vm432, %v2345, 0.0
      %v2449 = vadd.f32 %v2447, %v2448
      %v2450 = vsel %vm432, %v2348, 0.0
      %v2451 = vadd.f32 %v2449, %v2450
      %v2452 = vsel %vm432, %v2351, 0.0
      %v2453 = vadd.f32 %v2451, %v2452
      %v2454 = vsel %vm432, %v2354, 0.0
      %v2455 = vadd.f32 %v2453, %v2454
      %v2456 = vsel %vm432, %v2357, 0.0
      %v2457 = vadd.f32 %v2455, %v2456
      %v2458 = vsel %vm432, %v2360, 0.0
      %v2459 = vadd.f32 %v2457, %v2458
      %v2460 = vsel %vm432, %v2363, 0.0
      %v2461 = vadd.f32 %v2459, %v2460
      %v2462 = vsel %vm432, %v2366, 0.0
      %v2463 = vadd.f32 %v2461, %v2462
      %v2464 = vsel %vm432, %v2369, 0.0
      %v2465 = vadd.f32 %v2463, %v2464
      %v2466 = vrot.slane %v2465, 4
      %v2467 = vadd.f32 %v2465, %v2466
      %v2468 = vrot.slane %v2467, 2
      %v2469 = vadd.f32 %v2467, %v2468
      %v2470 = vrot.slane %v2469, 1
      %v2471 = vadd.f32 %v2469, %v2470
      %2472 = vst.msk [vmem:[%s292] sm:$0x1] %vm442, %v2471
      %v2473 = vmul.f32 %v2276, %v2276
      %v2474 = vmul.f32 %v2279, %v2279
      %v2475 = vmul.f32 %v2282, %v2282
      %v2476 = vmul.f32 %v2285, %v2285
      %v2477 = vmul.f32 %v2288, %v2288
      %v2478 = vmul.f32 %v2291, %v2291
      %v2479 = vmul.f32 %v2294, %v2294
      %v2480 = vmul.f32 %v2297, %v2297
      %v2481 = vmul.f32 %v2300, %v2300
      %v2482 = vmul.f32 %v2303, %v2303
      %v2483 = vmul.f32 %v2306, %v2306
      %v2484 = vmul.f32 %v2309, %v2309
      %v2485 = vmul.f32 %v2312, %v2312
      %v2486 = vmul.f32 %v2315, %v2315
      %v2487 = vmul.f32 %v2318, %v2318
      %v2488 = vmul.f32 %v2321, %v2321
      %v2489 = vmul.f32 %v2324, %v2324
      %v2490 = vmul.f32 %v2327, %v2327
      %v2491 = vmul.f32 %v2330, %v2330
      %v2492 = vmul.f32 %v2333, %v2333
      %v2493 = vmul.f32 %v2336, %v2336
      %v2494 = vmul.f32 %v2339, %v2339
      %v2495 = vmul.f32 %v2342, %v2342
      %v2496 = vmul.f32 %v2345, %v2345
      %v2497 = vmul.f32 %v2348, %v2348
      %v2498 = vmul.f32 %v2351, %v2351
      %v2499 = vmul.f32 %v2354, %v2354
      %v2500 = vmul.f32 %v2357, %v2357
      %v2501 = vmul.f32 %v2360, %v2360
      %v2502 = vmul.f32 %v2363, %v2363
      %v2503 = vmul.f32 %v2366, %v2366
      %v2504 = vmul.f32 %v2369, %v2369
      %v2505 = vsel %vm432, %v2473, 0.0
      %v2506 = vsel %vm432, %v2474, 0.0
      %v2507 = vadd.f32 %v2505, %v2506
      %v2508 = vsel %vm432, %v2475, 0.0
      %v2509 = vadd.f32 %v2507, %v2508
      %v2510 = vsel %vm432, %v2476, 0.0
      %v2511 = vadd.f32 %v2509, %v2510
      %v2512 = vsel %vm432, %v2477, 0.0
      %v2513 = vadd.f32 %v2511, %v2512
      %v2514 = vsel %vm432, %v2478, 0.0
      %v2515 = vadd.f32 %v2513, %v2514
      %v2516 = vsel %vm432, %v2479, 0.0
      %v2517 = vadd.f32 %v2515, %v2516
      %v2518 = vsel %vm432, %v2480, 0.0
      %v2519 = vadd.f32 %v2517, %v2518
      %v2520 = vsel %vm432, %v2481, 0.0
      %v2521 = vadd.f32 %v2519, %v2520
      %v2522 = vsel %vm432, %v2482, 0.0
      %v2523 = vadd.f32 %v2521, %v2522
      %v2524 = vsel %vm432, %v2483, 0.0
      %v2525 = vadd.f32 %v2523, %v2524
      %v2526 = vsel %vm432, %v2484, 0.0
      %v2527 = vadd.f32 %v2525, %v2526
      %v2528 = vsel %vm432, %v2485, 0.0
      %v2529 = vadd.f32 %v2527, %v2528
      %v2530 = vsel %vm432, %v2486, 0.0
      %v2531 = vadd.f32 %v2529, %v2530
      %v2532 = vsel %vm432, %v2487, 0.0
      %v2533 = vadd.f32 %v2531, %v2532
      %v2534 = vsel %vm432, %v2488, 0.0
      %v2535 = vadd.f32 %v2533, %v2534
      %v2536 = vsel %vm432, %v2489, 0.0
      %v2537 = vadd.f32 %v2535, %v2536
      %v2538 = vsel %vm432, %v2490, 0.0
      %v2539 = vadd.f32 %v2537, %v2538
      %v2540 = vsel %vm432, %v2491, 0.0
      %v2541 = vadd.f32 %v2539, %v2540
      %v2542 = vsel %vm432, %v2492, 0.0
      %v2543 = vadd.f32 %v2541, %v2542
      %v2544 = vsel %vm432, %v2493, 0.0
      %v2545 = vadd.f32 %v2543, %v2544
      %v2546 = vsel %vm432, %v2494, 0.0
      %v2547 = vadd.f32 %v2545, %v2546
      %v2548 = vsel %vm432, %v2495, 0.0
      %v2549 = vadd.f32 %v2547, %v2548
      %v2550 = vsel %vm432, %v2496, 0.0
      %v2551 = vadd.f32 %v2549, %v2550
      %v2552 = vsel %vm432, %v2497, 0.0
      %v2553 = vadd.f32 %v2551, %v2552
      %v2554 = vsel %vm432, %v2498, 0.0
      %v2555 = vadd.f32 %v2553, %v2554
      %v2556 = vsel %vm432, %v2499, 0.0
      %v2557 = vadd.f32 %v2555, %v2556
      %v2558 = vsel %vm432, %v2500, 0.0
      %v2559 = vadd.f32 %v2557, %v2558
      %v2560 = vsel %vm432, %v2501, 0.0
      %v2561 = vadd.f32 %v2559, %v2560
      %v2562 = vsel %vm432, %v2502, 0.0
      %v2563 = vadd.f32 %v2561, %v2562
      %v2564 = vsel %vm432, %v2503, 0.0
      %v2565 = vadd.f32 %v2563, %v2564
      %v2566 = vsel %vm432, %v2504, 0.0
      %v2567 = vadd.f32 %v2565, %v2566
      %v2568 = vrot.slane %v2567, 4
      %v2569 = vadd.f32 %v2567, %v2568
      %v2570 = vrot.slane %v2569, 2
      %v2571 = vadd.f32 %v2569, %v2570
      %v2572 = vrot.slane %v2571, 1
      %v2573 = vadd.f32 %v2571, %v2572
      %2574 = vst.msk [vmem:[%s295] sm:$0x1] %vm442, %v2573
      %p2575 = scmp.lt.s32.totalorder %s19, 1
      %s2576 = scalar_select %p2575, %s19, 1
      %s2577 = smul.addr %s2576, 32
      %s2578 = smul.addr %s2577, 8
      %s2579 = scalar_lea.vmem %s5, %s2578
      %p2580 = scmp.lt.s32.totalorder %s19, 1
      %s2581 = scalar_select %p2580, %s19, 1
      %s2582 = scalar_lea.vmem %s6, %s2581
      %p2583 = scmp.lt.s32.totalorder %s19, 1
      %s2584 = scalar_select %p2583, %s19, 1
      %s2585 = scalar_lea.vmem %s7, %s2584
      // Predicated region
      $region41: #{double_conv_forward.4} parent=39 // pred_check
        %p2586 = pneg %p147
      $region42: #{double_conv_forward.4} parent=39 // pred_check_branch
        %2588 = sbr.rel (%p2586) target = $region44
      $region43: #{double_conv_forward.4} parent=39 // pred_region
        _
      $region44: #{double_conv_forward.4} parent=39 // pred_fallthru
        _
      // Predicated region
      $region45: #{double_conv_forward.4} parent=39 // pred_check
        %p2589 = pneg %p173
      $region46: #{double_conv_forward.4} parent=39 // pred_check_branch
        %2591 = sbr.rel (%p2589) target = $region48
      $region47: #{double_conv_forward.4} parent=39 // pred_region
        _
      $region48: #{double_conv_forward.4} parent=39 // pred_fallthru
        _
      // Predicated region
      $region49: #{double_conv_forward.4} parent=39 // pred_check
        %p2592 = pneg %p199
      $region50: #{double_conv_forward.4} parent=39 // pred_check_branch
        %2594 = sbr.rel (%p2592) target = $region52
      $region51: #{double_conv_forward.4} parent=39 // pred_region
        _
      $region52: #{double_conv_forward.4} parent=39 // pred_fallthru
        _
    $region40: #{double_conv_forward.4} parent=5 // pred_fallthru
      _
    %p2595 = scmp.le.s32.totalorder 2, %s14
    // Predicated region
    $region53: #{double_conv_forward.4} parent=5 // pred_check
      %p2596 = pneg %p2595
    $region54: #{double_conv_forward.4} parent=5 // pred_check_branch
      %2598 = sbr.rel (%p2596) target = $region56
    $region55: #{double_conv_forward.4} parent=5 // pred_region
      %s2599 = ssub.s32 %s14, 2
      // Predicated region
      $region57: #{double_conv_forward.4} parent=55 // pred_check
        %p2600 = pneg %p153
      $region58: #{double_conv_forward.4} parent=55 // pred_check_branch
        %2602 = sbr.rel (%p2600) target = $region60
      $region59: #{double_conv_forward.4} parent=55 // pred_region
        %p2603 = scmp.lt.s32.totalorder %s20, 1
        %s2604 = scalar_select %p2603, %s20, 1
        %s2605 = smul.addr %s2604, 32
        %s2606 = smul.addr %s2605, 8
        %s2607 = scalar_lea.vmem %s5, %s2606
      $region60: #{double_conv_forward.4} parent=55 // pred_fallthru
        _
      // Predicated region
      $region61: #{double_conv_forward.4} parent=55 // pred_check
        %p2608 = pneg %p179
      $region62: #{double_conv_forward.4} parent=55 // pred_check_branch
        %2610 = sbr.rel (%p2608) target = $region64
      $region63: #{double_conv_forward.4} parent=55 // pred_region
        %p2611 = scmp.lt.s32.totalorder %s20, 1
        %s2612 = scalar_select %p2611, %s20, 1
        %s2613 = scalar_lea.vmem %s6, %s2612
      $region64: #{double_conv_forward.4} parent=55 // pred_fallthru
        _
      // Predicated region
      $region65: #{double_conv_forward.4} parent=55 // pred_check
        %p2614 = pneg %p205
      $region66: #{double_conv_forward.4} parent=55 // pred_check_branch
        %2616 = sbr.rel (%p2614) target = $region68
      $region67: #{double_conv_forward.4} parent=55 // pred_region
        %p2617 = scmp.lt.s32.totalorder %s20, 1
        %s2618 = scalar_select %p2617, %s20, 1
        %s2619 = scalar_lea.vmem %s7, %s2618
      $region68: #{double_conv_forward.4} parent=55 // pred_fallthru
        _
    $region56: #{double_conv_forward.4} parent=5 // pred_fallthru
      _
  $region6: #{double_conv_forward.4} parent=0 // loop_footer
    %s18 = sadd.s32 1, %s14
  $region7: #{double_conv_forward.4} parent=0 // loop_footer_branch
    %13 = sbr.rel target = $region3
  $region8: #{double_conv_forward.4} parent=0 // loop_exit
    _

</llo_original>
